<compile_context>
chip_gen: v7x
topology: tpu7x:2x2x1
jax: 0.10.0
libtpu: 0.0.40
codegen_flags: <defaults>
</compile_context>

<pallas_src>
import jax
import jax.numpy as jnp
from jax.experimental import pallas as pl
from jax.experimental.pallas import tpu as pltpu

INPUT_DIM = 39
HIDDEN_DIM = 100
OUTPUT_DIM = 1

HIDDEN_PAD = 128   # 100 -> 128 (lane-aligned hidden width)
TB = 1024          # max batch tile (rows per grid step); multiple of 128


def _round_up(n, m):
    return ((n + m - 1) // m) * m


def mlp_kernel(x_ref, w1_ref, b1_ref, w2_ref, b2_ref, w3_ref, b3_ref,
               w4_ref, b4_ref, out_ref):
    # x tile: (tb, INPUT_DIM) f32.  w1..w3 bf16 (zero-padded), biases f32,
    # w4/b4 f32.  All weights/biases are VMEM-resident (constant block index).
    x = x_ref[...]

    # Layers 1-3: bf16 operands on the MXU, f32 accumulation, bias+ReLU in f32.
    h = jnp.dot(x.astype(jnp.bfloat16), w1_ref[...],
                preferred_element_type=jnp.float32) + b1_ref[...]
    h = jnp.maximum(h, 0.0)

    h = jnp.dot(h.astype(jnp.bfloat16), w2_ref[...],
                preferred_element_type=jnp.float32) + b2_ref[...]
    h = jnp.maximum(h, 0.0)

    h = jnp.dot(h.astype(jnp.bfloat16), w3_ref[...],
                preferred_element_type=jnp.float32) + b3_ref[...]
    h = jnp.maximum(h, 0.0)

    # Layer 4 (K=HIDDEN_PAD, N=1): single MXU dot in f32 — no activation
    # transpose, no cross-lane/sublane reduction on the XLU.
    y = jnp.dot(h, w4_ref[...], preferred_element_type=jnp.float32) + b4_ref[...]
    out_ref[...] = y                                     # (tb, 1) f32


def mlp_forward(x, params, tb=TB):
    """x: (B, INPUT_DIM) f32 -> (B,) f32, matching PyTorch .squeeze(1).float()."""
    (w1, b1, w2, b2, w3, b3, w4, b4) = params
    B = x.shape[0]

    # Shrink the tile for small batches (keeps padding waste bounded), keep it
    # a multiple of 128 so sublane/lane constraints hold.
    tb = min(tb, _round_up(B, 128))
    nt = pl.cdiv(B, tb)
    Bp = nt * tb
    if Bp != B:
        x = jnp.pad(x, ((0, Bp - B), (0, 0)))            # zero-pad: inert rows

    full = lambda a: pl.BlockSpec(a.shape, lambda i, _nd=a.ndim: (0,) * _nd)

    flops = Bp * 2 * (INPUT_DIM * HIDDEN_PAD
                      + 2 * HIDDEN_PAD * HIDDEN_PAD
                      + HIDDEN_PAD * OUTPUT_DIM)
    bytes_accessed = (int(x.size) * 4 + Bp * 4
                      + sum(int(a.size) * a.dtype.itemsize for a in params))

    out = pl.pallas_call(
        mlp_kernel,
        out_shape=jax.ShapeDtypeStruct((Bp, OUTPUT_DIM), jnp.float32),
        grid=(nt,),
        in_specs=[
            pl.BlockSpec((tb, INPUT_DIM), lambda i: (i, 0)),   # x: batch-tiled
            full(w1), full(b1), full(w2), full(b2),            # weights/biases
            full(w3), full(b3), full(w4), full(b4),            # stay VMEM-resident
        ],
        out_specs=pl.BlockSpec((tb, OUTPUT_DIM), lambda i: (i, 0)),
        compiler_params=pltpu.CompilerParams(
            dimension_semantics=("parallel",),      # shard tiles across TCs (v7x)
            vmem_limit_bytes=32 * 1024 * 1024),     # safe on v5e/v6e/v7x
        cost_estimate=pl.CostEstimate(flops=flops, transcendentals=0,
                                      bytes_accessed=bytes_accessed),
    )(x, w1, b1, w2, b2, w3, b3, w4, b4)

    return out.reshape(-1)[:B].astype(jnp.float32)


def init_params(key):
    """nn.Linear-style uniform(-1/sqrt(fan_in), 1/sqrt(fan_in)) init (f32)."""
    dims = [(INPUT_DIM, HIDDEN_DIM),
            (HIDDEN_DIM, HIDDEN_DIM),
            (HIDDEN_DIM, HIDDEN_DIM),
            (HIDDEN_DIM, OUTPUT_DIM)]
    ws, bs = [], []
    for fan_in, fan_out in dims:
        key, kw, kb = jax.random.split(key, 3)
        bound = 1.0 / (fan_in ** 0.5)
        ws.append(jax.random.uniform(kw, (fan_in, fan_out), jnp.float32,
                                     -bound, bound))
        bs.append(jax.random.uniform(kb, (1, fan_out), jnp.float32,
                                     -bound, bound))
    return ws, bs


def pack_params(ws, bs):
    """Zero-pad hidden dims 100->128; cast layers 1-3 weights to bf16.

    Padding is numerically inert: zero weight cols/rows + zero bias and
    ReLU(0)=0, so padded hidden lanes stay exactly zero through every layer.
    """
    w1, w2, w3, w4 = ws
    b1, b2, b3, b4 = bs
    H = HIDDEN_PAD

    w1p = jnp.zeros((INPUT_DIM, H), jnp.float32).at[:, :HIDDEN_DIM].set(w1)
    w2p = jnp.zeros((H, H), jnp.float32).at[:HIDDEN_DIM, :HIDDEN_DIM].set(w2)
    w3p = jnp.zeros((H, H), jnp.float32).at[:HIDDEN_DIM, :HIDDEN_DIM].set(w3)
    w4p = jnp.zeros((H, OUTPUT_DIM), jnp.float32).at[:HIDDEN_DIM, :].set(w4)

    b1p = jnp.zeros((1, H), jnp.float32).at[:, :HIDDEN_DIM].set(b1)
    b2p = jnp.zeros((1, H), jnp.float32).at[:, :HIDDEN_DIM].set(b2)
    b3p = jnp.zeros((1, H), jnp.float32).at[:, :HIDDEN_DIM].set(b3)
    b4p = b4  # (1, 1)

    return (w1p.astype(jnp.bfloat16), b1p,
            w2p.astype(jnp.bfloat16), b2p,
            w3p.astype(jnp.bfloat16), b3p,
            w4p, b4p)  # last layer kept in f32


if __name__ == "__main__":
    key = jax.random.PRNGKey(0)
    key, kx = jax.random.split(key)

    ws, bs = init_params(key)
    params = pack_params(ws, bs)

    def ref_forward(x):  # pure-JAX f32 reference (unpadded weights)
        h = x
        for w, b in zip(ws[:-1], bs[:-1]):
            h = jnp.maximum(h @ w + b, 0.0)
        return (h @ ws[-1] + bs[-1]).squeeze(1)

    # One tile-aligned batch (2 grid steps -> exercises the parallel grid /
    # v7x 2-TC sizing) and one small ragged batch (exercises padding + slice).
    for batch in (2048, 300):
        x = jax.random.normal(jax.random.fold_in(kx, batch),
                              (batch, INPUT_DIM), dtype=jnp.float32)
        out = mlp_forward(x, params)
        jax.block_until_ready(out)

        ref = ref_forward(x)
        assert out.shape == (batch,)
        assert out.dtype == jnp.float32
        # bf16 MXU operands (f32 accumulation) -> relaxed tolerance vs f32 ref.
        assert jnp.allclose(out, ref, atol=3e-2, rtol=3e-2), \
            float(jnp.max(jnp.abs(out - ref)))

    print("KERNEL_OK")
</pallas_src>

<mosaic_0001>
module attributes {stable_mosaic.version = 11 : i64} {
  func.func @mlp_kernel(%arg0: i32, %arg1: memref<1024x39xf32, #tpu.memory_space<vmem>>, %arg2: memref<39x128xbf16, #tpu.memory_space<vmem>>, %arg3: memref<1x128xf32, #tpu.memory_space<vmem>>, %arg4: memref<128x128xbf16, #tpu.memory_space<vmem>>, %arg5: memref<1x128xf32, #tpu.memory_space<vmem>>, %arg6: memref<128x128xbf16, #tpu.memory_space<vmem>>, %arg7: memref<1x128xf32, #tpu.memory_space<vmem>>, %arg8: memref<128x1xf32, #tpu.memory_space<vmem>>, %arg9: memref<1x1xf32, #tpu.memory_space<vmem>>, %arg10: memref<1024x1xf32, #tpu.memory_space<vmem>>) attributes {dimension_semantics = [#tpu.dimension_semantics<parallel>], iteration_bounds = array<i64: 2>, scalar_prefetch = 0 : i64, scratch_operands = 0 : i64, tpu.core_type = #tpu.core_type<tc>, window_params = [{transform_indices = @transform_0, window_bounds = array<i64: 1024, 39>}, {pipeline_mode = #tpu.pipeline_mode<synchronous>, transform_indices = @transform_1, window_bounds = array<i64: 39, 128>}, {pipeline_mode = #tpu.pipeline_mode<synchronous>, transform_indices = @transform_2, window_bounds = array<i64: 1, 128>}, {pipeline_mode = #tpu.pipeline_mode<synchronous>, transform_indices = @transform_3, window_bounds = array<i64: 128, 128>}, {pipeline_mode = #tpu.pipeline_mode<synchronous>, transform_indices = @transform_4, window_bounds = array<i64: 1, 128>}, {pipeline_mode = #tpu.pipeline_mode<synchronous>, transform_indices = @transform_5, window_bounds = array<i64: 128, 128>}, {pipeline_mode = #tpu.pipeline_mode<synchronous>, transform_indices = @transform_6, window_bounds = array<i64: 1, 128>}, {pipeline_mode = #tpu.pipeline_mode<synchronous>, transform_indices = @transform_7, window_bounds = array<i64: 128, 1>}, {pipeline_mode = #tpu.pipeline_mode<synchronous>, transform_indices = @transform_8, window_bounds = array<i64: 1, 1>}, {transform_indices = @transform_9, window_bounds = array<i64: 1024, 1>}]} {
    %c0 = arith.constant 0 : index
    %c0_0 = arith.constant 0 : index
    %0 = vector.load %arg1[%c0, %c0_0] : memref<1024x39xf32, #tpu.memory_space<vmem>>, vector<1024x39xf32>
    %1 = arith.truncf %0 : vector<1024x39xf32> to vector<1024x39xbf16>
    %c0_1 = arith.constant 0 : index
    %c0_2 = arith.constant 0 : index
    %2 = vector.load %arg2[%c0_1, %c0_2] : memref<39x128xbf16, #tpu.memory_space<vmem>>, vector<39x128xbf16>
    %cst = arith.constant dense<0.000000e+00> : vector<1024x128xf32>
    %3 = tpu.matmul %1, %2, %cst {dimension_numbers = #tpu.dot_dimension_numbers<[1], [0], [0], [1], [0, 0, 1, 1], [], []>} : vector<1024x39xbf16>, vector<39x128xbf16>, vector<1024x128xf32> -> vector<1024x128xf32>
    %c0_3 = arith.constant 0 : index
    %c0_4 = arith.constant 0 : index
    %4 = vector.load %arg3[%c0_3, %c0_4] : memref<1x128xf32, #tpu.memory_space<vmem>>, vector<1x128xf32>
    %5 = vector.broadcast %4 : vector<1x128xf32> to vector<1024x128xf32>
    %6 = arith.addf %3, %5 : vector<1024x128xf32>
    %cst_5 = arith.constant 0.000000e+00 : f32
    %7 = vector.broadcast %cst_5 : f32 to vector<1024x128xf32>
    %8 = arith.maximumf %6, %7 : vector<1024x128xf32>
    %9 = arith.truncf %8 : vector<1024x128xf32> to vector<1024x128xbf16>
    %c0_6 = arith.constant 0 : index
    %c0_7 = arith.constant 0 : index
    %10 = vector.load %arg4[%c0_6, %c0_7] : memref<128x128xbf16, #tpu.memory_space<vmem>>, vector<128x128xbf16>
    %cst_8 = arith.constant dense<0.000000e+00> : vector<1024x128xf32>
    %11 = tpu.matmul %9, %10, %cst_8 {dimension_numbers = #tpu.dot_dimension_numbers<[1], [0], [0], [1], [0, 0, 1, 1], [], []>} : vector<1024x128xbf16>, vector<128x128xbf16>, vector<1024x128xf32> -> vector<1024x128xf32>
    %c0_9 = arith.constant 0 : index
    %c0_10 = arith.constant 0 : index
    %12 = vector.load %arg5[%c0_9, %c0_10] : memref<1x128xf32, #tpu.memory_space<vmem>>, vector<1x128xf32>
    %13 = vector.broadcast %12 : vector<1x128xf32> to vector<1024x128xf32>
    %14 = arith.addf %11, %13 : vector<1024x128xf32>
    %cst_11 = arith.constant 0.000000e+00 : f32
    %15 = vector.broadcast %cst_11 : f32 to vector<1024x128xf32>
    %16 = arith.maximumf %14, %15 : vector<1024x128xf32>
    %17 = arith.truncf %16 : vector<1024x128xf32> to vector<1024x128xbf16>
    %c0_12 = arith.constant 0 : index
    %c0_13 = arith.constant 0 : index
    %18 = vector.load %arg6[%c0_12, %c0_13] : memref<128x128xbf16, #tpu.memory_space<vmem>>, vector<128x128xbf16>
    %cst_14 = arith.constant dense<0.000000e+00> : vector<1024x128xf32>
    %19 = tpu.matmul %17, %18, %cst_14 {dimension_numbers = #tpu.dot_dimension_numbers<[1], [0], [0], [1], [0, 0, 1, 1], [], []>} : vector<1024x128xbf16>, vector<128x128xbf16>, vector<1024x128xf32> -> vector<1024x128xf32>
    %c0_15 = arith.constant 0 : index
    %c0_16 = arith.constant 0 : index
    %20 = vector.load %arg7[%c0_15, %c0_16] : memref<1x128xf32, #tpu.memory_space<vmem>>, vector<1x128xf32>
    %21 = vector.broadcast %20 : vector<1x128xf32> to vector<1024x128xf32>
    %22 = arith.addf %19, %21 : vector<1024x128xf32>
    %cst_17 = arith.constant 0.000000e+00 : f32
    %23 = vector.broadcast %cst_17 : f32 to vector<1024x128xf32>
    %24 = arith.maximumf %22, %23 : vector<1024x128xf32>
    %c0_18 = arith.constant 0 : index
    %c0_19 = arith.constant 0 : index
    %25 = vector.load %arg8[%c0_18, %c0_19] : memref<128x1xf32, #tpu.memory_space<vmem>>, vector<128x1xf32>
    %cst_20 = arith.constant dense<0.000000e+00> : vector<1024x1xf32>
    %26 = tpu.matmul %24, %25, %cst_20 {dimension_numbers = #tpu.dot_dimension_numbers<[1], [0], [0], [1], [0, 0, 1, 1], [], []>} : vector<1024x128xf32>, vector<128x1xf32>, vector<1024x1xf32> -> vector<1024x1xf32>
    %c0_21 = arith.constant 0 : index
    %c0_22 = arith.constant 0 : index
    %27 = vector.load %arg9[%c0_21, %c0_22] : memref<1x1xf32, #tpu.memory_space<vmem>>, vector<1x1xf32>
    %28 = vector.broadcast %27 : vector<1x1xf32> to vector<1024x1xf32>
    %29 = arith.addf %26, %28 : vector<1024x1xf32>
    %c0_23 = arith.constant 0 : index
    %c0_24 = arith.constant 0 : index
    %30 = vector.load %arg10[%c0_23, %c0_24] : memref<1024x1xf32, #tpu.memory_space<vmem>>, vector<1024x1xf32>
    tpu.vector_store %arg10[%c0_23, %c0_24], %29 {strides = array<i32>} : memref<1024x1xf32, #tpu.memory_space<vmem>>, vector<1024x1xf32>,
    return
  }
  func.func @transform_0(%arg0: i32) -> (i32, i32) {
    %c0_i32 = arith.constant 0 : i32
    %c0_i32_0 = arith.constant 0 : i32
    return %arg0, %c0_i32 : i32, i32
  }
  func.func @transform_1(%arg0: i32) -> (i32, i32) {
    %c0_i32 = arith.constant 0 : i32
    %c0_i32_0 = arith.constant 0 : i32
    %c0_i32_1 = arith.constant 0 : i32
    return %c0_i32, %c0_i32_0 : i32, i32
  }
  func.func @transform_2(%arg0: i32) -> (i32, i32) {
    %c0_i32 = arith.constant 0 : i32
    %c0_i32_0 = arith.constant 0 : i32
    %c0_i32_1 = arith.constant 0 : i32
    return %c0_i32, %c0_i32_0 : i32, i32
  }
  func.func @transform_3(%arg0: i32) -> (i32, i32) {
    %c0_i32 = arith.constant 0 : i32
    %c0_i32_0 = arith.constant 0 : i32
    %c0_i32_1 = arith.constant 0 : i32
    return %c0_i32, %c0_i32_0 : i32, i32
  }
  func.func @transform_4(%arg0: i32) -> (i32, i32) {
    %c0_i32 = arith.constant 0 : i32
    %c0_i32_0 = arith.constant 0 : i32
    %c0_i32_1 = arith.constant 0 : i32
    return %c0_i32, %c0_i32_0 : i32, i32
  }
  func.func @transform_5(%arg0: i32) -> (i32, i32) {
    %c0_i32 = arith.constant 0 : i32
    %c0_i32_0 = arith.constant 0 : i32
    %c0_i32_1 = arith.constant 0 : i32
    return %c0_i32, %c0_i32_0 : i32, i32
  }
  func.func @transform_6(%arg0: i32) -> (i32, i32) {
    %c0_i32 = arith.constant 0 : i32
    %c0_i32_0 = arith.constant 0 : i32
    %c0_i32_1 = arith.constant 0 : i32
    return %c0_i32, %c0_i32_0 : i32, i32
  }
  func.func @transform_7(%arg0: i32) -> (i32, i32) {
    %c0_i32 = arith.constant 0 : i32
    %c0_i32_0 = arith.constant 0 : i32
    %c0_i32_1 = arith.constant 0 : i32
    return %c0_i32, %c0_i32_0 : i32, i32
  }
  func.func @transform_8(%arg0: i32) -> (i32, i32) {
    %c0_i32 = arith.constant 0 : i32
    %c0_i32_0 = arith.constant 0 : i32
    %c0_i32_1 = arith.constant 0 : i32
    return %c0_i32, %c0_i32_0 : i32, i32
  }
  func.func @transform_9(%arg0: i32) -> (i32, i32) {
    %c0_i32 = arith.constant 0 : i32
    %c0_i32_0 = arith.constant 0 : i32
    return %arg0, %c0_i32 : i32, i32
  }
}

</mosaic_0001>

<llo_original>
// kernel: tpu_custom_call.1
$region0: #{tpu_custom_call.1}
  #allocation0 [shape = 'u32[]', space=smem, size = 0x4, offset = 0x4, fixed_abs, tag = 'smem constant byte address 0x4 - core index']
  #allocation1 [shape = 'u32[144,128]{1,0:T(1,128)}', space=vmem, size = 0x12000, scoped, tag = 'internal scratch']
  #allocation2 [shape = 'f32[1,1]{1,0:T(1,128)S(1)}', space=vmem, size = 0x200, scoped, tag = 'scoped memory for tpu_custom_call.1']
  %s0 = inlined_call_operand.vmem [shape: f32[2048,39], index: 0, kind: input, shape index: {}]
  %s1 = inlined_call_operand.vmem [shape: bf16[39,128], index: 1, kind: input, shape index: {}]
  %s2 = inlined_call_operand.vmem [shape: f32[1,128], index: 2, kind: input, shape index: {}]
  %s3 = inlined_call_operand.vmem [shape: bf16[128,128], index: 3, kind: input, shape index: {}]
  %s4 = inlined_call_operand.vmem [shape: f32[1,128], index: 4, kind: input, shape index: {}]
  %s5 = inlined_call_operand.vmem [shape: bf16[128,128], index: 5, kind: input, shape index: {}]
  %s6 = inlined_call_operand.vmem [shape: f32[1,128], index: 6, kind: input, shape index: {}]
  %s7 = inlined_call_operand.vmem [shape: f32[128,1], index: 7, kind: input, shape index: {}]
  %s8 = inlined_call_operand.<no memory space> [shape: f32[1,1], index: 8, kind: input, shape index: {}]
  %s9 = inlined_call_operand.vmem [shape: f32[2048,1], index: 9, kind: output, shape index: {}]
  %s10 = sld [smem:[#allocation0]]
  $region69: #{tpu_custom_call.1} parent=0
    _
  %s12 = ssub.s32 1, %s10
  %s13 = scalar_select 0, %s12, %s10
  %v14 = vstv %s8
  %15 = vst [vmem:[#allocation2] sm:$0x1] %v14
  loop: start=0, step=1, limit=4
  $region2: #{tpu_custom_call.1} parent=0 // loop_pre_header
    _
  $region3: #{tpu_custom_call.1} parent=0 // loop_header
    %s17 = sphi 0, %s21
    %p18 = scmp.ge.s32.totalorder %s17, 4
    %s27 = sphi 0, %s29
    %s30 = sphi 0, %s27
    %s31 = sphi 0, %s30
    %s47 = sphi 0, %s31
    %s51 = sphi 0, %s51
    %s53 = sphi 0, %s51
    %s54 = sphi 0, %s53
    %s68 = sphi 0, %s54
    %s72 = sphi 0, %s72
    %s74 = sphi 0, %s72
    %s75 = sphi 0, %s74
    %s89 = sphi 0, %s75
    %s93 = sphi 0, %s93
    %s95 = sphi 0, %s93
    %s96 = sphi 0, %s95
    %s110 = sphi 0, %s96
    %s114 = sphi 0, %s114
    %s116 = sphi 0, %s114
    %s117 = sphi 0, %s116
    %s131 = sphi 0, %s117
    %s135 = sphi 0, %s135
    %s137 = sphi 0, %s135
    %s138 = sphi 0, %s137
    %s152 = sphi 0, %s138
    %s156 = sphi 0, %s156
    %s158 = sphi 0, %s156
    %s159 = sphi 0, %s158
    %s173 = sphi 0, %s159
    %s177 = sphi 0, %s177
    %s179 = sphi 0, %s177
    %s180 = sphi 0, %s179
    %s194 = sphi 0, %s180
    %s198 = sphi 0, %s198
    %s200 = sphi 0, %s198
    %s201 = sphi 0, %s200
    %s215 = sphi 0, %s201
    %s221 = sphi 0, %s223
    %s224 = sphi 0, %s221
    %s225 = sphi 0, %s224
    %s241 = sphi 0, %s225
  $region4: #{tpu_custom_call.1} parent=0 // loop_header_branch
    %20 = sbr.rel (%p18) target = $region8
  $region5: #{tpu_custom_call.1} parent=0 // loop_body
    %s22 = ssub.s32 %s17, 1
    %s23 = ssub.s32 %s17, 2
    %s24 = sadd.s32 %s17, 1
    %s25 = ssub.s32 %s17, %s24
    %p26 = scmp.eq.s32.totalorder %s25, 0
    %s28 = sadd.s32 %s27, 1
    %s29 = scalar_select %p26, %s27, %s28
    %p32 = pneg %p26
    %p33 = scmp.eq.s32.totalorder %s17, 1
    %p34 = por %p32, %p33
    %p35 = scmp.ne.s32.totalorder %s27, %s30
    %p36 = scmp.eq.s32.totalorder %s17, 0
    %p37 = por %p35, %p36
    %p38 = scmp.ne.s32.totalorder %s27, %s30
    %p39 = scmp.eq.s32.totalorder %s22, 1
    %p40 = por %p38, %p39
    %p41 = scmp.ne.s32.totalorder %s30, %s31
    %p42 = scmp.eq.s32.totalorder %s22, 0
    %p43 = por %p41, %p42
    %p44 = scmp.ne.s32.totalorder %s30, %s31
    %p45 = scmp.eq.s32.totalorder %s23, 1
    %p46 = por %p44, %p45
    %p48 = scmp.ne.s32.totalorder %s31, %s47
    %p49 = scmp.eq.s32.totalorder %s23, 0
    %p50 = por %p48, %p49
    %s52 = sadd.s32 %s51, 1
    %p55 = scmp.eq.s32.totalorder %s17, 1
    %p56 = scmp.ne.s32.totalorder %s51, %s53
    %p57 = scmp.eq.s32.totalorder %s17, 0
    %p58 = por %p56, %p57
    %p59 = scmp.ne.s32.totalorder %s51, %s53
    %p60 = scmp.eq.s32.totalorder %s22, 1
    %p61 = por %p59, %p60
    %p62 = scmp.ne.s32.totalorder %s53, %s54
    %p63 = scmp.eq.s32.totalorder %s22, 0
    %p64 = por %p62, %p63
    %p65 = scmp.ne.s32.totalorder %s53, %s54
    %p66 = scmp.eq.s32.totalorder %s23, 1
    %p67 = por %p65, %p66
    %p69 = scmp.ne.s32.totalorder %s54, %s68
    %p70 = scmp.eq.s32.totalorder %s23, 0
    %p71 = por %p69, %p70
    %s73 = sadd.s32 %s72, 1
    %p76 = scmp.eq.s32.totalorder %s17, 1
    %p77 = scmp.ne.s32.totalorder %s72, %s74
    %p78 = scmp.eq.s32.totalorder %s17, 0
    %p79 = por %p77, %p78
    %p80 = scmp.ne.s32.totalorder %s72, %s74
    %p81 = scmp.eq.s32.totalorder %s22, 1
    %p82 = por %p80, %p81
    %p83 = scmp.ne.s32.totalorder %s74, %s75
    %p84 = scmp.eq.s32.totalorder %s22, 0
    %p85 = por %p83, %p84
    %p86 = scmp.ne.s32.totalorder %s74, %s75
    %p87 = scmp.eq.s32.totalorder %s23, 1
    %p88 = por %p86, %p87
    %p90 = scmp.ne.s32.totalorder %s75, %s89
    %p91 = scmp.eq.s32.totalorder %s23, 0
    %p92 = por %p90, %p91
    %s94 = sadd.s32 %s93, 1
    %p97 = scmp.eq.s32.totalorder %s17, 1
    %p98 = scmp.ne.s32.totalorder %s93, %s95
    %p99 = scmp.eq.s32.totalorder %s17, 0
    %p100 = por %p98, %p99
    %p101 = scmp.ne.s32.totalorder %s93, %s95
    %p102 = scmp.eq.s32.totalorder %s22, 1
    %p103 = por %p101, %p102
    %p104 = scmp.ne.s32.totalorder %s95, %s96
    %p105 = scmp.eq.s32.totalorder %s22, 0
    %p106 = por %p104, %p105
    %p107 = scmp.ne.s32.totalorder %s95, %s96
    %p108 = scmp.eq.s32.totalorder %s23, 1
    %p109 = por %p107, %p108
    %p111 = scmp.ne.s32.totalorder %s96, %s110
    %p112 = scmp.eq.s32.totalorder %s23, 0
    %p113 = por %p111, %p112
    %s115 = sadd.s32 %s114, 1
    %p118 = scmp.eq.s32.totalorder %s17, 1
    %p119 = scmp.ne.s32.totalorder %s114, %s116
    %p120 = scmp.eq.s32.totalorder %s17, 0
    %p121 = por %p119, %p120
    %p122 = scmp.ne.s32.totalorder %s114, %s116
    %p123 = scmp.eq.s32.totalorder %s22, 1
    %p124 = por %p122, %p123
    %p125 = scmp.ne.s32.totalorder %s116, %s117
    %p126 = scmp.eq.s32.totalorder %s22, 0
    %p127 = por %p125, %p126
    %p128 = scmp.ne.s32.totalorder %s116, %s117
    %p129 = scmp.eq.s32.totalorder %s23, 1
    %p130 = por %p128, %p129
    %p132 = scmp.ne.s32.totalorder %s117, %s131
    %p133 = scmp.eq.s32.totalorder %s23, 0
    %p134 = por %p132, %p133
    %s136 = sadd.s32 %s135, 1
    %p139 = scmp.eq.s32.totalorder %s17, 1
    %p140 = scmp.ne.s32.totalorder %s135, %s137
    %p141 = scmp.eq.s32.totalorder %s17, 0
    %p142 = por %p140, %p141
    %p143 = scmp.ne.s32.totalorder %s135, %s137
    %p144 = scmp.eq.s32.totalorder %s22, 1
    %p145 = por %p143, %p144
    %p146 = scmp.ne.s32.totalorder %s137, %s138
    %p147 = scmp.eq.s32.totalorder %s22, 0
    %p148 = por %p146, %p147
    %p149 = scmp.ne.s32.totalorder %s137, %s138
    %p150 = scmp.eq.s32.totalorder %s23, 1
    %p151 = por %p149, %p150
    %p153 = scmp.ne.s32.totalorder %s138, %s152
    %p154 = scmp.eq.s32.totalorder %s23, 0
    %p155 = por %p153, %p154
    %s157 = sadd.s32 %s156, 1
    %p160 = scmp.eq.s32.totalorder %s17, 1
    %p161 = scmp.ne.s32.totalorder %s156, %s158
    %p162 = scmp.eq.s32.totalorder %s17, 0
    %p163 = por %p161, %p162
    %p164 = scmp.ne.s32.totalorder %s156, %s158
    %p165 = scmp.eq.s32.totalorder %s22, 1
    %p166 = por %p164, %p165
    %p167 = scmp.ne.s32.totalorder %s158, %s159
    %p168 = scmp.eq.s32.totalorder %s22, 0
    %p169 = por %p167, %p168
    %p170 = scmp.ne.s32.totalorder %s158, %s159
    %p171 = scmp.eq.s32.totalorder %s23, 1
    %p172 = por %p170, %p171
    %p174 = scmp.ne.s32.totalorder %s159, %s173
    %p175 = scmp.eq.s32.totalorder %s23, 0
    %p176 = por %p174, %p175
    %s178 = sadd.s32 %s177, 1
    %p181 = scmp.eq.s32.totalorder %s17, 1
    %p182 = scmp.ne.s32.totalorder %s177, %s179
    %p183 = scmp.eq.s32.totalorder %s17, 0
    %p184 = por %p182, %p183
    %p185 = scmp.ne.s32.totalorder %s177, %s179
    %p186 = scmp.eq.s32.totalorder %s22, 1
    %p187 = por %p185, %p186
    %p188 = scmp.ne.s32.totalorder %s179, %s180
    %p189 = scmp.eq.s32.totalorder %s22, 0
    %p190 = por %p188, %p189
    %p191 = scmp.ne.s32.totalorder %s179, %s180
    %p192 = scmp.eq.s32.totalorder %s23, 1
    %p193 = por %p191, %p192
    %p195 = scmp.ne.s32.totalorder %s180, %s194
    %p196 = scmp.eq.s32.totalorder %s23, 0
    %p197 = por %p195, %p196
    %s199 = sadd.s32 %s198, 1
    %p202 = scmp.eq.s32.totalorder %s17, 1
    %p203 = scmp.ne.s32.totalorder %s198, %s200
    %p204 = scmp.eq.s32.totalorder %s17, 0
    %p205 = por %p203, %p204
    %p206 = scmp.ne.s32.totalorder %s198, %s200
    %p207 = scmp.eq.s32.totalorder %s22, 1
    %p208 = por %p206, %p207
    %p209 = scmp.ne.s32.totalorder %s200, %s201
    %p210 = scmp.eq.s32.totalorder %s22, 0
    %p211 = por %p209, %p210
    %p212 = scmp.ne.s32.totalorder %s200, %s201
    %p213 = scmp.eq.s32.totalorder %s23, 1
    %p214 = por %p212, %p213
    %p216 = scmp.ne.s32.totalorder %s201, %s215
    %p217 = scmp.eq.s32.totalorder %s23, 0
    %p218 = por %p216, %p217
    %s219 = ssub.s32 %s17, %s24
    %p220 = scmp.eq.s32.totalorder %s219, 0
    %s222 = sadd.s32 %s221, 1
    %s223 = scalar_select %p220, %s221, %s222
    %p226 = pneg %p220
    %p227 = scmp.eq.s32.totalorder %s17, 1
    %p228 = por %p226, %p227
    %p229 = scmp.ne.s32.totalorder %s221, %s224
    %p230 = scmp.eq.s32.totalorder %s17, 0
    %p231 = por %p229, %p230
    %p232 = scmp.ne.s32.totalorder %s221, %s224
    %p233 = scmp.eq.s32.totalorder %s22, 1
    %p234 = por %p232, %p233
    %p235 = scmp.ne.s32.totalorder %s224, %s225
    %p236 = scmp.eq.s32.totalorder %s22, 0
    %p237 = por %p235, %p236
    %p238 = scmp.ne.s32.totalorder %s224, %s225
    %p239 = scmp.eq.s32.totalorder %s23, 1
    %p240 = por %p238, %p239
    %p242 = scmp.ne.s32.totalorder %s225, %s241
    %p243 = scmp.eq.s32.totalorder %s23, 0
    %p244 = por %p242, %p243
    %p245 = scmp.le.s32.totalorder 1, %s17
    %p246 = scmp.lt.s32.totalorder %s17, 3
    %p247 = pnand %p245, %p246
    %p248 = pneg %p247
    // Predicated region
    $region9: #{tpu_custom_call.1} parent=5 // pred_check
      _
    $region10: #{tpu_custom_call.1} parent=5 // pred_check_branch
      %250 = sbr.rel (%p247) target = $region12
    $region11: #{tpu_custom_call.1} parent=5 // pred_region
      %s251 = ssub.s32 %s17, 1
      // Predicated region
      $region13: #{tpu_custom_call.1} parent=11 // pred_check
        %p252 = pneg %p64
      $region14: #{tpu_custom_call.1} parent=11 // pred_check_branch
        %254 = sbr.rel (%p252) target = $region16
      $region15: #{tpu_custom_call.1} parent=11 // pred_region
        _
      $region16: #{tpu_custom_call.1} parent=11 // pred_fallthru
        _
      // Predicated region
      $region17: #{tpu_custom_call.1} parent=11 // pred_check
        %p255 = pneg %p85
      $region18: #{tpu_custom_call.1} parent=11 // pred_check_branch
        %257 = sbr.rel (%p255) target = $region20
      $region19: #{tpu_custom_call.1} parent=11 // pred_region
        _
      $region20: #{tpu_custom_call.1} parent=11 // pred_fallthru
        _
      // Predicated region
      $region21: #{tpu_custom_call.1} parent=11 // pred_check
        %p258 = pneg %p106
      $region22: #{tpu_custom_call.1} parent=11 // pred_check_branch
        %260 = sbr.rel (%p258) target = $region24
      $region23: #{tpu_custom_call.1} parent=11 // pred_region
        _
      $region24: #{tpu_custom_call.1} parent=11 // pred_fallthru
        _
      // Predicated region
      $region25: #{tpu_custom_call.1} parent=11 // pred_check
        %p261 = pneg %p127
      $region26: #{tpu_custom_call.1} parent=11 // pred_check_branch
        %263 = sbr.rel (%p261) target = $region28
      $region27: #{tpu_custom_call.1} parent=11 // pred_region
        _
      $region28: #{tpu_custom_call.1} parent=11 // pred_fallthru
        _
      // Predicated region
      $region29: #{tpu_custom_call.1} parent=11 // pred_check
        %p264 = pneg %p148
      $region30: #{tpu_custom_call.1} parent=11 // pred_check_branch
        %266 = sbr.rel (%p264) target = $region32
      $region31: #{tpu_custom_call.1} parent=11 // pred_region
        _
      $region32: #{tpu_custom_call.1} parent=11 // pred_fallthru
        _
      // Predicated region
      $region33: #{tpu_custom_call.1} parent=11 // pred_check
        %p267 = pneg %p169
      $region34: #{tpu_custom_call.1} parent=11 // pred_check_branch
        %269 = sbr.rel (%p267) target = $region36
      $region35: #{tpu_custom_call.1} parent=11 // pred_region
        _
      $region36: #{tpu_custom_call.1} parent=11 // pred_fallthru
        _
      // Predicated region
      $region37: #{tpu_custom_call.1} parent=11 // pred_check
        %p270 = pneg %p190
      $region38: #{tpu_custom_call.1} parent=11 // pred_check_branch
        %272 = sbr.rel (%p270) target = $region40
      $region39: #{tpu_custom_call.1} parent=11 // pred_region
        _
      $region40: #{tpu_custom_call.1} parent=11 // pred_fallthru
        _
      // Predicated region
      $region41: #{tpu_custom_call.1} parent=11 // pred_check
        %p273 = pneg %p211
      $region42: #{tpu_custom_call.1} parent=11 // pred_check_branch
        %275 = sbr.rel (%p273) target = $region44
      $region43: #{tpu_custom_call.1} parent=11 // pred_region
        _
      $region44: #{tpu_custom_call.1} parent=11 // pred_fallthru
        _
    $region12: #{tpu_custom_call.1} parent=5 // pred_fallthru
      _
    %p276 = scmp.lt.s32.totalorder %s17, 2
    // Predicated region
    $region45: #{tpu_custom_call.1} parent=5 // pred_check
      %p277 = pneg %p276
    $region46: #{tpu_custom_call.1} parent=5 // pred_check_branch
      %279 = sbr.rel (%p277) target = $region48
    $region47: #{tpu_custom_call.1} parent=5 // pred_region
      // Predicated region
      $region49: #{tpu_custom_call.1} parent=47 // pred_check
        %p280 = pneg %p37
      $region50: #{tpu_custom_call.1} parent=47 // pred_check_branch
        %282 = sbr.rel (%p280) target = $region52
      $region51: #{tpu_custom_call.1} parent=47 // pred_region
        %s283 = smul.u32 128, %s17
        %p284 = scmp.lt.s32.totalorder %s283, 255
        %s285 = scalar_select %p284, %s283, 255
        %s286 = smul.addr %s285, 8
        %s287 = scalar_lea.vmem %s0, %s286
        %s288 = smul.u32 128, %s17
      $region52: #{tpu_custom_call.1} parent=47 // pred_fallthru
        _
    $region48: #{tpu_custom_call.1} parent=5 // pred_fallthru
      _
    %p289 = scmp.le.s32.totalorder 1, %s17
    %p290 = scmp.lt.s32.totalorder %s17, 3
    %p291 = pnand %p289, %p290
    %p292 = pneg %p291
    // Predicated region
    $region53: #{tpu_custom_call.1} parent=5 // pred_check
      _
    $region54: #{tpu_custom_call.1} parent=5 // pred_check_branch
      %294 = sbr.rel (%p291) target = $region56
    $region55: #{tpu_custom_call.1} parent=5 // pred_region
      %s295 = ssub.s32 %s17, 1
      %s296 = smul.u32 128, %s22
      %p297 = scmp.lt.s32.totalorder %s296, 255
      %s298 = scalar_select %p297, %s296, 255
      %s299 = smul.addr %s298, 8
      %s300 = scalar_lea.vmem %s0, %s299
      %p301 = pneg %p43
      %p302 = pneg %p40
      %p303 = pneg %p64
      %p304 = pneg %p61
      %p305 = pneg %p85
      %p306 = pneg %p82
      %p307 = pneg %p106
      %p308 = pneg %p103
      %p309 = pneg %p127
      %p310 = pneg %p124
      %p311 = pneg %p148
      %p312 = pneg %p145
      %p313 = pneg %p169
      %p314 = pneg %p166
      %p315 = pneg %p190
      %p316 = pneg %p187
      %p317 = pneg %p211
      %p318 = pneg %p208
      %p319 = pneg %p237
      %p320 = pneg %p234
      %s321 = smul.u32 128, %s22
      %p322 = scmp.lt.s32.totalorder %s321, 255
      %s323 = scalar_select %p322, %s321, 255
      %s324 = smul.addr %s323, 8
      %s325 = scalar_lea.vmem %s9, %s324
      %s326 = smul.u32 128, %s22
      %p327 = scmp.lt.s32.totalorder %s326, 255
      %s328 = scalar_select %p327, %s326, 255
      %s329 = smul.addr %s328, 8
      %s330 = scalar_lea.vmem %s0, %s329
      %s331 = smul.u32 128, %s22
      %s332 = smul.u32 128, %s22
      %p333 = scmp.lt.s32.totalorder %s332, 255
      %s334 = scalar_select %p333, %s332, 255
      %s335 = smul.addr %s334, 8
      %s336 = scalar_lea.vmem %s9, %s335
      %s337 = smul.u32 128, %s22
      %v339 = vld [vmem:[%s330] sm:$0xff]
      %v340 = vld [vmem:[%s330 + $0x8] sm:$0xff]
      %v341 = vld [vmem:[%s330 + $0x10] sm:$0xff]
      %v342 = vld [vmem:[%s330 + $0x18] sm:$0xff]
      %v343 = vld [vmem:[%s330 + $0x20] sm:$0xff]
      %v344 = vld [vmem:[%s330 + $0x28] sm:$0xff]
      %v345 = vld [vmem:[%s330 + $0x30] sm:$0xff]
      %v346 = vld [vmem:[%s330 + $0x38] sm:$0xff]
      %v347 = vld [vmem:[%s330 + $0x40] sm:$0xff]
      %v348 = vld [vmem:[%s330 + $0x48] sm:$0xff]
      %v349 = vld [vmem:[%s330 + $0x50] sm:$0xff]
      %v350 = vld [vmem:[%s330 + $0x58] sm:$0xff]
      %v351 = vld [vmem:[%s330 + $0x60] sm:$0xff]
      %v352 = vld [vmem:[%s330 + $0x68] sm:$0xff]
      %v353 = vld [vmem:[%s330 + $0x70] sm:$0xff]
      %v354 = vld [vmem:[%s330 + $0x78] sm:$0xff]
      %v355 = vld [vmem:[%s330 + $0x80] sm:$0xff]
      %v356 = vld [vmem:[%s330 + $0x88] sm:$0xff]
      %v357 = vld [vmem:[%s330 + $0x90] sm:$0xff]
      %v358 = vld [vmem:[%s330 + $0x98] sm:$0xff]
      %v359 = vld [vmem:[%s330 + $0xa0] sm:$0xff]
      %v360 = vld [vmem:[%s330 + $0xa8] sm:$0xff]
      %v361 = vld [vmem:[%s330 + $0xb0] sm:$0xff]
      %v362 = vld [vmem:[%s330 + $0xb8] sm:$0xff]
      %v363 = vld [vmem:[%s330 + $0xc0] sm:$0xff]
      %v364 = vld [vmem:[%s330 + $0xc8] sm:$0xff]
      %v365 = vld [vmem:[%s330 + $0xd0] sm:$0xff]
      %v366 = vld [vmem:[%s330 + $0xd8] sm:$0xff]
      %v367 = vld [vmem:[%s330 + $0xe0] sm:$0xff]
      %v368 = vld [vmem:[%s330 + $0xe8] sm:$0xff]
      %v369 = vld [vmem:[%s330 + $0xf0] sm:$0xff]
      %v370 = vld [vmem:[%s330 + $0xf8] sm:$0xff]
      %v371 = vld [vmem:[%s330 + $0x100] sm:$0xff]
      %v372 = vld [vmem:[%s330 + $0x108] sm:$0xff]
      %v373 = vld [vmem:[%s330 + $0x110] sm:$0xff]
      %v374 = vld [vmem:[%s330 + $0x118] sm:$0xff]
      %v375 = vld [vmem:[%s330 + $0x120] sm:$0xff]
      %v376 = vld [vmem:[%s330 + $0x128] sm:$0xff]
      %v377 = vld [vmem:[%s330 + $0x130] sm:$0xff]
      %v378 = vld [vmem:[%s330 + $0x138] sm:$0xff]
      %v379 = vld [vmem:[%s330 + $0x140] sm:$0xff]
      %v380 = vld [vmem:[%s330 + $0x148] sm:$0xff]
      %v381 = vld [vmem:[%s330 + $0x150] sm:$0xff]
      %v382 = vld [vmem:[%s330 + $0x158] sm:$0xff]
      %v383 = vld [vmem:[%s330 + $0x160] sm:$0xff]
      %v384 = vld [vmem:[%s330 + $0x168] sm:$0xff]
      %v385 = vld [vmem:[%s330 + $0x170] sm:$0xff]
      %v386 = vld [vmem:[%s330 + $0x178] sm:$0xff]
      %v387 = vld [vmem:[%s330 + $0x180] sm:$0xff]
      %v388 = vld [vmem:[%s330 + $0x188] sm:$0xff]
      %v389 = vld [vmem:[%s330 + $0x190] sm:$0xff]
      %v390 = vld [vmem:[%s330 + $0x198] sm:$0xff]
      %v391 = vld [vmem:[%s330 + $0x1a0] sm:$0xff]
      %v392 = vld [vmem:[%s330 + $0x1a8] sm:$0xff]
      %v393 = vld [vmem:[%s330 + $0x1b0] sm:$0xff]
      %v394 = vld [vmem:[%s330 + $0x1b8] sm:$0xff]
      %v395 = vld [vmem:[%s330 + $0x1c0] sm:$0xff]
      %v396 = vld [vmem:[%s330 + $0x1c8] sm:$0xff]
      %v397 = vld [vmem:[%s330 + $0x1d0] sm:$0xff]
      %v398 = vld [vmem:[%s330 + $0x1d8] sm:$0xff]
      %v399 = vld [vmem:[%s330 + $0x1e0] sm:$0xff]
      %v400 = vld [vmem:[%s330 + $0x1e8] sm:$0xff]
      %v401 = vld [vmem:[%s330 + $0x1f0] sm:$0xff]
      %v402 = vld [vmem:[%s330 + $0x1f8] sm:$0xff]
      %v403 = vld [vmem:[%s330 + $0x200] sm:$0xff]
      %v404 = vld [vmem:[%s330 + $0x208] sm:$0xff]
      %v405 = vld [vmem:[%s330 + $0x210] sm:$0xff]
      %v406 = vld [vmem:[%s330 + $0x218] sm:$0xff]
      %v407 = vld [vmem:[%s330 + $0x220] sm:$0xff]
      %v408 = vld [vmem:[%s330 + $0x228] sm:$0xff]
      %v409 = vld [vmem:[%s330 + $0x230] sm:$0xff]
      %v410 = vld [vmem:[%s330 + $0x238] sm:$0xff]
      %v411 = vld [vmem:[%s330 + $0x240] sm:$0xff]
      %v412 = vld [vmem:[%s330 + $0x248] sm:$0xff]
      %v413 = vld [vmem:[%s330 + $0x250] sm:$0xff]
      %v414 = vld [vmem:[%s330 + $0x258] sm:$0xff]
      %v415 = vld [vmem:[%s330 + $0x260] sm:$0xff]
      %v416 = vld [vmem:[%s330 + $0x268] sm:$0xff]
      %v417 = vld [vmem:[%s330 + $0x270] sm:$0xff]
      %v418 = vld [vmem:[%s330 + $0x278] sm:$0xff]
      %v419 = vld [vmem:[%s330 + $0x280] sm:$0xff]
      %v420 = vld [vmem:[%s330 + $0x288] sm:$0xff]
      %v421 = vld [vmem:[%s330 + $0x290] sm:$0xff]
      %v422 = vld [vmem:[%s330 + $0x298] sm:$0xff]
      %v423 = vld [vmem:[%s330 + $0x2a0] sm:$0xff]
      %v424 = vld [vmem:[%s330 + $0x2a8] sm:$0xff]
      %v425 = vld [vmem:[%s330 + $0x2b0] sm:$0xff]
      %v426 = vld [vmem:[%s330 + $0x2b8] sm:$0xff]
      %v427 = vld [vmem:[%s330 + $0x2c0] sm:$0xff]
      %v428 = vld [vmem:[%s330 + $0x2c8] sm:$0xff]
      %v429 = vld [vmem:[%s330 + $0x2d0] sm:$0xff]
      %v430 = vld [vmem:[%s330 + $0x2d8] sm:$0xff]
      %v431 = vld [vmem:[%s330 + $0x2e0] sm:$0xff]
      %v432 = vld [vmem:[%s330 + $0x2e8] sm:$0xff]
      %v433 = vld [vmem:[%s330 + $0x2f0] sm:$0xff]
      %v434 = vld [vmem:[%s330 + $0x2f8] sm:$0xff]
      %v435 = vld [vmem:[%s330 + $0x300] sm:$0xff]
      %v436 = vld [vmem:[%s330 + $0x308] sm:$0xff]
      %v437 = vld [vmem:[%s330 + $0x310] sm:$0xff]
      %v438 = vld [vmem:[%s330 + $0x318] sm:$0xff]
      %v439 = vld [vmem:[%s330 + $0x320] sm:$0xff]
      %v440 = vld [vmem:[%s330 + $0x328] sm:$0xff]
      %v441 = vld [vmem:[%s330 + $0x330] sm:$0xff]
      %v442 = vld [vmem:[%s330 + $0x338] sm:$0xff]
      %v443 = vld [vmem:[%s330 + $0x340] sm:$0xff]
      %v444 = vld [vmem:[%s330 + $0x348] sm:$0xff]
      %v445 = vld [vmem:[%s330 + $0x350] sm:$0xff]
      %v446 = vld [vmem:[%s330 + $0x358] sm:$0xff]
      %v447 = vld [vmem:[%s330 + $0x360] sm:$0xff]
      %v448 = vld [vmem:[%s330 + $0x368] sm:$0xff]
      %v449 = vld [vmem:[%s330 + $0x370] sm:$0xff]
      %v450 = vld [vmem:[%s330 + $0x378] sm:$0xff]
      %v451 = vld [vmem:[%s330 + $0x380] sm:$0xff]
      %v452 = vld [vmem:[%s330 + $0x388] sm:$0xff]
      %v453 = vld [vmem:[%s330 + $0x390] sm:$0xff]
      %v454 = vld [vmem:[%s330 + $0x398] sm:$0xff]
      %v455 = vld [vmem:[%s330 + $0x3a0] sm:$0xff]
      %v456 = vld [vmem:[%s330 + $0x3a8] sm:$0xff]
      %v457 = vld [vmem:[%s330 + $0x3b0] sm:$0xff]
      %v458 = vld [vmem:[%s330 + $0x3b8] sm:$0xff]
      %v459 = vld [vmem:[%s330 + $0x3c0] sm:$0xff]
      %v460 = vld [vmem:[%s330 + $0x3c8] sm:$0xff]
      %v461 = vld [vmem:[%s330 + $0x3d0] sm:$0xff]
      %v462 = vld [vmem:[%s330 + $0x3d8] sm:$0xff]
      %v463 = vld [vmem:[%s330 + $0x3e0] sm:$0xff]
      %v464 = vld [vmem:[%s330 + $0x3e8] sm:$0xff]
      %v465 = vld [vmem:[%s330 + $0x3f0] sm:$0xff]
      %v466 = vld [vmem:[%s330 + $0x3f8] sm:$0xff]
      %v467 = vpack.c.bf16 %v340, %v339
      %v468 = vpack.c.bf16 %v342, %v341
      %v469 = vpack.c.bf16 %v344, %v343
      %v470 = vpack.c.bf16 %v346, %v345
      %v471 = vpack.c.bf16 %v348, %v347
      %v472 = vpack.c.bf16 %v350, %v349
      %v473 = vpack.c.bf16 %v352, %v351
      %v474 = vpack.c.bf16 %v354, %v353
      %v475 = vpack.c.bf16 %v356, %v355
      %v476 = vpack.c.bf16 %v358, %v357
      %v477 = vpack.c.bf16 %v360, %v359
      %v478 = vpack.c.bf16 %v362, %v361
      %v479 = vpack.c.bf16 %v364, %v363
      %v480 = vpack.c.bf16 %v366, %v365
      %v481 = vpack.c.bf16 %v368, %v367
      %v482 = vpack.c.bf16 %v370, %v369
      %v483 = vpack.c.bf16 %v372, %v371
      %v484 = vpack.c.bf16 %v374, %v373
      %v485 = vpack.c.bf16 %v376, %v375
      %v486 = vpack.c.bf16 %v378, %v377
      %v487 = vpack.c.bf16 %v380, %v379
      %v488 = vpack.c.bf16 %v382, %v381
      %v489 = vpack.c.bf16 %v384, %v383
      %v490 = vpack.c.bf16 %v386, %v385
      %v491 = vpack.c.bf16 %v388, %v387
      %v492 = vpack.c.bf16 %v390, %v389
      %v493 = vpack.c.bf16 %v392, %v391
      %v494 = vpack.c.bf16 %v394, %v393
      %v495 = vpack.c.bf16 %v396, %v395
      %v496 = vpack.c.bf16 %v398, %v397
      %v497 = vpack.c.bf16 %v400, %v399
      %v498 = vpack.c.bf16 %v402, %v401
      %v499 = vpack.c.bf16 %v404, %v403
      %v500 = vpack.c.bf16 %v406, %v405
      %v501 = vpack.c.bf16 %v408, %v407
      %v502 = vpack.c.bf16 %v410, %v409
      %v503 = vpack.c.bf16 %v412, %v411
      %v504 = vpack.c.bf16 %v414, %v413
      %v505 = vpack.c.bf16 %v416, %v415
      %v506 = vpack.c.bf16 %v418, %v417
      %v507 = vpack.c.bf16 %v420, %v419
      %v508 = vpack.c.bf16 %v422, %v421
      %v509 = vpack.c.bf16 %v424, %v423
      %v510 = vpack.c.bf16 %v426, %v425
      %v511 = vpack.c.bf16 %v428, %v427
      %v512 = vpack.c.bf16 %v430, %v429
      %v513 = vpack.c.bf16 %v432, %v431
      %v514 = vpack.c.bf16 %v434, %v433
      %v515 = vpack.c.bf16 %v436, %v435
      %v516 = vpack.c.bf16 %v438, %v437
      %v517 = vpack.c.bf16 %v440, %v439
      %v518 = vpack.c.bf16 %v442, %v441
      %v519 = vpack.c.bf16 %v444, %v443
      %v520 = vpack.c.bf16 %v446, %v445
      %v521 = vpack.c.bf16 %v448, %v447
      %v522 = vpack.c.bf16 %v450, %v449
      %v523 = vpack.c.bf16 %v452, %v451
      %v524 = vpack.c.bf16 %v454, %v453
      %v525 = vpack.c.bf16 %v456, %v455
      %v526 = vpack.c.bf16 %v458, %v457
      %v527 = vpack.c.bf16 %v460, %v459
      %v528 = vpack.c.bf16 %v462, %v461
      %v529 = vpack.c.bf16 %v464, %v463
      %v530 = vpack.c.bf16 %v466, %v465
      %v531 = vld [vmem:[%s1] sm:$0xf]
      %v532 = vld [vmem:[%s1 + $0x4] sm:$0xf]
      %v533 = vld [vmem:[%s1 + $0x8] sm:$0xf]
      %v534 = vld [vmem:[%s1 + $0xc] sm:$0xf]
      %v535 = vld [vmem:[%s1 + $0x10] sm:$0xf]
      %v536 = vld [vmem:[%s2] sm:$0x1]
      %v538 = vlaneseq
      %v539 = vshrl.u32 %v538, 7
      %v540 = vsub.s32 0, %v539
      %v541 = vrot.slane %v536, %v540
      %v548 = vunpack.c.l.b16 %v531
      %v549 = vunpack.c.l.b16 %v532
      %v550 = vunpack.c.l.b16 %v533
      %v551 = vunpack.c.l.b16 %v534
      %v552 = vunpack.c.l.b16 %v535
      %v553 = vpack.c.b16 %v549, %v548
      %v554 = vpack.c.b16 %v551, %v550
      %v555 = vpack.c.b16 %v552, %v552
      %vm558 = vcmask 318464
      %v560 = vsel %vm558, %v467, 0
      %v563 = vsel %vm558, %v468, 0
      %v566 = vsel %vm558, %v469, 0
      %v569 = vsel %vm558, %v470, 0
      %v572 = vsel %vm558, %v471, 0
      %v575 = vsel %vm558, %v472, 0
      %v578 = vsel %vm558, %v473, 0
      %v581 = vsel %vm558, %v474, 0
      %v584 = vsel %vm558, %v475, 0
      %v587 = vsel %vm558, %v476, 0
      %v590 = vsel %vm558, %v477, 0
      %v593 = vsel %vm558, %v478, 0
      %v596 = vsel %vm558, %v479, 0
      %v599 = vsel %vm558, %v480, 0
      %v602 = vsel %vm558, %v481, 0
      %v605 = vsel %vm558, %v482, 0
      %v608 = vsel %vm558, %v483, 0
      %v611 = vsel %vm558, %v484, 0
      %v614 = vsel %vm558, %v485, 0
      %v617 = vsel %vm558, %v486, 0
      %v620 = vsel %vm558, %v487, 0
      %v623 = vsel %vm558, %v488, 0
      %v626 = vsel %vm558, %v489, 0
      %v629 = vsel %vm558, %v490, 0
      %v632 = vsel %vm558, %v491, 0
      %v635 = vsel %vm558, %v492, 0
      %v638 = vsel %vm558, %v493, 0
      %v641 = vsel %vm558, %v494, 0
      %v644 = vsel %vm558, %v495, 0
      %v647 = vsel %vm558, %v496, 0
      %v650 = vsel %vm558, %v497, 0
      %v653 = vsel %vm558, %v498, 0
      %v656 = vsel %vm558, %v499, 0
      %v659 = vsel %vm558, %v500, 0
      %v662 = vsel %vm558, %v501, 0
      %v665 = vsel %vm558, %v502, 0
      %v668 = vsel %vm558, %v503, 0
      %v671 = vsel %vm558, %v504, 0
      %v674 = vsel %vm558, %v505, 0
      %v677 = vsel %vm558, %v506, 0
      %v680 = vsel %vm558, %v507, 0
      %v683 = vsel %vm558, %v508, 0
      %v686 = vsel %vm558, %v509, 0
      %v689 = vsel %vm558, %v510, 0
      %v692 = vsel %vm558, %v511, 0
      %v695 = vsel %vm558, %v512, 0
      %v698 = vsel %vm558, %v513, 0
      %v701 = vsel %vm558, %v514, 0
      %v704 = vsel %vm558, %v515, 0
      %v707 = vsel %vm558, %v516, 0
      %v710 = vsel %vm558, %v517, 0
      %v713 = vsel %vm558, %v518, 0
      %v716 = vsel %vm558, %v519, 0
      %v719 = vsel %vm558, %v520, 0
      %v722 = vsel %vm558, %v521, 0
      %v725 = vsel %vm558, %v522, 0
      %v728 = vsel %vm558, %v523, 0
      %v731 = vsel %vm558, %v524, 0
      %v734 = vsel %vm558, %v525, 0
      %v737 = vsel %vm558, %v526, 0
      %v740 = vsel %vm558, %v527, 0
      %v743 = vsel %vm558, %v528, 0
      %v746 = vsel %vm558, %v529, 0
      %v749 = vsel %vm558, %v530, 0
      %vm751 = vcmask 1042432
      %vm752 = vcmask 1043456
      %v753 = vsel %vm751, 4294967295, 65535
      %v754 = vsel %vm752, %v753, 0
      %v756 = vand.u32 %v555, %v754
      %758 = vmatprep.subr.bf16.mxu0 0
      %759 = vmatpush1.bf16.msra.mxu0 %v553
      %760 = vmatprep.subr.bf16.mxu0 0
      %761 = vmatpush1.bf16.msra.mxu0 %v554
      %762 = vmatprep.subr.bf16.mxu0 0
      %763 = vmatpush1.bf16.msra.mxu0 %v756
      %764 = vmatprep.subr.bf16.mxu0 0
      %765 = vmatpush1.bf16.msra.mxu0 0
      %766 = vmatprep.subr.bf16.mxu0 0
      %767 = vmatpush1.bf16.msra.mxu0 0
      %768 = vmatprep.subr.bf16.mxu0 0
      %769 = vmatpush1.bf16.msra.mxu0 0
      %770 = vmatprep.subr.bf16.mxu0 0
      %771 = vmatpush1.bf16.msra.mxu0 0
      %772 = vmatprep.subr.bf16.mxu0 0
      %773 = vmatpush1.bf16.msra.mxu0 0
      %774 = vmatprep.subr.bf16.mxu0 0
      %775 = vmatpush1.bf16.msra.mxu0 0
      %776 = vmatprep.subr.bf16.mxu0 0
      %777 = vmatpush1.bf16.msra.mxu0 0
      %778 = vmatprep.subr.bf16.mxu0 0
      %779 = vmatpush1.bf16.msra.mxu0 0
      %780 = vmatprep.subr.bf16.mxu0 0
      %781 = vmatpush1.bf16.msra.mxu0 0
      %782 = vmatprep.subr.bf16.mxu0 0
      %783 = vmatpush1.bf16.msra.mxu0 0
      %784 = vmatprep.subr.bf16.mxu0 0
      %785 = vmatpush1.bf16.msra.mxu0 0
      %786 = vmatprep.subr.bf16.mxu0 0
      %787 = vmatpush1.bf16.msra.mxu0 0
      %788 = vmatprep.subr.bf16.mxu0 0
      %789 = vmatpush1.bf16.msra.mxu0 0
      %790 = vmatprep.mubr.bf16.mxu0 0
      %791 = vmatmul.mubr.bf16.gmra.mrb[0].mxu0 %v560
      %v792 = vpop.f32.mrb[0].mxu0
      %v793 = vadd.f32 %v541, %v792
      %v794 = vpop.f32.mrb[0].mxu0
      %v795 = vpop.f32.mrb[0].mxu0
      %v796 = vadd.f32 %v541, %v795
      %v797 = vpop.f32.mrb[0].mxu0
      %798 = vmatprep.mubr.bf16.mxu0 0
      %799 = vmatmul.mubr.bf16.gmra.mrb[0].mxu0 %v563
      %v800 = vpop.f32.mrb[0].mxu0
      %v801 = vadd.f32 %v541, %v800
      %v802 = vpop.f32.mrb[0].mxu0
      %v803 = vpop.f32.mrb[0].mxu0
      %v804 = vadd.f32 %v541, %v803
      %v805 = vpop.f32.mrb[0].mxu0
      %806 = vmatprep.mubr.bf16.mxu0 0
      %807 = vmatmul.mubr.bf16.gmra.mrb[0].mxu0 %v566
      %v808 = vpop.f32.mrb[0].mxu0
      %v809 = vadd.f32 %v541, %v808
      %v810 = vpop.f32.mrb[0].mxu0
      %v811 = vpop.f32.mrb[0].mxu0
      %v812 = vadd.f32 %v541, %v811
      %v813 = vpop.f32.mrb[0].mxu0
      %814 = vmatprep.mubr.bf16.mxu0 0
      %815 = vmatmul.mubr.bf16.gmra.mrb[0].mxu0 %v569
      %v816 = vpop.f32.mrb[0].mxu0
      %v817 = vadd.f32 %v541, %v816
      %v818 = vpop.f32.mrb[0].mxu0
      %v819 = vpop.f32.mrb[0].mxu0
      %v820 = vadd.f32 %v541, %v819
      %v821 = vpop.f32.mrb[0].mxu0
      %822 = vmatprep.mubr.bf16.mxu0 0
      %823 = vmatmul.mubr.bf16.gmra.mrb[0].mxu0 %v572
      %v824 = vpop.f32.mrb[0].mxu0
      %v825 = vadd.f32 %v541, %v824
      %v826 = vpop.f32.mrb[0].mxu0
      %v827 = vpop.f32.mrb[0].mxu0
      %v828 = vadd.f32 %v541, %v827
      %v829 = vpop.f32.mrb[0].mxu0
      %830 = vmatprep.mubr.bf16.mxu0 0
      %831 = vmatmul.mubr.bf16.gmra.mrb[0].mxu0 %v575
      %v832 = vpop.f32.mrb[0].mxu0
      %v833 = vadd.f32 %v541, %v832
      %v834 = vpop.f32.mrb[0].mxu0
      %v835 = vpop.f32.mrb[0].mxu0
      %v836 = vadd.f32 %v541, %v835
      %v837 = vpop.f32.mrb[0].mxu0
      %838 = vmatprep.mubr.bf16.mxu0 0
      %839 = vmatmul.mubr.bf16.gmra.mrb[0].mxu0 %v578
      %v840 = vpop.f32.mrb[0].mxu0
      %v841 = vadd.f32 %v541, %v840
      %v842 = vpop.f32.mrb[0].mxu0
      %v843 = vpop.f32.mrb[0].mxu0
      %v844 = vadd.f32 %v541, %v843
      %v845 = vpop.f32.mrb[0].mxu0
      %846 = vmatprep.mubr.bf16.mxu0 0
      %847 = vmatmul.mubr.bf16.gmra.mrb[0].mxu0 %v581
      %v848 = vpop.f32.mrb[0].mxu0
      %v849 = vadd.f32 %v541, %v848
      %v850 = vpop.f32.mrb[0].mxu0
      %v851 = vpop.f32.mrb[0].mxu0
      %v852 = vadd.f32 %v541, %v851
      %v853 = vpop.f32.mrb[0].mxu0
      %854 = vmatprep.mubr.bf16.mxu0 0
      %855 = vmatmul.mubr.bf16.gmra.mrb[0].mxu0 %v584
      %v856 = vpop.f32.mrb[0].mxu0
      %v857 = vadd.f32 %v541, %v856
      %v858 = vpop.f32.mrb[0].mxu0
      %v859 = vpop.f32.mrb[0].mxu0
      %v860 = vadd.f32 %v541, %v859
      %v861 = vpop.f32.mrb[0].mxu0
      %862 = vmatprep.mubr.bf16.mxu0 0
      %863 = vmatmul.mubr.bf16.gmra.mrb[0].mxu0 %v587
      %v864 = vpop.f32.mrb[0].mxu0
      %v865 = vadd.f32 %v541, %v864
      %v866 = vpop.f32.mrb[0].mxu0
      %v867 = vpop.f32.mrb[0].mxu0
      %v868 = vadd.f32 %v541, %v867
      %v869 = vpop.f32.mrb[0].mxu0
      %870 = vmatprep.mubr.bf16.mxu0 0
      %871 = vmatmul.mubr.bf16.gmra.mrb[0].mxu0 %v590
      %v872 = vpop.f32.mrb[0].mxu0
      %v873 = vadd.f32 %v541, %v872
      %v874 = vpop.f32.mrb[0].mxu0
      %v875 = vpop.f32.mrb[0].mxu0
      %v876 = vadd.f32 %v541, %v875
      %v877 = vpop.f32.mrb[0].mxu0
      %878 = vmatprep.mubr.bf16.mxu0 0
      %879 = vmatmul.mubr.bf16.gmra.mrb[0].mxu0 %v593
      %v880 = vpop.f32.mrb[0].mxu0
      %v881 = vadd.f32 %v541, %v880
      %v882 = vpop.f32.mrb[0].mxu0
      %v883 = vpop.f32.mrb[0].mxu0
      %v884 = vadd.f32 %v541, %v883
      %v885 = vpop.f32.mrb[0].mxu0
      %886 = vmatprep.mubr.bf16.mxu0 0
      %887 = vmatmul.mubr.bf16.gmra.mrb[0].mxu0 %v596
      %v888 = vpop.f32.mrb[0].mxu0
      %v889 = vadd.f32 %v541, %v888
      %v890 = vpop.f32.mrb[0].mxu0
      %v891 = vpop.f32.mrb[0].mxu0
      %v892 = vadd.f32 %v541, %v891
      %v893 = vpop.f32.mrb[0].mxu0
      %894 = vmatprep.mubr.bf16.mxu0 0
      %895 = vmatmul.mubr.bf16.gmra.mrb[0].mxu0 %v599
      %v896 = vpop.f32.mrb[0].mxu0
      %v897 = vadd.f32 %v541, %v896
      %v898 = vpop.f32.mrb[0].mxu0
      %v899 = vpop.f32.mrb[0].mxu0
      %v900 = vadd.f32 %v541, %v899
      %v901 = vpop.f32.mrb[0].mxu0
      %902 = vmatprep.mubr.bf16.mxu0 0
      %903 = vmatmul.mubr.bf16.gmra.mrb[0].mxu0 %v602
      %v904 = vpop.f32.mrb[0].mxu0
      %v905 = vadd.f32 %v541, %v904
      %v906 = vpop.f32.mrb[0].mxu0
      %v907 = vpop.f32.mrb[0].mxu0
      %v908 = vadd.f32 %v541, %v907
      %v909 = vpop.f32.mrb[0].mxu0
      %910 = vmatprep.mubr.bf16.mxu0 0
      %911 = vmatmul.mubr.bf16.gmra.mrb[0].mxu0 %v605
      %v912 = vpop.f32.mrb[0].mxu0
      %v913 = vadd.f32 %v541, %v912
      %v914 = vpop.f32.mrb[0].mxu0
      %v915 = vpop.f32.mrb[0].mxu0
      %v916 = vadd.f32 %v541, %v915
      %v917 = vpop.f32.mrb[0].mxu0
      %918 = vmatprep.mubr.bf16.mxu0 0
      %919 = vmatmul.mubr.bf16.gmra.mrb[0].mxu0 %v608
      %v920 = vpop.f32.mrb[0].mxu0
      %v921 = vadd.f32 %v541, %v920
      %v922 = vpop.f32.mrb[0].mxu0
      %v923 = vpop.f32.mrb[0].mxu0
      %v924 = vadd.f32 %v541, %v923
      %v925 = vpop.f32.mrb[0].mxu0
      %926 = vmatprep.mubr.bf16.mxu0 0
      %927 = vmatmul.mubr.bf16.gmra.mrb[0].mxu0 %v611
      %v928 = vpop.f32.mrb[0].mxu0
      %v929 = vadd.f32 %v541, %v928
      %v930 = vpop.f32.mrb[0].mxu0
      %v931 = vpop.f32.mrb[0].mxu0
      %v932 = vadd.f32 %v541, %v931
      %v933 = vpop.f32.mrb[0].mxu0
      %934 = vmatprep.mubr.bf16.mxu0 0
      %935 = vmatmul.mubr.bf16.gmra.mrb[0].mxu0 %v614
      %v936 = vpop.f32.mrb[0].mxu0
      %v937 = vadd.f32 %v541, %v936
      %v938 = vpop.f32.mrb[0].mxu0
      %v939 = vpop.f32.mrb[0].mxu0
      %v940 = vadd.f32 %v541, %v939
      %v941 = vpop.f32.mrb[0].mxu0
      %942 = vmatprep.mubr.bf16.mxu0 0
      %943 = vmatmul.mubr.bf16.gmra.mrb[0].mxu0 %v617
      %v944 = vpop.f32.mrb[0].mxu0
      %v945 = vadd.f32 %v541, %v944
      %v946 = vpop.f32.mrb[0].mxu0
      %v947 = vpop.f32.mrb[0].mxu0
      %v948 = vadd.f32 %v541, %v947
      %v949 = vpop.f32.mrb[0].mxu0
      %950 = vmatprep.mubr.bf16.mxu0 0
      %951 = vmatmul.mubr.bf16.gmra.mrb[0].mxu0 %v620
      %v952 = vpop.f32.mrb[0].mxu0
      %v953 = vadd.f32 %v541, %v952
      %v954 = vpop.f32.mrb[0].mxu0
      %v955 = vpop.f32.mrb[0].mxu0
      %v956 = vadd.f32 %v541, %v955
      %v957 = vpop.f32.mrb[0].mxu0
      %958 = vmatprep.mubr.bf16.mxu0 0
      %959 = vmatmul.mubr.bf16.gmra.mrb[0].mxu0 %v623
      %v960 = vpop.f32.mrb[0].mxu0
      %v961 = vadd.f32 %v541, %v960
      %v962 = vpop.f32.mrb[0].mxu0
      %v963 = vpop.f32.mrb[0].mxu0
      %v964 = vadd.f32 %v541, %v963
      %v965 = vpop.f32.mrb[0].mxu0
      %966 = vmatprep.mubr.bf16.mxu0 0
      %967 = vmatmul.mubr.bf16.gmra.mrb[0].mxu0 %v626
      %v968 = vpop.f32.mrb[0].mxu0
      %v969 = vadd.f32 %v541, %v968
      %v970 = vpop.f32.mrb[0].mxu0
      %v971 = vpop.f32.mrb[0].mxu0
      %v972 = vadd.f32 %v541, %v971
      %v973 = vpop.f32.mrb[0].mxu0
      %974 = vmatprep.mubr.bf16.mxu0 0
      %975 = vmatmul.mubr.bf16.gmra.mrb[0].mxu0 %v629
      %v976 = vpop.f32.mrb[0].mxu0
      %v977 = vadd.f32 %v541, %v976
      %v978 = vpop.f32.mrb[0].mxu0
      %v979 = vpop.f32.mrb[0].mxu0
      %v980 = vadd.f32 %v541, %v979
      %v981 = vpop.f32.mrb[0].mxu0
      %982 = vmatprep.mubr.bf16.mxu0 0
      %983 = vmatmul.mubr.bf16.gmra.mrb[0].mxu0 %v632
      %v984 = vpop.f32.mrb[0].mxu0
      %v985 = vadd.f32 %v541, %v984
      %v986 = vpop.f32.mrb[0].mxu0
      %v987 = vpop.f32.mrb[0].mxu0
      %v988 = vadd.f32 %v541, %v987
      %v989 = vpop.f32.mrb[0].mxu0
      %990 = vmatprep.mubr.bf16.mxu0 0
      %991 = vmatmul.mubr.bf16.gmra.mrb[0].mxu0 %v635
      %v992 = vpop.f32.mrb[0].mxu0
      %v993 = vadd.f32 %v541, %v992
      %v994 = vpop.f32.mrb[0].mxu0
      %v995 = vpop.f32.mrb[0].mxu0
      %v996 = vadd.f32 %v541, %v995
      %v997 = vpop.f32.mrb[0].mxu0
      %998 = vmatprep.mubr.bf16.mxu0 0
      %999 = vmatmul.mubr.bf16.gmra.mrb[0].mxu0 %v638
      %v1000 = vpop.f32.mrb[0].mxu0
      %v1001 = vadd.f32 %v541, %v1000
      %v1002 = vpop.f32.mrb[0].mxu0
      %v1003 = vpop.f32.mrb[0].mxu0
      %v1004 = vadd.f32 %v541, %v1003
      %v1005 = vpop.f32.mrb[0].mxu0
      %1006 = vmatprep.mubr.bf16.mxu0 0
      %1007 = vmatmul.mubr.bf16.gmra.mrb[0].mxu0 %v641
      %v1008 = vpop.f32.mrb[0].mxu0
      %v1009 = vadd.f32 %v541, %v1008
      %v1010 = vpop.f32.mrb[0].mxu0
      %v1011 = vpop.f32.mrb[0].mxu0
      %v1012 = vadd.f32 %v541, %v1011
      %v1013 = vpop.f32.mrb[0].mxu0
      %1014 = vmatprep.mubr.bf16.mxu0 0
      %1015 = vmatmul.mubr.bf16.gmra.mrb[0].mxu0 %v644
      %v1016 = vpop.f32.mrb[0].mxu0
      %v1017 = vadd.f32 %v541, %v1016
      %v1018 = vpop.f32.mrb[0].mxu0
      %v1019 = vpop.f32.mrb[0].mxu0
      %v1020 = vadd.f32 %v541, %v1019
      %v1021 = vpop.f32.mrb[0].mxu0
      %1022 = vmatprep.mubr.bf16.mxu0 0
      %1023 = vmatmul.mubr.bf16.gmra.mrb[0].mxu0 %v647
      %v1024 = vpop.f32.mrb[0].mxu0
      %v1025 = vadd.f32 %v541, %v1024
      %v1026 = vpop.f32.mrb[0].mxu0
      %v1027 = vpop.f32.mrb[0].mxu0
      %v1028 = vadd.f32 %v541, %v1027
      %v1029 = vpop.f32.mrb[0].mxu0
      %1030 = vmatprep.mubr.bf16.mxu0 0
      %1031 = vmatmul.mubr.bf16.gmra.mrb[0].mxu0 %v650
      %v1032 = vpop.f32.mrb[0].mxu0
      %v1033 = vadd.f32 %v541, %v1032
      %v1034 = vpop.f32.mrb[0].mxu0
      %v1035 = vpop.f32.mrb[0].mxu0
      %v1036 = vadd.f32 %v541, %v1035
      %v1037 = vpop.f32.mrb[0].mxu0
      %1038 = vmatprep.mubr.bf16.mxu0 0
      %1039 = vmatmul.mubr.bf16.gmra.mrb[0].mxu0 %v653
      %v1040 = vpop.f32.mrb[0].mxu0
      %v1041 = vadd.f32 %v541, %v1040
      %v1042 = vpop.f32.mrb[0].mxu0
      %v1043 = vpop.f32.mrb[0].mxu0
      %v1044 = vadd.f32 %v541, %v1043
      %v1045 = vpop.f32.mrb[0].mxu0
      %1046 = vmatprep.mubr.bf16.mxu0 0
      %1047 = vmatmul.mubr.bf16.gmra.mrb[0].mxu0 %v656
      %v1048 = vpop.f32.mrb[0].mxu0
      %v1049 = vadd.f32 %v541, %v1048
      %v1050 = vpop.f32.mrb[0].mxu0
      %v1051 = vpop.f32.mrb[0].mxu0
      %v1052 = vadd.f32 %v541, %v1051
      %v1053 = vpop.f32.mrb[0].mxu0
      %1054 = vmatprep.mubr.bf16.mxu0 0
      %1055 = vmatmul.mubr.bf16.gmra.mrb[0].mxu0 %v659
      %v1056 = vpop.f32.mrb[0].mxu0
      %v1057 = vadd.f32 %v541, %v1056
      %v1058 = vpop.f32.mrb[0].mxu0
      %v1059 = vpop.f32.mrb[0].mxu0
      %v1060 = vadd.f32 %v541, %v1059
      %v1061 = vpop.f32.mrb[0].mxu0
      %1062 = vmatprep.mubr.bf16.mxu0 0
      %1063 = vmatmul.mubr.bf16.gmra.mrb[0].mxu0 %v662
      %v1064 = vpop.f32.mrb[0].mxu0
      %v1065 = vadd.f32 %v541, %v1064
      %v1066 = vpop.f32.mrb[0].mxu0
      %v1067 = vpop.f32.mrb[0].mxu0
      %v1068 = vadd.f32 %v541, %v1067
      %v1069 = vpop.f32.mrb[0].mxu0
      %1070 = vmatprep.mubr.bf16.mxu0 0
      %1071 = vmatmul.mubr.bf16.gmra.mrb[0].mxu0 %v665
      %v1072 = vpop.f32.mrb[0].mxu0
      %v1073 = vadd.f32 %v541, %v1072
      %v1074 = vpop.f32.mrb[0].mxu0
      %v1075 = vpop.f32.mrb[0].mxu0
      %v1076 = vadd.f32 %v541, %v1075
      %v1077 = vpop.f32.mrb[0].mxu0
      %1078 = vmatprep.mubr.bf16.mxu0 0
      %1079 = vmatmul.mubr.bf16.gmra.mrb[0].mxu0 %v668
      %v1080 = vpop.f32.mrb[0].mxu0
      %v1081 = vadd.f32 %v541, %v1080
      %v1082 = vpop.f32.mrb[0].mxu0
      %v1083 = vpop.f32.mrb[0].mxu0
      %v1084 = vadd.f32 %v541, %v1083
      %v1085 = vpop.f32.mrb[0].mxu0
      %1086 = vmatprep.mubr.bf16.mxu0 0
      %1087 = vmatmul.mubr.bf16.gmra.mrb[0].mxu0 %v671
      %v1088 = vpop.f32.mrb[0].mxu0
      %v1089 = vadd.f32 %v541, %v1088
      %v1090 = vpop.f32.mrb[0].mxu0
      %v1091 = vpop.f32.mrb[0].mxu0
      %v1092 = vadd.f32 %v541, %v1091
      %v1093 = vpop.f32.mrb[0].mxu0
      %1094 = vmatprep.mubr.bf16.mxu0 0
      %1095 = vmatmul.mubr.bf16.gmra.mrb[0].mxu0 %v674
      %v1096 = vpop.f32.mrb[0].mxu0
      %v1097 = vadd.f32 %v541, %v1096
      %v1098 = vpop.f32.mrb[0].mxu0
      %v1099 = vpop.f32.mrb[0].mxu0
      %v1100 = vadd.f32 %v541, %v1099
      %v1101 = vpop.f32.mrb[0].mxu0
      %1102 = vmatprep.mubr.bf16.mxu0 0
      %1103 = vmatmul.mubr.bf16.gmra.mrb[0].mxu0 %v677
      %v1104 = vpop.f32.mrb[0].mxu0
      %v1105 = vadd.f32 %v541, %v1104
      %v1106 = vpop.f32.mrb[0].mxu0
      %v1107 = vpop.f32.mrb[0].mxu0
      %v1108 = vadd.f32 %v541, %v1107
      %v1109 = vpop.f32.mrb[0].mxu0
      %1110 = vmatprep.mubr.bf16.mxu0 0
      %1111 = vmatmul.mubr.bf16.gmra.mrb[0].mxu0 %v680
      %v1112 = vpop.f32.mrb[0].mxu0
      %v1113 = vadd.f32 %v541, %v1112
      %v1114 = vpop.f32.mrb[0].mxu0
      %v1115 = vpop.f32.mrb[0].mxu0
      %v1116 = vadd.f32 %v541, %v1115
      %v1117 = vpop.f32.mrb[0].mxu0
      %1118 = vmatprep.mubr.bf16.mxu0 0
      %1119 = vmatmul.mubr.bf16.gmra.mrb[0].mxu0 %v683
      %v1120 = vpop.f32.mrb[0].mxu0
      %v1121 = vadd.f32 %v541, %v1120
      %v1122 = vpop.f32.mrb[0].mxu0
      %v1123 = vpop.f32.mrb[0].mxu0
      %v1124 = vadd.f32 %v541, %v1123
      %v1125 = vpop.f32.mrb[0].mxu0
      %1126 = vmatprep.mubr.bf16.mxu0 0
      %1127 = vmatmul.mubr.bf16.gmra.mrb[0].mxu0 %v686
      %v1128 = vpop.f32.mrb[0].mxu0
      %v1129 = vadd.f32 %v541, %v1128
      %v1130 = vpop.f32.mrb[0].mxu0
      %v1131 = vpop.f32.mrb[0].mxu0
      %v1132 = vadd.f32 %v541, %v1131
      %v1133 = vpop.f32.mrb[0].mxu0
      %1134 = vmatprep.mubr.bf16.mxu0 0
      %1135 = vmatmul.mubr.bf16.gmra.mrb[0].mxu0 %v689
      %v1136 = vpop.f32.mrb[0].mxu0
      %v1137 = vadd.f32 %v541, %v1136
      %v1138 = vpop.f32.mrb[0].mxu0
      %v1139 = vpop.f32.mrb[0].mxu0
      %v1140 = vadd.f32 %v541, %v1139
      %v1141 = vpop.f32.mrb[0].mxu0
      %1142 = vmatprep.mubr.bf16.mxu0 0
      %1143 = vmatmul.mubr.bf16.gmra.mrb[0].mxu0 %v692
      %v1144 = vpop.f32.mrb[0].mxu0
      %v1145 = vadd.f32 %v541, %v1144
      %v1146 = vpop.f32.mrb[0].mxu0
      %v1147 = vpop.f32.mrb[0].mxu0
      %v1148 = vadd.f32 %v541, %v1147
      %v1149 = vpop.f32.mrb[0].mxu0
      %1150 = vmatprep.mubr.bf16.mxu0 0
      %1151 = vmatmul.mubr.bf16.gmra.mrb[0].mxu0 %v695
      %v1152 = vpop.f32.mrb[0].mxu0
      %v1153 = vadd.f32 %v541, %v1152
      %v1154 = vpop.f32.mrb[0].mxu0
      %v1155 = vpop.f32.mrb[0].mxu0
      %v1156 = vadd.f32 %v541, %v1155
      %v1157 = vpop.f32.mrb[0].mxu0
      %1158 = vmatprep.mubr.bf16.mxu0 0
      %1159 = vmatmul.mubr.bf16.gmra.mrb[0].mxu0 %v698
      %v1160 = vpop.f32.mrb[0].mxu0
      %v1161 = vadd.f32 %v541, %v1160
      %v1162 = vpop.f32.mrb[0].mxu0
      %v1163 = vpop.f32.mrb[0].mxu0
      %v1164 = vadd.f32 %v541, %v1163
      %v1165 = vpop.f32.mrb[0].mxu0
      %1166 = vmatprep.mubr.bf16.mxu0 0
      %1167 = vmatmul.mubr.bf16.gmra.mrb[0].mxu0 %v701
      %v1168 = vpop.f32.mrb[0].mxu0
      %v1169 = vadd.f32 %v541, %v1168
      %v1170 = vpop.f32.mrb[0].mxu0
      %v1171 = vpop.f32.mrb[0].mxu0
      %v1172 = vadd.f32 %v541, %v1171
      %v1173 = vpop.f32.mrb[0].mxu0
      %1174 = vmatprep.mubr.bf16.mxu0 0
      %1175 = vmatmul.mubr.bf16.gmra.mrb[0].mxu0 %v704
      %v1176 = vpop.f32.mrb[0].mxu0
      %v1177 = vadd.f32 %v541, %v1176
      %v1178 = vpop.f32.mrb[0].mxu0
      %v1179 = vpop.f32.mrb[0].mxu0
      %v1180 = vadd.f32 %v541, %v1179
      %v1181 = vpop.f32.mrb[0].mxu0
      %1182 = vmatprep.mubr.bf16.mxu0 0
      %1183 = vmatmul.mubr.bf16.gmra.mrb[0].mxu0 %v707
      %v1184 = vpop.f32.mrb[0].mxu0
      %v1185 = vadd.f32 %v541, %v1184
      %v1186 = vpop.f32.mrb[0].mxu0
      %v1187 = vpop.f32.mrb[0].mxu0
      %v1188 = vadd.f32 %v541, %v1187
      %v1189 = vpop.f32.mrb[0].mxu0
      %1190 = vmatprep.mubr.bf16.mxu0 0
      %1191 = vmatmul.mubr.bf16.gmra.mrb[0].mxu0 %v710
      %v1192 = vpop.f32.mrb[0].mxu0
      %v1193 = vadd.f32 %v541, %v1192
      %v1194 = vpop.f32.mrb[0].mxu0
      %v1195 = vpop.f32.mrb[0].mxu0
      %v1196 = vadd.f32 %v541, %v1195
      %v1197 = vpop.f32.mrb[0].mxu0
      %1198 = vmatprep.mubr.bf16.mxu0 0
      %1199 = vmatmul.mubr.bf16.gmra.mrb[0].mxu0 %v713
      %v1200 = vpop.f32.mrb[0].mxu0
      %v1201 = vadd.f32 %v541, %v1200
      %v1202 = vpop.f32.mrb[0].mxu0
      %v1203 = vpop.f32.mrb[0].mxu0
      %v1204 = vadd.f32 %v541, %v1203
      %v1205 = vpop.f32.mrb[0].mxu0
      %1206 = vmatprep.mubr.bf16.mxu0 0
      %1207 = vmatmul.mubr.bf16.gmra.mrb[0].mxu0 %v716
      %v1208 = vpop.f32.mrb[0].mxu0
      %v1209 = vadd.f32 %v541, %v1208
      %v1210 = vpop.f32.mrb[0].mxu0
      %v1211 = vpop.f32.mrb[0].mxu0
      %v1212 = vadd.f32 %v541, %v1211
      %v1213 = vpop.f32.mrb[0].mxu0
      %1214 = vmatprep.mubr.bf16.mxu0 0
      %1215 = vmatmul.mubr.bf16.gmra.mrb[0].mxu0 %v719
      %v1216 = vpop.f32.mrb[0].mxu0
      %v1217 = vadd.f32 %v541, %v1216
      %v1218 = vpop.f32.mrb[0].mxu0
      %v1219 = vpop.f32.mrb[0].mxu0
      %v1220 = vadd.f32 %v541, %v1219
      %v1221 = vpop.f32.mrb[0].mxu0
      %1222 = vmatprep.mubr.bf16.mxu0 0
      %1223 = vmatmul.mubr.bf16.gmra.mrb[0].mxu0 %v722
      %v1224 = vpop.f32.mrb[0].mxu0
      %v1225 = vadd.f32 %v541, %v1224
      %v1226 = vpop.f32.mrb[0].mxu0
      %v1227 = vpop.f32.mrb[0].mxu0
      %v1228 = vadd.f32 %v541, %v1227
      %v1229 = vpop.f32.mrb[0].mxu0
      %1230 = vmatprep.mubr.bf16.mxu0 0
      %1231 = vmatmul.mubr.bf16.gmra.mrb[0].mxu0 %v725
      %v1232 = vpop.f32.mrb[0].mxu0
      %v1233 = vadd.f32 %v541, %v1232
      %v1234 = vpop.f32.mrb[0].mxu0
      %v1235 = vpop.f32.mrb[0].mxu0
      %v1236 = vadd.f32 %v541, %v1235
      %v1237 = vpop.f32.mrb[0].mxu0
      %1238 = vmatprep.mubr.bf16.mxu0 0
      %1239 = vmatmul.mubr.bf16.gmra.mrb[0].mxu0 %v728
      %v1240 = vpop.f32.mrb[0].mxu0
      %v1241 = vadd.f32 %v541, %v1240
      %v1242 = vpop.f32.mrb[0].mxu0
      %v1243 = vpop.f32.mrb[0].mxu0
      %v1244 = vadd.f32 %v541, %v1243
      %v1245 = vpop.f32.mrb[0].mxu0
      %1246 = vmatprep.mubr.bf16.mxu0 0
      %1247 = vmatmul.mubr.bf16.gmra.mrb[0].mxu0 %v731
      %v1248 = vpop.f32.mrb[0].mxu0
      %v1249 = vadd.f32 %v541, %v1248
      %v1250 = vpop.f32.mrb[0].mxu0
      %v1251 = vpop.f32.mrb[0].mxu0
      %v1252 = vadd.f32 %v541, %v1251
      %v1253 = vpop.f32.mrb[0].mxu0
      %1254 = vmatprep.mubr.bf16.mxu0 0
      %1255 = vmatmul.mubr.bf16.gmra.mrb[0].mxu0 %v734
      %v1256 = vpop.f32.mrb[0].mxu0
      %v1257 = vadd.f32 %v541, %v1256
      %v1258 = vpop.f32.mrb[0].mxu0
      %v1259 = vpop.f32.mrb[0].mxu0
      %v1260 = vadd.f32 %v541, %v1259
      %v1261 = vpop.f32.mrb[0].mxu0
      %1262 = vmatprep.mubr.bf16.mxu0 0
      %1263 = vmatmul.mubr.bf16.gmra.mrb[0].mxu0 %v737
      %v1264 = vpop.f32.mrb[0].mxu0
      %v1265 = vadd.f32 %v541, %v1264
      %v1266 = vpop.f32.mrb[0].mxu0
      %v1267 = vpop.f32.mrb[0].mxu0
      %v1268 = vadd.f32 %v541, %v1267
      %v1269 = vpop.f32.mrb[0].mxu0
      %1270 = vmatprep.mubr.bf16.mxu0 0
      %1271 = vmatmul.mubr.bf16.gmra.mrb[0].mxu0 %v740
      %v1272 = vpop.f32.mrb[0].mxu0
      %v1273 = vadd.f32 %v541, %v1272
      %v1274 = vpop.f32.mrb[0].mxu0
      %v1275 = vpop.f32.mrb[0].mxu0
      %v1276 = vadd.f32 %v541, %v1275
      %v1277 = vpop.f32.mrb[0].mxu0
      %1278 = vmatprep.mubr.bf16.mxu0 0
      %1279 = vmatmul.mubr.bf16.gmra.mrb[0].mxu0 %v743
      %v1280 = vpop.f32.mrb[0].mxu0
      %v1281 = vadd.f32 %v541, %v1280
      %v1282 = vpop.f32.mrb[0].mxu0
      %v1283 = vpop.f32.mrb[0].mxu0
      %v1284 = vadd.f32 %v541, %v1283
      %v1285 = vpop.f32.mrb[0].mxu0
      %1286 = vmatprep.mubr.bf16.mxu0 0
      %1287 = vmatmul.mubr.bf16.gmra.mrb[0].mxu0 %v746
      %v1288 = vpop.f32.mrb[0].mxu0
      %v1289 = vadd.f32 %v541, %v1288
      %v1290 = vpop.f32.mrb[0].mxu0
      %v1291 = vpop.f32.mrb[0].mxu0
      %v1292 = vadd.f32 %v541, %v1291
      %v1293 = vpop.f32.mrb[0].mxu0
      %1294 = vmatprep.mubr.bf16.mxu0 0
      %1295 = vmatmul.mubr.bf16.gmra.mrb[0].mxu0 %v749
      %v1296 = vpop.f32.mrb[0].mxu0
      %v1297 = vadd.f32 %v541, %v1296
      %v1298 = vpop.f32.mrb[0].mxu0
      %v1299 = vpop.f32.mrb[0].mxu0
      %v1300 = vadd.f32 %v541, %v1299
      %v1301 = vpop.f32.mrb[0].mxu0
      %1302 = vdwg.mxu0
      %v1303 = vmax.f32 %v793, 0.0
      %v1304 = vmax.f32 %v796, 0.0
      %v1305 = vmax.f32 %v801, 0.0
      %v1306 = vmax.f32 %v804, 0.0
      %v1307 = vmax.f32 %v809, 0.0
      %v1308 = vmax.f32 %v812, 0.0
      %v1309 = vmax.f32 %v817, 0.0
      %v1310 = vmax.f32 %v820, 0.0
      %v1311 = vmax.f32 %v825, 0.0
      %v1312 = vmax.f32 %v828, 0.0
      %v1313 = vmax.f32 %v833, 0.0
      %v1314 = vmax.f32 %v836, 0.0
      %v1315 = vmax.f32 %v841, 0.0
      %v1316 = vmax.f32 %v844, 0.0
      %v1317 = vmax.f32 %v849, 0.0
      %v1318 = vmax.f32 %v852, 0.0
      %v1319 = vmax.f32 %v857, 0.0
      %v1320 = vmax.f32 %v860, 0.0
      %v1321 = vmax.f32 %v865, 0.0
      %v1322 = vmax.f32 %v868, 0.0
      %v1323 = vmax.f32 %v873, 0.0
      %v1324 = vmax.f32 %v876, 0.0
      %v1325 = vmax.f32 %v881, 0.0
      %v1326 = vmax.f32 %v884, 0.0
      %v1327 = vmax.f32 %v889, 0.0
      %v1328 = vmax.f32 %v892, 0.0
      %v1329 = vmax.f32 %v897, 0.0
      %v1330 = vmax.f32 %v900, 0.0
      %v1331 = vmax.f32 %v905, 0.0
      %v1332 = vmax.f32 %v908, 0.0
      %v1333 = vmax.f32 %v913, 0.0
      %v1334 = vmax.f32 %v916, 0.0
      %v1335 = vmax.f32 %v921, 0.0
      %v1336 = vmax.f32 %v924, 0.0
      %v1337 = vmax.f32 %v929, 0.0
      %v1338 = vmax.f32 %v932, 0.0
      %v1339 = vmax.f32 %v937, 0.0
      %v1340 = vmax.f32 %v940, 0.0
      %v1341 = vmax.f32 %v945, 0.0
      %v1342 = vmax.f32 %v948, 0.0
      %v1343 = vmax.f32 %v953, 0.0
      %v1344 = vmax.f32 %v956, 0.0
      %v1345 = vmax.f32 %v961, 0.0
      %v1346 = vmax.f32 %v964, 0.0
      %v1347 = vmax.f32 %v969, 0.0
      %v1348 = vmax.f32 %v972, 0.0
      %v1349 = vmax.f32 %v977, 0.0
      %v1350 = vmax.f32 %v980, 0.0
      %v1351 = vmax.f32 %v985, 0.0
      %v1352 = vmax.f32 %v988, 0.0
      %v1353 = vmax.f32 %v993, 0.0
      %v1354 = vmax.f32 %v996, 0.0
      %v1355 = vmax.f32 %v1001, 0.0
      %v1356 = vmax.f32 %v1004, 0.0
      %v1357 = vmax.f32 %v1009, 0.0
      %v1358 = vmax.f32 %v1012, 0.0
      %v1359 = vmax.f32 %v1017, 0.0
      %v1360 = vmax.f32 %v1020, 0.0
      %v1361 = vmax.f32 %v1025, 0.0
      %v1362 = vmax.f32 %v1028, 0.0
      %v1363 = vmax.f32 %v1033, 0.0
      %v1364 = vmax.f32 %v1036, 0.0
      %v1365 = vmax.f32 %v1041, 0.0
      %v1366 = vmax.f32 %v1044, 0.0
      %v1367 = vmax.f32 %v1049, 0.0
      %v1368 = vmax.f32 %v1052, 0.0
      %v1369 = vmax.f32 %v1057, 0.0
      %v1370 = vmax.f32 %v1060, 0.0
      %v1371 = vmax.f32 %v1065, 0.0
      %v1372 = vmax.f32 %v1068, 0.0
      %v1373 = vmax.f32 %v1073, 0.0
      %v1374 = vmax.f32 %v1076, 0.0
      %v1375 = vmax.f32 %v1081, 0.0
      %v1376 = vmax.f32 %v1084, 0.0
      %v1377 = vmax.f32 %v1089, 0.0
      %v1378 = vmax.f32 %v1092, 0.0
      %v1379 = vmax.f32 %v1097, 0.0
      %v1380 = vmax.f32 %v1100, 0.0
      %v1381 = vmax.f32 %v1105, 0.0
      %v1382 = vmax.f32 %v1108, 0.0
      %v1383 = vmax.f32 %v1113, 0.0
      %v1384 = vmax.f32 %v1116, 0.0
      %v1385 = vmax.f32 %v1121, 0.0
      %v1386 = vmax.f32 %v1124, 0.0
      %v1387 = vmax.f32 %v1129, 0.0
      %v1388 = vmax.f32 %v1132, 0.0
      %v1389 = vmax.f32 %v1137, 0.0
      %v1390 = vmax.f32 %v1140, 0.0
      %v1391 = vmax.f32 %v1145, 0.0
      %v1392 = vmax.f32 %v1148, 0.0
      %v1393 = vmax.f32 %v1153, 0.0
      %v1394 = vmax.f32 %v1156, 0.0
      %v1395 = vmax.f32 %v1161, 0.0
      %v1396 = vmax.f32 %v1164, 0.0
      %v1397 = vmax.f32 %v1169, 0.0
      %v1398 = vmax.f32 %v1172, 0.0
      %v1399 = vmax.f32 %v1177, 0.0
      %v1400 = vmax.f32 %v1180, 0.0
      %v1401 = vmax.f32 %v1185, 0.0
      %v1402 = vmax.f32 %v1188, 0.0
      %v1403 = vmax.f32 %v1193, 0.0
      %v1404 = vmax.f32 %v1196, 0.0
      %v1405 = vmax.f32 %v1201, 0.0
      %v1406 = vmax.f32 %v1204, 0.0
      %v1407 = vmax.f32 %v1209, 0.0
      %v1408 = vmax.f32 %v1212, 0.0
      %v1409 = vmax.f32 %v1217, 0.0
      %v1410 = vmax.f32 %v1220, 0.0
      %v1411 = vmax.f32 %v1225, 0.0
      %v1412 = vmax.f32 %v1228, 0.0
      %v1413 = vmax.f32 %v1233, 0.0
      %v1414 = vmax.f32 %v1236, 0.0
      %v1415 = vmax.f32 %v1241, 0.0
      %v1416 = vmax.f32 %v1244, 0.0
      %v1417 = vmax.f32 %v1249, 0.0
      %v1418 = vmax.f32 %v1252, 0.0
      %v1419 = vmax.f32 %v1257, 0.0
      %v1420 = vmax.f32 %v1260, 0.0
      %v1421 = vmax.f32 %v1265, 0.0
      %v1422 = vmax.f32 %v1268, 0.0
      %v1423 = vmax.f32 %v1273, 0.0
      %v1424 = vmax.f32 %v1276, 0.0
      %v1425 = vmax.f32 %v1281, 0.0
      %v1426 = vmax.f32 %v1284, 0.0
      %v1427 = vmax.f32 %v1289, 0.0
      %v1428 = vmax.f32 %v1292, 0.0
      %v1429 = vmax.f32 %v1297, 0.0
      %v1430 = vmax.f32 %v1300, 0.0
      %v1431 = vpack.c.bf16 %v1304, %v1303
      %v1432 = vpack.c.bf16 %v1306, %v1305
      %v1433 = vpack.c.bf16 %v1308, %v1307
      %v1434 = vpack.c.bf16 %v1310, %v1309
      %v1435 = vpack.c.bf16 %v1312, %v1311
      %v1436 = vpack.c.bf16 %v1314, %v1313
      %v1437 = vpack.c.bf16 %v1316, %v1315
      %v1438 = vpack.c.bf16 %v1318, %v1317
      %v1439 = vpack.c.bf16 %v1320, %v1319
      %v1440 = vpack.c.bf16 %v1322, %v1321
      %v1441 = vpack.c.bf16 %v1324, %v1323
      %v1442 = vpack.c.bf16 %v1326, %v1325
      %v1443 = vpack.c.bf16 %v1328, %v1327
      %v1444 = vpack.c.bf16 %v1330, %v1329
      %v1445 = vpack.c.bf16 %v1332, %v1331
      %v1446 = vpack.c.bf16 %v1334, %v1333
      %v1447 = vpack.c.bf16 %v1336, %v1335
      %v1448 = vpack.c.bf16 %v1338, %v1337
      %v1449 = vpack.c.bf16 %v1340, %v1339
      %v1450 = vpack.c.bf16 %v1342, %v1341
      %v1451 = vpack.c.bf16 %v1344, %v1343
      %v1452 = vpack.c.bf16 %v1346, %v1345
      %v1453 = vpack.c.bf16 %v1348, %v1347
      %v1454 = vpack.c.bf16 %v1350, %v1349
      %v1455 = vpack.c.bf16 %v1352, %v1351
      %v1456 = vpack.c.bf16 %v1354, %v1353
      %v1457 = vpack.c.bf16 %v1356, %v1355
      %v1458 = vpack.c.bf16 %v1358, %v1357
      %v1459 = vpack.c.bf16 %v1360, %v1359
      %v1460 = vpack.c.bf16 %v1362, %v1361
      %v1461 = vpack.c.bf16 %v1364, %v1363
      %v1462 = vpack.c.bf16 %v1366, %v1365
      %v1463 = vpack.c.bf16 %v1368, %v1367
      %v1464 = vpack.c.bf16 %v1370, %v1369
      %v1465 = vpack.c.bf16 %v1372, %v1371
      %v1466 = vpack.c.bf16 %v1374, %v1373
      %v1467 = vpack.c.bf16 %v1376, %v1375
      %v1468 = vpack.c.bf16 %v1378, %v1377
      %v1469 = vpack.c.bf16 %v1380, %v1379
      %v1470 = vpack.c.bf16 %v1382, %v1381
      %v1471 = vpack.c.bf16 %v1384, %v1383
      %v1472 = vpack.c.bf16 %v1386, %v1385
      %v1473 = vpack.c.bf16 %v1388, %v1387
      %v1474 = vpack.c.bf16 %v1390, %v1389
      %v1475 = vpack.c.bf16 %v1392, %v1391
      %v1476 = vpack.c.bf16 %v1394, %v1393
      %v1477 = vpack.c.bf16 %v1396, %v1395
      %v1478 = vpack.c.bf16 %v1398, %v1397
      %v1479 = vpack.c.bf16 %v1400, %v1399
      %v1480 = vpack.c.bf16 %v1402, %v1401
      %v1481 = vpack.c.bf16 %v1404, %v1403
      %v1482 = vpack.c.bf16 %v1406, %v1405
      %v1483 = vpack.c.bf16 %v1408, %v1407
      %v1484 = vpack.c.bf16 %v1410, %v1409
      %v1485 = vpack.c.bf16 %v1412, %v1411
      %v1486 = vpack.c.bf16 %v1414, %v1413
      %v1487 = vpack.c.bf16 %v1416, %v1415
      %v1488 = vpack.c.bf16 %v1418, %v1417
      %v1489 = vpack.c.bf16 %v1420, %v1419
      %v1490 = vpack.c.bf16 %v1422, %v1421
      %v1491 = vpack.c.bf16 %v1424, %v1423
      %v1492 = vpack.c.bf16 %v1426, %v1425
      %v1493 = vpack.c.bf16 %v1428, %v1427
      %v1494 = vpack.c.bf16 %v1430, %v1429
      %v1495 = vld [vmem:[%s3] sm:$0xf]
      %v1496 = vld [vmem:[%s3 + $0x4] sm:$0xf]
      %v1497 = vld [vmem:[%s3 + $0x8] sm:$0xf]
      %v1498 = vld [vmem:[%s3 + $0xc] sm:$0xf]
      %v1499 = vld [vmem:[%s3 + $0x10] sm:$0xf]
      %v1500 = vld [vmem:[%s3 + $0x14] sm:$0xf]
      %v1501 = vld [vmem:[%s3 + $0x18] sm:$0xf]
      %v1502 = vld [vmem:[%s3 + $0x1c] sm:$0xf]
      %v1503 = vld [vmem:[%s3 + $0x20] sm:$0xf]
      %v1504 = vld [vmem:[%s3 + $0x24] sm:$0xf]
      %v1505 = vld [vmem:[%s3 + $0x28] sm:$0xf]
      %v1506 = vld [vmem:[%s3 + $0x2c] sm:$0xf]
      %v1507 = vld [vmem:[%s3 + $0x30] sm:$0xf]
      %v1508 = vld [vmem:[%s3 + $0x34] sm:$0xf]
      %v1509 = vld [vmem:[%s3 + $0x38] sm:$0xf]
      %v1510 = vld [vmem:[%s3 + $0x3c] sm:$0xf]
      %v1511 = vld [vmem:[%s4] sm:$0x1]
      %v1513 = vlaneseq
      %v1514 = vshrl.u32 %v1513, 7
      %v1515 = vsub.s32 0, %v1514
      %v1516 = vrot.slane %v1511, %v1515
      %v1534 = vunpack.c.l.b16 %v1495
      %v1535 = vunpack.c.l.b16 %v1496
      %v1536 = vunpack.c.l.b16 %v1497
      %v1537 = vunpack.c.l.b16 %v1498
      %v1538 = vunpack.c.l.b16 %v1499
      %v1539 = vunpack.c.l.b16 %v1500
      %v1540 = vunpack.c.l.b16 %v1501
      %v1541 = vunpack.c.l.b16 %v1502
      %v1542 = vunpack.c.l.b16 %v1503
      %v1543 = vunpack.c.l.b16 %v1504
      %v1544 = vunpack.c.l.b16 %v1505
      %v1545 = vunpack.c.l.b16 %v1506
      %v1546 = vunpack.c.l.b16 %v1507
      %v1547 = vunpack.c.l.b16 %v1508
      %v1548 = vunpack.c.l.b16 %v1509
      %v1549 = vunpack.c.l.b16 %v1510
      %v1550 = vpack.c.b16 %v1535, %v1534
      %v1551 = vpack.c.b16 %v1537, %v1536
      %v1552 = vpack.c.b16 %v1539, %v1538
      %v1553 = vpack.c.b16 %v1541, %v1540
      %v1554 = vpack.c.b16 %v1543, %v1542
      %v1555 = vpack.c.b16 %v1545, %v1544
      %v1556 = vpack.c.b16 %v1547, %v1546
      %v1557 = vpack.c.b16 %v1549, %v1548
      %1566 = vmatprep.subr.bf16.mxu0 0
      %1567 = vmatpush1.bf16.msra.mxu0 %v1550
      %1568 = vmatprep.subr.bf16.mxu0 0
      %1569 = vmatpush1.bf16.msra.mxu0 %v1551
      %1570 = vmatprep.subr.bf16.mxu0 0
      %1571 = vmatpush1.bf16.msra.mxu0 %v1552
      %1572 = vmatprep.subr.bf16.mxu0 0
      %1573 = vmatpush1.bf16.msra.mxu0 %v1553
      %1574 = vmatprep.subr.bf16.mxu0 0
      %1575 = vmatpush1.bf16.msra.mxu0 %v1554
      %1576 = vmatprep.subr.bf16.mxu0 0
      %1577 = vmatpush1.bf16.msra.mxu0 %v1555
      %1578 = vmatprep.subr.bf16.mxu0 0
      %1579 = vmatpush1.bf16.msra.mxu0 %v1556
      %1580 = vmatprep.subr.bf16.mxu0 0
      %1581 = vmatpush1.bf16.msra.mxu0 %v1557
      %1582 = vmatprep.subr.bf16.mxu0 0
      %1583 = vmatpush1.bf16.msra.mxu0 0
      %1584 = vmatprep.subr.bf16.mxu0 0
      %1585 = vmatpush1.bf16.msra.mxu0 0
      %1586 = vmatprep.subr.bf16.mxu0 0
      %1587 = vmatpush1.bf16.msra.mxu0 0
      %1588 = vmatprep.subr.bf16.mxu0 0
      %1589 = vmatpush1.bf16.msra.mxu0 0
      %1590 = vmatprep.subr.bf16.mxu0 0
      %1591 = vmatpush1.bf16.msra.mxu0 0
      %1592 = vmatprep.subr.bf16.mxu0 0
      %1593 = vmatpush1.bf16.msra.mxu0 0
      %1594 = vmatprep.subr.bf16.mxu0 0
      %1595 = vmatpush1.bf16.msra.mxu0 0
      %1596 = vmatprep.subr.bf16.mxu0 0
      %1597 = vmatpush1.bf16.msra.mxu0 0
      %1598 = vmatprep.mubr.bf16.mxu0 0
      %1599 = vmatmul.mubr.bf16.gmra.mrb[0].mxu0 %v1431
      %v1600 = vpop.f32.mrb[0].mxu0
      %v1601 = vadd.f32 %v1516, %v1600
      %v1602 = vpop.f32.mrb[0].mxu0
      %v1603 = vpop.f32.mrb[0].mxu0
      %v1604 = vadd.f32 %v1516, %v1603
      %v1605 = vpop.f32.mrb[0].mxu0
      %1606 = vmatprep.mubr.bf16.mxu0 0
      %1607 = vmatmul.mubr.bf16.gmra.mrb[0].mxu0 %v1432
      %v1608 = vpop.f32.mrb[0].mxu0
      %v1609 = vadd.f32 %v1516, %v1608
      %v1610 = vpop.f32.mrb[0].mxu0
      %v1611 = vpop.f32.mrb[0].mxu0
      %v1612 = vadd.f32 %v1516, %v1611
      %v1613 = vpop.f32.mrb[0].mxu0
      %1614 = vmatprep.mubr.bf16.mxu0 0
      %1615 = vmatmul.mubr.bf16.gmra.mrb[0].mxu0 %v1433
      %v1616 = vpop.f32.mrb[0].mxu0
      %v1617 = vadd.f32 %v1516, %v1616
      %v1618 = vpop.f32.mrb[0].mxu0
      %v1619 = vpop.f32.mrb[0].mxu0
      %v1620 = vadd.f32 %v1516, %v1619
      %v1621 = vpop.f32.mrb[0].mxu0
      %1622 = vmatprep.mubr.bf16.mxu0 0
      %1623 = vmatmul.mubr.bf16.gmra.mrb[0].mxu0 %v1434
      %v1624 = vpop.f32.mrb[0].mxu0
      %v1625 = vadd.f32 %v1516, %v1624
      %v1626 = vpop.f32.mrb[0].mxu0
      %v1627 = vpop.f32.mrb[0].mxu0
      %v1628 = vadd.f32 %v1516, %v1627
      %v1629 = vpop.f32.mrb[0].mxu0
      %1630 = vmatprep.mubr.bf16.mxu0 0
      %1631 = vmatmul.mubr.bf16.gmra.mrb[0].mxu0 %v1435
      %v1632 = vpop.f32.mrb[0].mxu0
      %v1633 = vadd.f32 %v1516, %v1632
      %v1634 = vpop.f32.mrb[0].mxu0
      %v1635 = vpop.f32.mrb[0].mxu0
      %v1636 = vadd.f32 %v1516, %v1635
      %v1637 = vpop.f32.mrb[0].mxu0
      %1638 = vmatprep.mubr.bf16.mxu0 0
      %1639 = vmatmul.mubr.bf16.gmra.mrb[0].mxu0 %v1436
      %v1640 = vpop.f32.mrb[0].mxu0
      %v1641 = vadd.f32 %v1516, %v1640
      %v1642 = vpop.f32.mrb[0].mxu0
      %v1643 = vpop.f32.mrb[0].mxu0
      %v1644 = vadd.f32 %v1516, %v1643
      %v1645 = vpop.f32.mrb[0].mxu0
      %1646 = vmatprep.mubr.bf16.mxu0 0
      %1647 = vmatmul.mubr.bf16.gmra.mrb[0].mxu0 %v1437
      %v1648 = vpop.f32.mrb[0].mxu0
      %v1649 = vadd.f32 %v1516, %v1648
      %v1650 = vpop.f32.mrb[0].mxu0
      %v1651 = vpop.f32.mrb[0].mxu0
      %v1652 = vadd.f32 %v1516, %v1651
      %v1653 = vpop.f32.mrb[0].mxu0
      %1654 = vmatprep.mubr.bf16.mxu0 0
      %1655 = vmatmul.mubr.bf16.gmra.mrb[0].mxu0 %v1438
      %v1656 = vpop.f32.mrb[0].mxu0
      %v1657 = vadd.f32 %v1516, %v1656
      %v1658 = vpop.f32.mrb[0].mxu0
      %v1659 = vpop.f32.mrb[0].mxu0
      %v1660 = vadd.f32 %v1516, %v1659
      %v1661 = vpop.f32.mrb[0].mxu0
      %1662 = vmatprep.mubr.bf16.mxu0 0
      %1663 = vmatmul.mubr.bf16.gmra.mrb[0].mxu0 %v1439
      %v1664 = vpop.f32.mrb[0].mxu0
      %v1665 = vadd.f32 %v1516, %v1664
      %v1666 = vpop.f32.mrb[0].mxu0
      %v1667 = vpop.f32.mrb[0].mxu0
      %v1668 = vadd.f32 %v1516, %v1667
      %v1669 = vpop.f32.mrb[0].mxu0
      %1670 = vmatprep.mubr.bf16.mxu0 0
      %1671 = vmatmul.mubr.bf16.gmra.mrb[0].mxu0 %v1440
      %v1672 = vpop.f32.mrb[0].mxu0
      %v1673 = vadd.f32 %v1516, %v1672
      %v1674 = vpop.f32.mrb[0].mxu0
      %v1675 = vpop.f32.mrb[0].mxu0
      %v1676 = vadd.f32 %v1516, %v1675
      %v1677 = vpop.f32.mrb[0].mxu0
      %1678 = vmatprep.mubr.bf16.mxu0 0
      %1679 = vmatmul.mubr.bf16.gmra.mrb[0].mxu0 %v1441
      %v1680 = vpop.f32.mrb[0].mxu0
      %v1681 = vadd.f32 %v1516, %v1680
      %v1682 = vpop.f32.mrb[0].mxu0
      %v1683 = vpop.f32.mrb[0].mxu0
      %v1684 = vadd.f32 %v1516, %v1683
      %v1685 = vpop.f32.mrb[0].mxu0
      %1686 = vmatprep.mubr.bf16.mxu0 0
      %1687 = vmatmul.mubr.bf16.gmra.mrb[0].mxu0 %v1442
      %v1688 = vpop.f32.mrb[0].mxu0
      %v1689 = vadd.f32 %v1516, %v1688
      %v1690 = vpop.f32.mrb[0].mxu0
      %v1691 = vpop.f32.mrb[0].mxu0
      %v1692 = vadd.f32 %v1516, %v1691
      %v1693 = vpop.f32.mrb[0].mxu0
      %1694 = vmatprep.mubr.bf16.mxu0 0
      %1695 = vmatmul.mubr.bf16.gmra.mrb[0].mxu0 %v1443
      %v1696 = vpop.f32.mrb[0].mxu0
      %v1697 = vadd.f32 %v1516, %v1696
      %v1698 = vpop.f32.mrb[0].mxu0
      %v1699 = vpop.f32.mrb[0].mxu0
      %v1700 = vadd.f32 %v1516, %v1699
      %v1701 = vpop.f32.mrb[0].mxu0
      %1702 = vmatprep.mubr.bf16.mxu0 0
      %1703 = vmatmul.mubr.bf16.gmra.mrb[0].mxu0 %v1444
      %v1704 = vpop.f32.mrb[0].mxu0
      %v1705 = vadd.f32 %v1516, %v1704
      %v1706 = vpop.f32.mrb[0].mxu0
      %v1707 = vpop.f32.mrb[0].mxu0
      %v1708 = vadd.f32 %v1516, %v1707
      %v1709 = vpop.f32.mrb[0].mxu0
      %1710 = vmatprep.mubr.bf16.mxu0 0
      %1711 = vmatmul.mubr.bf16.gmra.mrb[0].mxu0 %v1445
      %v1712 = vpop.f32.mrb[0].mxu0
      %v1713 = vadd.f32 %v1516, %v1712
      %v1714 = vpop.f32.mrb[0].mxu0
      %v1715 = vpop.f32.mrb[0].mxu0
      %v1716 = vadd.f32 %v1516, %v1715
      %v1717 = vpop.f32.mrb[0].mxu0
      %1718 = vmatprep.mubr.bf16.mxu0 0
      %1719 = vmatmul.mubr.bf16.gmra.mrb[0].mxu0 %v1446
      %v1720 = vpop.f32.mrb[0].mxu0
      %v1721 = vadd.f32 %v1516, %v1720
      %v1722 = vpop.f32.mrb[0].mxu0
      %v1723 = vpop.f32.mrb[0].mxu0
      %v1724 = vadd.f32 %v1516, %v1723
      %v1725 = vpop.f32.mrb[0].mxu0
      %1726 = vmatprep.mubr.bf16.mxu0 0
      %1727 = vmatmul.mubr.bf16.gmra.mrb[0].mxu0 %v1447
      %v1728 = vpop.f32.mrb[0].mxu0
      %v1729 = vadd.f32 %v1516, %v1728
      %v1730 = vpop.f32.mrb[0].mxu0
      %v1731 = vpop.f32.mrb[0].mxu0
      %v1732 = vadd.f32 %v1516, %v1731
      %v1733 = vpop.f32.mrb[0].mxu0
      %1734 = vmatprep.mubr.bf16.mxu0 0
      %1735 = vmatmul.mubr.bf16.gmra.mrb[0].mxu0 %v1448
      %v1736 = vpop.f32.mrb[0].mxu0
      %v1737 = vadd.f32 %v1516, %v1736
      %v1738 = vpop.f32.mrb[0].mxu0
      %v1739 = vpop.f32.mrb[0].mxu0
      %v1740 = vadd.f32 %v1516, %v1739
      %v1741 = vpop.f32.mrb[0].mxu0
      %1742 = vmatprep.mubr.bf16.mxu0 0
      %1743 = vmatmul.mubr.bf16.gmra.mrb[0].mxu0 %v1449
      %v1744 = vpop.f32.mrb[0].mxu0
      %v1745 = vadd.f32 %v1516, %v1744
      %v1746 = vpop.f32.mrb[0].mxu0
      %v1747 = vpop.f32.mrb[0].mxu0
      %v1748 = vadd.f32 %v1516, %v1747
      %v1749 = vpop.f32.mrb[0].mxu0
      %1750 = vmatprep.mubr.bf16.mxu0 0
      %1751 = vmatmul.mubr.bf16.gmra.mrb[0].mxu0 %v1450
      %v1752 = vpop.f32.mrb[0].mxu0
      %v1753 = vadd.f32 %v1516, %v1752
      %v1754 = vpop.f32.mrb[0].mxu0
      %v1755 = vpop.f32.mrb[0].mxu0
      %v1756 = vadd.f32 %v1516, %v1755
      %v1757 = vpop.f32.mrb[0].mxu0
      %1758 = vmatprep.mubr.bf16.mxu0 0
      %1759 = vmatmul.mubr.bf16.gmra.mrb[0].mxu0 %v1451
      %v1760 = vpop.f32.mrb[0].mxu0
      %v1761 = vadd.f32 %v1516, %v1760
      %v1762 = vpop.f32.mrb[0].mxu0
      %v1763 = vpop.f32.mrb[0].mxu0
      %v1764 = vadd.f32 %v1516, %v1763
      %v1765 = vpop.f32.mrb[0].mxu0
      %1766 = vmatprep.mubr.bf16.mxu0 0
      %1767 = vmatmul.mubr.bf16.gmra.mrb[0].mxu0 %v1452
      %v1768 = vpop.f32.mrb[0].mxu0
      %v1769 = vadd.f32 %v1516, %v1768
      %v1770 = vpop.f32.mrb[0].mxu0
      %v1771 = vpop.f32.mrb[0].mxu0
      %v1772 = vadd.f32 %v1516, %v1771
      %v1773 = vpop.f32.mrb[0].mxu0
      %1774 = vmatprep.mubr.bf16.mxu0 0
      %1775 = vmatmul.mubr.bf16.gmra.mrb[0].mxu0 %v1453
      %v1776 = vpop.f32.mrb[0].mxu0
      %v1777 = vadd.f32 %v1516, %v1776
      %v1778 = vpop.f32.mrb[0].mxu0
      %v1779 = vpop.f32.mrb[0].mxu0
      %v1780 = vadd.f32 %v1516, %v1779
      %v1781 = vpop.f32.mrb[0].mxu0
      %1782 = vmatprep.mubr.bf16.mxu0 0
      %1783 = vmatmul.mubr.bf16.gmra.mrb[0].mxu0 %v1454
      %v1784 = vpop.f32.mrb[0].mxu0
      %v1785 = vadd.f32 %v1516, %v1784
      %v1786 = vpop.f32.mrb[0].mxu0
      %v1787 = vpop.f32.mrb[0].mxu0
      %v1788 = vadd.f32 %v1516, %v1787
      %v1789 = vpop.f32.mrb[0].mxu0
      %1790 = vmatprep.mubr.bf16.mxu0 0
      %1791 = vmatmul.mubr.bf16.gmra.mrb[0].mxu0 %v1455
      %v1792 = vpop.f32.mrb[0].mxu0
      %v1793 = vadd.f32 %v1516, %v1792
      %v1794 = vpop.f32.mrb[0].mxu0
      %v1795 = vpop.f32.mrb[0].mxu0
      %v1796 = vadd.f32 %v1516, %v1795
      %v1797 = vpop.f32.mrb[0].mxu0
      %1798 = vmatprep.mubr.bf16.mxu0 0
      %1799 = vmatmul.mubr.bf16.gmra.mrb[0].mxu0 %v1456
      %v1800 = vpop.f32.mrb[0].mxu0
      %v1801 = vadd.f32 %v1516, %v1800
      %v1802 = vpop.f32.mrb[0].mxu0
      %v1803 = vpop.f32.mrb[0].mxu0
      %v1804 = vadd.f32 %v1516, %v1803
      %v1805 = vpop.f32.mrb[0].mxu0
      %1806 = vmatprep.mubr.bf16.mxu0 0
      %1807 = vmatmul.mubr.bf16.gmra.mrb[0].mxu0 %v1457
      %v1808 = vpop.f32.mrb[0].mxu0
      %v1809 = vadd.f32 %v1516, %v1808
      %v1810 = vpop.f32.mrb[0].mxu0
      %v1811 = vpop.f32.mrb[0].mxu0
      %v1812 = vadd.f32 %v1516, %v1811
      %v1813 = vpop.f32.mrb[0].mxu0
      %1814 = vmatprep.mubr.bf16.mxu0 0
      %1815 = vmatmul.mubr.bf16.gmra.mrb[0].mxu0 %v1458
      %v1816 = vpop.f32.mrb[0].mxu0
      %v1817 = vadd.f32 %v1516, %v1816
      %v1818 = vpop.f32.mrb[0].mxu0
      %v1819 = vpop.f32.mrb[0].mxu0
      %v1820 = vadd.f32 %v1516, %v1819
      %v1821 = vpop.f32.mrb[0].mxu0
      %1822 = vmatprep.mubr.bf16.mxu0 0
      %1823 = vmatmul.mubr.bf16.gmra.mrb[0].mxu0 %v1459
      %v1824 = vpop.f32.mrb[0].mxu0
      %v1825 = vadd.f32 %v1516, %v1824
      %v1826 = vpop.f32.mrb[0].mxu0
      %v1827 = vpop.f32.mrb[0].mxu0
      %v1828 = vadd.f32 %v1516, %v1827
      %v1829 = vpop.f32.mrb[0].mxu0
      %1830 = vmatprep.mubr.bf16.mxu0 0
      %1831 = vmatmul.mubr.bf16.gmra.mrb[0].mxu0 %v1460
      %v1832 = vpop.f32.mrb[0].mxu0
      %v1833 = vadd.f32 %v1516, %v1832
      %v1834 = vpop.f32.mrb[0].mxu0
      %v1835 = vpop.f32.mrb[0].mxu0
      %v1836 = vadd.f32 %v1516, %v1835
      %v1837 = vpop.f32.mrb[0].mxu0
      %1838 = vmatprep.mubr.bf16.mxu0 0
      %1839 = vmatmul.mubr.bf16.gmra.mrb[0].mxu0 %v1461
      %v1840 = vpop.f32.mrb[0].mxu0
      %v1841 = vadd.f32 %v1516, %v1840
      %v1842 = vpop.f32.mrb[0].mxu0
      %v1843 = vpop.f32.mrb[0].mxu0
      %v1844 = vadd.f32 %v1516, %v1843
      %v1845 = vpop.f32.mrb[0].mxu0
      %1846 = vmatprep.mubr.bf16.mxu0 0
      %1847 = vmatmul.mubr.bf16.gmra.mrb[0].mxu0 %v1462
      %v1848 = vpop.f32.mrb[0].mxu0
      %v1849 = vadd.f32 %v1516, %v1848
      %v1850 = vpop.f32.mrb[0].mxu0
      %v1851 = vpop.f32.mrb[0].mxu0
      %v1852 = vadd.f32 %v1516, %v1851
      %v1853 = vpop.f32.mrb[0].mxu0
      %1854 = vmatprep.mubr.bf16.mxu0 0
      %1855 = vmatmul.mubr.bf16.gmra.mrb[0].mxu0 %v1463
      %v1856 = vpop.f32.mrb[0].mxu0
      %v1857 = vadd.f32 %v1516, %v1856
      %v1858 = vpop.f32.mrb[0].mxu0
      %v1859 = vpop.f32.mrb[0].mxu0
      %v1860 = vadd.f32 %v1516, %v1859
      %v1861 = vpop.f32.mrb[0].mxu0
      %1862 = vmatprep.mubr.bf16.mxu0 0
      %1863 = vmatmul.mubr.bf16.gmra.mrb[0].mxu0 %v1464
      %v1864 = vpop.f32.mrb[0].mxu0
      %v1865 = vadd.f32 %v1516, %v1864
      %v1866 = vpop.f32.mrb[0].mxu0
      %v1867 = vpop.f32.mrb[0].mxu0
      %v1868 = vadd.f32 %v1516, %v1867
      %v1869 = vpop.f32.mrb[0].mxu0
      %1870 = vmatprep.mubr.bf16.mxu0 0
      %1871 = vmatmul.mubr.bf16.gmra.mrb[0].mxu0 %v1465
      %v1872 = vpop.f32.mrb[0].mxu0
      %v1873 = vadd.f32 %v1516, %v1872
      %v1874 = vpop.f32.mrb[0].mxu0
      %v1875 = vpop.f32.mrb[0].mxu0
      %v1876 = vadd.f32 %v1516, %v1875
      %v1877 = vpop.f32.mrb[0].mxu0
      %1878 = vmatprep.mubr.bf16.mxu0 0
      %1879 = vmatmul.mubr.bf16.gmra.mrb[0].mxu0 %v1466
      %v1880 = vpop.f32.mrb[0].mxu0
      %v1881 = vadd.f32 %v1516, %v1880
      %v1882 = vpop.f32.mrb[0].mxu0
      %v1883 = vpop.f32.mrb[0].mxu0
      %v1884 = vadd.f32 %v1516, %v1883
      %v1885 = vpop.f32.mrb[0].mxu0
      %1886 = vmatprep.mubr.bf16.mxu0 0
      %1887 = vmatmul.mubr.bf16.gmra.mrb[0].mxu0 %v1467
      %v1888 = vpop.f32.mrb[0].mxu0
      %v1889 = vadd.f32 %v1516, %v1888
      %v1890 = vpop.f32.mrb[0].mxu0
      %v1891 = vpop.f32.mrb[0].mxu0
      %v1892 = vadd.f32 %v1516, %v1891
      %v1893 = vpop.f32.mrb[0].mxu0
      %1894 = vmatprep.mubr.bf16.mxu0 0
      %1895 = vmatmul.mubr.bf16.gmra.mrb[0].mxu0 %v1468
      %v1896 = vpop.f32.mrb[0].mxu0
      %v1897 = vadd.f32 %v1516, %v1896
      %v1898 = vpop.f32.mrb[0].mxu0
      %v1899 = vpop.f32.mrb[0].mxu0
      %v1900 = vadd.f32 %v1516, %v1899
      %v1901 = vpop.f32.mrb[0].mxu0
      %1902 = vmatprep.mubr.bf16.mxu0 0
      %1903 = vmatmul.mubr.bf16.gmra.mrb[0].mxu0 %v1469
      %v1904 = vpop.f32.mrb[0].mxu0
      %v1905 = vadd.f32 %v1516, %v1904
      %v1906 = vpop.f32.mrb[0].mxu0
      %v1907 = vpop.f32.mrb[0].mxu0
      %v1908 = vadd.f32 %v1516, %v1907
      %v1909 = vpop.f32.mrb[0].mxu0
      %1910 = vmatprep.mubr.bf16.mxu0 0
      %1911 = vmatmul.mubr.bf16.gmra.mrb[0].mxu0 %v1470
      %v1912 = vpop.f32.mrb[0].mxu0
      %v1913 = vadd.f32 %v1516, %v1912
      %v1914 = vpop.f32.mrb[0].mxu0
      %v1915 = vpop.f32.mrb[0].mxu0
      %v1916 = vadd.f32 %v1516, %v1915
      %v1917 = vpop.f32.mrb[0].mxu0
      %1918 = vmatprep.mubr.bf16.mxu0 0
      %1919 = vmatmul.mubr.bf16.gmra.mrb[0].mxu0 %v1471
      %v1920 = vpop.f32.mrb[0].mxu0
      %v1921 = vadd.f32 %v1516, %v1920
      %v1922 = vpop.f32.mrb[0].mxu0
      %v1923 = vpop.f32.mrb[0].mxu0
      %v1924 = vadd.f32 %v1516, %v1923
      %v1925 = vpop.f32.mrb[0].mxu0
      %1926 = vmatprep.mubr.bf16.mxu0 0
      %1927 = vmatmul.mubr.bf16.gmra.mrb[0].mxu0 %v1472
      %v1928 = vpop.f32.mrb[0].mxu0
      %v1929 = vadd.f32 %v1516, %v1928
      %v1930 = vpop.f32.mrb[0].mxu0
      %v1931 = vpop.f32.mrb[0].mxu0
      %v1932 = vadd.f32 %v1516, %v1931
      %v1933 = vpop.f32.mrb[0].mxu0
      %1934 = vmatprep.mubr.bf16.mxu0 0
      %1935 = vmatmul.mubr.bf16.gmra.mrb[0].mxu0 %v1473
      %v1936 = vpop.f32.mrb[0].mxu0
      %v1937 = vadd.f32 %v1516, %v1936
      %v1938 = vpop.f32.mrb[0].mxu0
      %v1939 = vpop.f32.mrb[0].mxu0
      %v1940 = vadd.f32 %v1516, %v1939
      %v1941 = vpop.f32.mrb[0].mxu0
      %1942 = vmatprep.mubr.bf16.mxu0 0
      %1943 = vmatmul.mubr.bf16.gmra.mrb[0].mxu0 %v1474
      %v1944 = vpop.f32.mrb[0].mxu0
      %v1945 = vadd.f32 %v1516, %v1944
      %v1946 = vpop.f32.mrb[0].mxu0
      %v1947 = vpop.f32.mrb[0].mxu0
      %v1948 = vadd.f32 %v1516, %v1947
      %v1949 = vpop.f32.mrb[0].mxu0
      %1950 = vmatprep.mubr.bf16.mxu0 0
      %1951 = vmatmul.mubr.bf16.gmra.mrb[0].mxu0 %v1475
      %v1952 = vpop.f32.mrb[0].mxu0
      %v1953 = vadd.f32 %v1516, %v1952
      %v1954 = vpop.f32.mrb[0].mxu0
      %v1955 = vpop.f32.mrb[0].mxu0
      %v1956 = vadd.f32 %v1516, %v1955
      %v1957 = vpop.f32.mrb[0].mxu0
      %1958 = vmatprep.mubr.bf16.mxu0 0
      %1959 = vmatmul.mubr.bf16.gmra.mrb[0].mxu0 %v1476
      %v1960 = vpop.f32.mrb[0].mxu0
      %v1961 = vadd.f32 %v1516, %v1960
      %v1962 = vpop.f32.mrb[0].mxu0
      %v1963 = vpop.f32.mrb[0].mxu0
      %v1964 = vadd.f32 %v1516, %v1963
      %v1965 = vpop.f32.mrb[0].mxu0
      %1966 = vmatprep.mubr.bf16.mxu0 0
      %1967 = vmatmul.mubr.bf16.gmra.mrb[0].mxu0 %v1477
      %v1968 = vpop.f32.mrb[0].mxu0
      %v1969 = vadd.f32 %v1516, %v1968
      %v1970 = vpop.f32.mrb[0].mxu0
      %v1971 = vpop.f32.mrb[0].mxu0
      %v1972 = vadd.f32 %v1516, %v1971
      %v1973 = vpop.f32.mrb[0].mxu0
      %1974 = vmatprep.mubr.bf16.mxu0 0
      %1975 = vmatmul.mubr.bf16.gmra.mrb[0].mxu0 %v1478
      %v1976 = vpop.f32.mrb[0].mxu0
      %v1977 = vadd.f32 %v1516, %v1976
      %v1978 = vpop.f32.mrb[0].mxu0
      %v1979 = vpop.f32.mrb[0].mxu0
      %v1980 = vadd.f32 %v1516, %v1979
      %v1981 = vpop.f32.mrb[0].mxu0
      %1982 = vmatprep.mubr.bf16.mxu0 0
      %1983 = vmatmul.mubr.bf16.gmra.mrb[0].mxu0 %v1479
      %v1984 = vpop.f32.mrb[0].mxu0
      %v1985 = vadd.f32 %v1516, %v1984
      %v1986 = vpop.f32.mrb[0].mxu0
      %v1987 = vpop.f32.mrb[0].mxu0
      %v1988 = vadd.f32 %v1516, %v1987
      %v1989 = vpop.f32.mrb[0].mxu0
      %1990 = vmatprep.mubr.bf16.mxu0 0
      %1991 = vmatmul.mubr.bf16.gmra.mrb[0].mxu0 %v1480
      %v1992 = vpop.f32.mrb[0].mxu0
      %v1993 = vadd.f32 %v1516, %v1992
      %v1994 = vpop.f32.mrb[0].mxu0
      %v1995 = vpop.f32.mrb[0].mxu0
      %v1996 = vadd.f32 %v1516, %v1995
      %v1997 = vpop.f32.mrb[0].mxu0
      %1998 = vmatprep.mubr.bf16.mxu0 0
      %1999 = vmatmul.mubr.bf16.gmra.mrb[0].mxu0 %v1481
      %v2000 = vpop.f32.mrb[0].mxu0
      %v2001 = vadd.f32 %v1516, %v2000
      %v2002 = vpop.f32.mrb[0].mxu0
      %v2003 = vpop.f32.mrb[0].mxu0
      %v2004 = vadd.f32 %v1516, %v2003
      %v2005 = vpop.f32.mrb[0].mxu0
      %2006 = vmatprep.mubr.bf16.mxu0 0
      %2007 = vmatmul.mubr.bf16.gmra.mrb[0].mxu0 %v1482
      %v2008 = vpop.f32.mrb[0].mxu0
      %v2009 = vadd.f32 %v1516, %v2008
      %v2010 = vpop.f32.mrb[0].mxu0
      %v2011 = vpop.f32.mrb[0].mxu0
      %v2012 = vadd.f32 %v1516, %v2011
      %v2013 = vpop.f32.mrb[0].mxu0
      %2014 = vmatprep.mubr.bf16.mxu0 0
      %2015 = vmatmul.mubr.bf16.gmra.mrb[0].mxu0 %v1483
      %v2016 = vpop.f32.mrb[0].mxu0
      %v2017 = vadd.f32 %v1516, %v2016
      %v2018 = vpop.f32.mrb[0].mxu0
      %v2019 = vpop.f32.mrb[0].mxu0
      %v2020 = vadd.f32 %v1516, %v2019
      %v2021 = vpop.f32.mrb[0].mxu0
      %2022 = vmatprep.mubr.bf16.mxu0 0
      %2023 = vmatmul.mubr.bf16.gmra.mrb[0].mxu0 %v1484
      %v2024 = vpop.f32.mrb[0].mxu0
      %v2025 = vadd.f32 %v1516, %v2024
      %v2026 = vpop.f32.mrb[0].mxu0
      %v2027 = vpop.f32.mrb[0].mxu0
      %v2028 = vadd.f32 %v1516, %v2027
      %v2029 = vpop.f32.mrb[0].mxu0
      %2030 = vmatprep.mubr.bf16.mxu0 0
      %2031 = vmatmul.mubr.bf16.gmra.mrb[0].mxu0 %v1485
      %v2032 = vpop.f32.mrb[0].mxu0
      %v2033 = vadd.f32 %v1516, %v2032
      %v2034 = vpop.f32.mrb[0].mxu0
      %v2035 = vpop.f32.mrb[0].mxu0
      %v2036 = vadd.f32 %v1516, %v2035
      %v2037 = vpop.f32.mrb[0].mxu0
      %2038 = vmatprep.mubr.bf16.mxu0 0
      %2039 = vmatmul.mubr.bf16.gmra.mrb[0].mxu0 %v1486
      %v2040 = vpop.f32.mrb[0].mxu0
      %v2041 = vadd.f32 %v1516, %v2040
      %v2042 = vpop.f32.mrb[0].mxu0
      %v2043 = vpop.f32.mrb[0].mxu0
      %v2044 = vadd.f32 %v1516, %v2043
      %v2045 = vpop.f32.mrb[0].mxu0
      %2046 = vmatprep.mubr.bf16.mxu0 0
      %2047 = vmatmul.mubr.bf16.gmra.mrb[0].mxu0 %v1487
      %v2048 = vpop.f32.mrb[0].mxu0
      %v2049 = vadd.f32 %v1516, %v2048
      %v2050 = vpop.f32.mrb[0].mxu0
      %v2051 = vpop.f32.mrb[0].mxu0
      %v2052 = vadd.f32 %v1516, %v2051
      %v2053 = vpop.f32.mrb[0].mxu0
      %2054 = vmatprep.mubr.bf16.mxu0 0
      %2055 = vmatmul.mubr.bf16.gmra.mrb[0].mxu0 %v1488
      %v2056 = vpop.f32.mrb[0].mxu0
      %v2057 = vadd.f32 %v1516, %v2056
      %v2058 = vpop.f32.mrb[0].mxu0
      %v2059 = vpop.f32.mrb[0].mxu0
      %v2060 = vadd.f32 %v1516, %v2059
      %v2061 = vpop.f32.mrb[0].mxu0
      %2062 = vmatprep.mubr.bf16.mxu0 0
      %2063 = vmatmul.mubr.bf16.gmra.mrb[0].mxu0 %v1489
      %v2064 = vpop.f32.mrb[0].mxu0
      %v2065 = vadd.f32 %v1516, %v2064
      %v2066 = vpop.f32.mrb[0].mxu0
      %v2067 = vpop.f32.mrb[0].mxu0
      %v2068 = vadd.f32 %v1516, %v2067
      %v2069 = vpop.f32.mrb[0].mxu0
      %2070 = vmatprep.mubr.bf16.mxu0 0
      %2071 = vmatmul.mubr.bf16.gmra.mrb[0].mxu0 %v1490
      %v2072 = vpop.f32.mrb[0].mxu0
      %v2073 = vadd.f32 %v1516, %v2072
      %v2074 = vpop.f32.mrb[0].mxu0
      %v2075 = vpop.f32.mrb[0].mxu0
      %v2076 = vadd.f32 %v1516, %v2075
      %v2077 = vpop.f32.mrb[0].mxu0
      %2078 = vmatprep.mubr.bf16.mxu0 0
      %2079 = vmatmul.mubr.bf16.gmra.mrb[0].mxu0 %v1491
      %v2080 = vpop.f32.mrb[0].mxu0
      %v2081 = vadd.f32 %v1516, %v2080
      %v2082 = vpop.f32.mrb[0].mxu0
      %v2083 = vpop.f32.mrb[0].mxu0
      %v2084 = vadd.f32 %v1516, %v2083
      %v2085 = vpop.f32.mrb[0].mxu0
      %2086 = vmatprep.mubr.bf16.mxu0 0
      %2087 = vmatmul.mubr.bf16.gmra.mrb[0].mxu0 %v1492
      %v2088 = vpop.f32.mrb[0].mxu0
      %v2089 = vadd.f32 %v1516, %v2088
      %v2090 = vpop.f32.mrb[0].mxu0
      %v2091 = vpop.f32.mrb[0].mxu0
      %v2092 = vadd.f32 %v1516, %v2091
      %v2093 = vpop.f32.mrb[0].mxu0
      %2094 = vmatprep.mubr.bf16.mxu0 0
      %2095 = vmatmul.mubr.bf16.gmra.mrb[0].mxu0 %v1493
      %v2096 = vpop.f32.mrb[0].mxu0
      %v2097 = vadd.f32 %v1516, %v2096
      %v2098 = vpop.f32.mrb[0].mxu0
      %v2099 = vpop.f32.mrb[0].mxu0
      %v2100 = vadd.f32 %v1516, %v2099
      %v2101 = vpop.f32.mrb[0].mxu0
      %2102 = vmatprep.mubr.bf16.mxu0 0
      %2103 = vmatmul.mubr.bf16.gmra.mrb[0].mxu0 %v1494
      %v2104 = vpop.f32.mrb[0].mxu0
      %v2105 = vadd.f32 %v1516, %v2104
      %v2106 = vpop.f32.mrb[0].mxu0
      %v2107 = vpop.f32.mrb[0].mxu0
      %v2108 = vadd.f32 %v1516, %v2107
      %v2109 = vpop.f32.mrb[0].mxu0
      %2110 = vdwg.mxu0
      %v2111 = vmax.f32 %v1601, 0.0
      %v2112 = vmax.f32 %v1604, 0.0
      %v2113 = vmax.f32 %v1609, 0.0
      %v2114 = vmax.f32 %v1612, 0.0
      %v2115 = vmax.f32 %v1617, 0.0
      %v2116 = vmax.f32 %v1620, 0.0
      %v2117 = vmax.f32 %v1625, 0.0
      %v2118 = vmax.f32 %v1628, 0.0
      %v2119 = vmax.f32 %v1633, 0.0
      %v2120 = vmax.f32 %v1636, 0.0
      %v2121 = vmax.f32 %v1641, 0.0
      %v2122 = vmax.f32 %v1644, 0.0
      %v2123 = vmax.f32 %v1649, 0.0
      %v2124 = vmax.f32 %v1652, 0.0
      %v2125 = vmax.f32 %v1657, 0.0
      %v2126 = vmax.f32 %v1660, 0.0
      %v2127 = vmax.f32 %v1665, 0.0
      %v2128 = vmax.f32 %v1668, 0.0
      %v2129 = vmax.f32 %v1673, 0.0
      %v2130 = vmax.f32 %v1676, 0.0
      %v2131 = vmax.f32 %v1681, 0.0
      %v2132 = vmax.f32 %v1684, 0.0
      %v2133 = vmax.f32 %v1689, 0.0
      %v2134 = vmax.f32 %v1692, 0.0
      %v2135 = vmax.f32 %v1697, 0.0
      %v2136 = vmax.f32 %v1700, 0.0
      %v2137 = vmax.f32 %v1705, 0.0
      %v2138 = vmax.f32 %v1708, 0.0
      %v2139 = vmax.f32 %v1713, 0.0
      %v2140 = vmax.f32 %v1716, 0.0
      %v2141 = vmax.f32 %v1721, 0.0
      %v2142 = vmax.f32 %v1724, 0.0
      %v2143 = vmax.f32 %v1729, 0.0
      %v2144 = vmax.f32 %v1732, 0.0
      %v2145 = vmax.f32 %v1737, 0.0
      %v2146 = vmax.f32 %v1740, 0.0
      %v2147 = vmax.f32 %v1745, 0.0
      %v2148 = vmax.f32 %v1748, 0.0
      %v2149 = vmax.f32 %v1753, 0.0
      %v2150 = vmax.f32 %v1756, 0.0
      %v2151 = vmax.f32 %v1761, 0.0
      %v2152 = vmax.f32 %v1764, 0.0
      %v2153 = vmax.f32 %v1769, 0.0
      %v2154 = vmax.f32 %v1772, 0.0
      %v2155 = vmax.f32 %v1777, 0.0
      %v2156 = vmax.f32 %v1780, 0.0
      %v2157 = vmax.f32 %v1785, 0.0
      %v2158 = vmax.f32 %v1788, 0.0
      %v2159 = vmax.f32 %v1793, 0.0
      %v2160 = vmax.f32 %v1796, 0.0
      %v2161 = vmax.f32 %v1801, 0.0
      %v2162 = vmax.f32 %v1804, 0.0
      %v2163 = vmax.f32 %v1809, 0.0
      %v2164 = vmax.f32 %v1812, 0.0
      %v2165 = vmax.f32 %v1817, 0.0
      %v2166 = vmax.f32 %v1820, 0.0
      %v2167 = vmax.f32 %v1825, 0.0
      %v2168 = vmax.f32 %v1828, 0.0
      %v2169 = vmax.f32 %v1833, 0.0
      %v2170 = vmax.f32 %v1836, 0.0
      %v2171 = vmax.f32 %v1841, 0.0
      %v2172 = vmax.f32 %v1844, 0.0
      %v2173 = vmax.f32 %v1849, 0.0
      %v2174 = vmax.f32 %v1852, 0.0
      %v2175 = vmax.f32 %v1857, 0.0
      %v2176 = vmax.f32 %v1860, 0.0
      %v2177 = vmax.f32 %v1865, 0.0
      %v2178 = vmax.f32 %v1868, 0.0
      %v2179 = vmax.f32 %v1873, 0.0
      %v2180 = vmax.f32 %v1876, 0.0
      %v2181 = vmax.f32 %v1881, 0.0
      %v2182 = vmax.f32 %v1884, 0.0
      %v2183 = vmax.f32 %v1889, 0.0
      %v2184 = vmax.f32 %v1892, 0.0
      %v2185 = vmax.f32 %v1897, 0.0
      %v2186 = vmax.f32 %v1900, 0.0
      %v2187 = vmax.f32 %v1905, 0.0
      %v2188 = vmax.f32 %v1908, 0.0
      %v2189 = vmax.f32 %v1913, 0.0
      %v2190 = vmax.f32 %v1916, 0.0
      %v2191 = vmax.f32 %v1921, 0.0
      %v2192 = vmax.f32 %v1924, 0.0
      %v2193 = vmax.f32 %v1929, 0.0
      %v2194 = vmax.f32 %v1932, 0.0
      %v2195 = vmax.f32 %v1937, 0.0
      %v2196 = vmax.f32 %v1940, 0.0
      %v2197 = vmax.f32 %v1945, 0.0
      %v2198 = vmax.f32 %v1948, 0.0
      %v2199 = vmax.f32 %v1953, 0.0
      %v2200 = vmax.f32 %v1956, 0.0
      %v2201 = vmax.f32 %v1961, 0.0
      %v2202 = vmax.f32 %v1964, 0.0
      %v2203 = vmax.f32 %v1969, 0.0
      %v2204 = vmax.f32 %v1972, 0.0
      %v2205 = vmax.f32 %v1977, 0.0
      %v2206 = vmax.f32 %v1980, 0.0
      %v2207 = vmax.f32 %v1985, 0.0
      %v2208 = vmax.f32 %v1988, 0.0
      %v2209 = vmax.f32 %v1993, 0.0
      %v2210 = vmax.f32 %v1996, 0.0
      %v2211 = vmax.f32 %v2001, 0.0
      %v2212 = vmax.f32 %v2004, 0.0
      %v2213 = vmax.f32 %v2009, 0.0
      %v2214 = vmax.f32 %v2012, 0.0
      %v2215 = vmax.f32 %v2017, 0.0
      %v2216 = vmax.f32 %v2020, 0.0
      %v2217 = vmax.f32 %v2025, 0.0
      %v2218 = vmax.f32 %v2028, 0.0
      %v2219 = vmax.f32 %v2033, 0.0
      %v2220 = vmax.f32 %v2036, 0.0
      %v2221 = vmax.f32 %v2041, 0.0
      %v2222 = vmax.f32 %v2044, 0.0
      %v2223 = vmax.f32 %v2049, 0.0
      %v2224 = vmax.f32 %v2052, 0.0
      %v2225 = vmax.f32 %v2057, 0.0
      %v2226 = vmax.f32 %v2060, 0.0
      %v2227 = vmax.f32 %v2065, 0.0
      %v2228 = vmax.f32 %v2068, 0.0
      %v2229 = vmax.f32 %v2073, 0.0
      %v2230 = vmax.f32 %v2076, 0.0
      %v2231 = vmax.f32 %v2081, 0.0
      %v2232 = vmax.f32 %v2084, 0.0
      %v2233 = vmax.f32 %v2089, 0.0
      %v2234 = vmax.f32 %v2092, 0.0
      %v2235 = vmax.f32 %v2097, 0.0
      %v2236 = vmax.f32 %v2100, 0.0
      %v2237 = vmax.f32 %v2105, 0.0
      %v2238 = vmax.f32 %v2108, 0.0
      %v2239 = vpack.c.bf16 %v2112, %v2111
      %v2240 = vpack.c.bf16 %v2114, %v2113
      %v2241 = vpack.c.bf16 %v2116, %v2115
      %v2242 = vpack.c.bf16 %v2118, %v2117
      %v2243 = vpack.c.bf16 %v2120, %v2119
      %v2244 = vpack.c.bf16 %v2122, %v2121
      %v2245 = vpack.c.bf16 %v2124, %v2123
      %v2246 = vpack.c.bf16 %v2126, %v2125
      %v2247 = vpack.c.bf16 %v2128, %v2127
      %v2248 = vpack.c.bf16 %v2130, %v2129
      %v2249 = vpack.c.bf16 %v2132, %v2131
      %v2250 = vpack.c.bf16 %v2134, %v2133
      %v2251 = vpack.c.bf16 %v2136, %v2135
      %v2252 = vpack.c.bf16 %v2138, %v2137
      %v2253 = vpack.c.bf16 %v2140, %v2139
      %v2254 = vpack.c.bf16 %v2142, %v2141
      %v2255 = vpack.c.bf16 %v2144, %v2143
      %v2256 = vpack.c.bf16 %v2146, %v2145
      %v2257 = vpack.c.bf16 %v2148, %v2147
      %v2258 = vpack.c.bf16 %v2150, %v2149
      %v2259 = vpack.c.bf16 %v2152, %v2151
      %v2260 = vpack.c.bf16 %v2154, %v2153
      %v2261 = vpack.c.bf16 %v2156, %v2155
      %v2262 = vpack.c.bf16 %v2158, %v2157
      %v2263 = vpack.c.bf16 %v2160, %v2159
      %v2264 = vpack.c.bf16 %v2162, %v2161
      %v2265 = vpack.c.bf16 %v2164, %v2163
      %v2266 = vpack.c.bf16 %v2166, %v2165
      %v2267 = vpack.c.bf16 %v2168, %v2167
      %v2268 = vpack.c.bf16 %v2170, %v2169
      %v2269 = vpack.c.bf16 %v2172, %v2171
      %v2270 = vpack.c.bf16 %v2174, %v2173
      %v2271 = vpack.c.bf16 %v2176, %v2175
      %v2272 = vpack.c.bf16 %v2178, %v2177
      %v2273 = vpack.c.bf16 %v2180, %v2179
      %v2274 = vpack.c.bf16 %v2182, %v2181
      %v2275 = vpack.c.bf16 %v2184, %v2183
      %v2276 = vpack.c.bf16 %v2186, %v2185
      %v2277 = vpack.c.bf16 %v2188, %v2187
      %v2278 = vpack.c.bf16 %v2190, %v2189
      %v2279 = vpack.c.bf16 %v2192, %v2191
      %v2280 = vpack.c.bf16 %v2194, %v2193
      %v2281 = vpack.c.bf16 %v2196, %v2195
      %v2282 = vpack.c.bf16 %v2198, %v2197
      %v2283 = vpack.c.bf16 %v2200, %v2199
      %v2284 = vpack.c.bf16 %v2202, %v2201
      %v2285 = vpack.c.bf16 %v2204, %v2203
      %v2286 = vpack.c.bf16 %v2206, %v2205
      %v2287 = vpack.c.bf16 %v2208, %v2207
      %v2288 = vpack.c.bf16 %v2210, %v2209
      %v2289 = vpack.c.bf16 %v2212, %v2211
      %v2290 = vpack.c.bf16 %v2214, %v2213
      %v2291 = vpack.c.bf16 %v2216, %v2215
      %v2292 = vpack.c.bf16 %v2218, %v2217
      %v2293 = vpack.c.bf16 %v2220, %v2219
      %v2294 = vpack.c.bf16 %v2222, %v2221
      %v2295 = vpack.c.bf16 %v2224, %v2223
      %v2296 = vpack.c.bf16 %v2226, %v2225
      %v2297 = vpack.c.bf16 %v2228, %v2227
      %v2298 = vpack.c.bf16 %v2230, %v2229
      %v2299 = vpack.c.bf16 %v2232, %v2231
      %v2300 = vpack.c.bf16 %v2234, %v2233
      %v2301 = vpack.c.bf16 %v2236, %v2235
      %v2302 = vpack.c.bf16 %v2238, %v2237
      %v2303 = vld [vmem:[%s5] sm:$0xf]
      %v2304 = vld [vmem:[%s5 + $0x4] sm:$0xf]
      %v2305 = vld [vmem:[%s5 + $0x8] sm:$0xf]
      %v2306 = vld [vmem:[%s5 + $0xc] sm:$0xf]
      %v2307 = vld [vmem:[%s5 + $0x10] sm:$0xf]
      %v2308 = vld [vmem:[%s5 + $0x14] sm:$0xf]
      %v2309 = vld [vmem:[%s5 + $0x18] sm:$0xf]
      %v2310 = vld [vmem:[%s5 + $0x1c] sm:$0xf]
      %v2311 = vld [vmem:[%s5 + $0x20] sm:$0xf]
      %v2312 = vld [vmem:[%s5 + $0x24] sm:$0xf]
      %v2313 = vld [vmem:[%s5 + $0x28] sm:$0xf]
      %v2314 = vld [vmem:[%s5 + $0x2c] sm:$0xf]
      %v2315 = vld [vmem:[%s5 + $0x30] sm:$0xf]
      %v2316 = vld [vmem:[%s5 + $0x34] sm:$0xf]
      %v2317 = vld [vmem:[%s5 + $0x38] sm:$0xf]
      %v2318 = vld [vmem:[%s5 + $0x3c] sm:$0xf]
      %v2319 = vld [vmem:[%s6] sm:$0x1]
      %v2321 = vlaneseq
      %v2322 = vshrl.u32 %v2321, 7
      %v2323 = vsub.s32 0, %v2322
      %v2324 = vrot.slane %v2319, %v2323
      %v2342 = vunpack.c.l.b16 %v2303
      %v2343 = vunpack.c.l.b16 %v2304
      %v2344 = vunpack.c.l.b16 %v2305
      %v2345 = vunpack.c.l.b16 %v2306
      %v2346 = vunpack.c.l.b16 %v2307
      %v2347 = vunpack.c.l.b16 %v2308
      %v2348 = vunpack.c.l.b16 %v2309
      %v2349 = vunpack.c.l.b16 %v2310
      %v2350 = vunpack.c.l.b16 %v2311
      %v2351 = vunpack.c.l.b16 %v2312
      %v2352 = vunpack.c.l.b16 %v2313
      %v2353 = vunpack.c.l.b16 %v2314
      %v2354 = vunpack.c.l.b16 %v2315
      %v2355 = vunpack.c.l.b16 %v2316
      %v2356 = vunpack.c.l.b16 %v2317
      %v2357 = vunpack.c.l.b16 %v2318
      %v2358 = vpack.c.b16 %v2343, %v2342
      %v2359 = vpack.c.b16 %v2345, %v2344
      %v2360 = vpack.c.b16 %v2347, %v2346
      %v2361 = vpack.c.b16 %v2349, %v2348
      %v2362 = vpack.c.b16 %v2351, %v2350
      %v2363 = vpack.c.b16 %v2353, %v2352
      %v2364 = vpack.c.b16 %v2355, %v2354
      %v2365 = vpack.c.b16 %v2357, %v2356
      %2374 = vmatprep.subr.bf16.mxu0 0
      %2375 = vmatpush1.bf16.msra.mxu0 %v2358
      %2376 = vmatprep.subr.bf16.mxu0 0
      %2377 = vmatpush1.bf16.msra.mxu0 %v2359
      %2378 = vmatprep.subr.bf16.mxu0 0
      %2379 = vmatpush1.bf16.msra.mxu0 %v2360
      %2380 = vmatprep.subr.bf16.mxu0 0
      %2381 = vmatpush1.bf16.msra.mxu0 %v2361
      %2382 = vmatprep.subr.bf16.mxu0 0
      %2383 = vmatpush1.bf16.msra.mxu0 %v2362
      %2384 = vmatprep.subr.bf16.mxu0 0
      %2385 = vmatpush1.bf16.msra.mxu0 %v2363
      %2386 = vmatprep.subr.bf16.mxu0 0
      %2387 = vmatpush1.bf16.msra.mxu0 %v2364
      %2388 = vmatprep.subr.bf16.mxu0 0
      %2389 = vmatpush1.bf16.msra.mxu0 %v2365
      %2390 = vmatprep.subr.bf16.mxu0 0
      %2391 = vmatpush1.bf16.msra.mxu0 0
      %2392 = vmatprep.subr.bf16.mxu0 0
      %2393 = vmatpush1.bf16.msra.mxu0 0
      %2394 = vmatprep.subr.bf16.mxu0 0
      %2395 = vmatpush1.bf16.msra.mxu0 0
      %2396 = vmatprep.subr.bf16.mxu0 0
      %2397 = vmatpush1.bf16.msra.mxu0 0
      %2398 = vmatprep.subr.bf16.mxu0 0
      %2399 = vmatpush1.bf16.msra.mxu0 0
      %2400 = vmatprep.subr.bf16.mxu0 0
      %2401 = vmatpush1.bf16.msra.mxu0 0
      %2402 = vmatprep.subr.bf16.mxu0 0
      %2403 = vmatpush1.bf16.msra.mxu0 0
      %2404 = vmatprep.subr.bf16.mxu0 0
      %2405 = vmatpush1.bf16.msra.mxu0 0
      %2406 = vmatprep.mubr.bf16.mxu0 0
      %2407 = vmatmul.mubr.bf16.gmra.mrb[0].mxu0 %v2239
      %v2408 = vpop.f32.mrb[0].mxu0
      %v2409 = vadd.f32 %v2324, %v2408
      %v2410 = vpop.f32.mrb[0].mxu0
      %v2411 = vpop.f32.mrb[0].mxu0
      %v2412 = vadd.f32 %v2324, %v2411
      %v2413 = vpop.f32.mrb[0].mxu0
      %2414 = vmatprep.mubr.bf16.mxu0 0
      %2415 = vmatmul.mubr.bf16.gmra.mrb[0].mxu0 %v2240
      %v2416 = vpop.f32.mrb[0].mxu0
      %v2417 = vadd.f32 %v2324, %v2416
      %v2418 = vpop.f32.mrb[0].mxu0
      %v2419 = vpop.f32.mrb[0].mxu0
      %v2420 = vadd.f32 %v2324, %v2419
      %v2421 = vpop.f32.mrb[0].mxu0
      %2422 = vmatprep.mubr.bf16.mxu0 0
      %2423 = vmatmul.mubr.bf16.gmra.mrb[0].mxu0 %v2241
      %v2424 = vpop.f32.mrb[0].mxu0
      %v2425 = vadd.f32 %v2324, %v2424
      %v2426 = vpop.f32.mrb[0].mxu0
      %v2427 = vpop.f32.mrb[0].mxu0
      %v2428 = vadd.f32 %v2324, %v2427
      %v2429 = vpop.f32.mrb[0].mxu0
      %2430 = vmatprep.mubr.bf16.mxu0 0
      %2431 = vmatmul.mubr.bf16.gmra.mrb[0].mxu0 %v2242
      %v2432 = vpop.f32.mrb[0].mxu0
      %v2433 = vadd.f32 %v2324, %v2432
      %v2434 = vpop.f32.mrb[0].mxu0
      %v2435 = vpop.f32.mrb[0].mxu0
      %v2436 = vadd.f32 %v2324, %v2435
      %v2437 = vpop.f32.mrb[0].mxu0
      %2438 = vmatprep.mubr.bf16.mxu0 0
      %2439 = vmatmul.mubr.bf16.gmra.mrb[0].mxu0 %v2243
      %v2440 = vpop.f32.mrb[0].mxu0
      %v2441 = vadd.f32 %v2324, %v2440
      %v2442 = vpop.f32.mrb[0].mxu0
      %v2443 = vpop.f32.mrb[0].mxu0
      %v2444 = vadd.f32 %v2324, %v2443
      %v2445 = vpop.f32.mrb[0].mxu0
      %2446 = vmatprep.mubr.bf16.mxu0 0
      %2447 = vmatmul.mubr.bf16.gmra.mrb[0].mxu0 %v2244
      %v2448 = vpop.f32.mrb[0].mxu0
      %v2449 = vadd.f32 %v2324, %v2448
      %v2450 = vpop.f32.mrb[0].mxu0
      %v2451 = vpop.f32.mrb[0].mxu0
      %v2452 = vadd.f32 %v2324, %v2451
      %v2453 = vpop.f32.mrb[0].mxu0
      %2454 = vmatprep.mubr.bf16.mxu0 0
      %2455 = vmatmul.mubr.bf16.gmra.mrb[0].mxu0 %v2245
      %v2456 = vpop.f32.mrb[0].mxu0
      %v2457 = vadd.f32 %v2324, %v2456
      %v2458 = vpop.f32.mrb[0].mxu0
      %v2459 = vpop.f32.mrb[0].mxu0
      %v2460 = vadd.f32 %v2324, %v2459
      %v2461 = vpop.f32.mrb[0].mxu0
      %2462 = vmatprep.mubr.bf16.mxu0 0
      %2463 = vmatmul.mubr.bf16.gmra.mrb[0].mxu0 %v2246
      %v2464 = vpop.f32.mrb[0].mxu0
      %v2465 = vadd.f32 %v2324, %v2464
      %v2466 = vpop.f32.mrb[0].mxu0
      %v2467 = vpop.f32.mrb[0].mxu0
      %v2468 = vadd.f32 %v2324, %v2467
      %v2469 = vpop.f32.mrb[0].mxu0
      %2470 = vmatprep.mubr.bf16.mxu0 0
      %2471 = vmatmul.mubr.bf16.gmra.mrb[0].mxu0 %v2247
      %v2472 = vpop.f32.mrb[0].mxu0
      %v2473 = vadd.f32 %v2324, %v2472
      %v2474 = vpop.f32.mrb[0].mxu0
      %v2475 = vpop.f32.mrb[0].mxu0
      %v2476 = vadd.f32 %v2324, %v2475
      %v2477 = vpop.f32.mrb[0].mxu0
      %2478 = vmatprep.mubr.bf16.mxu0 0
      %2479 = vmatmul.mubr.bf16.gmra.mrb[0].mxu0 %v2248
      %v2480 = vpop.f32.mrb[0].mxu0
      %v2481 = vadd.f32 %v2324, %v2480
      %v2482 = vpop.f32.mrb[0].mxu0
      %v2483 = vpop.f32.mrb[0].mxu0
      %v2484 = vadd.f32 %v2324, %v2483
      %v2485 = vpop.f32.mrb[0].mxu0
      %2486 = vmatprep.mubr.bf16.mxu0 0
      %2487 = vmatmul.mubr.bf16.gmra.mrb[0].mxu0 %v2249
      %v2488 = vpop.f32.mrb[0].mxu0
      %v2489 = vadd.f32 %v2324, %v2488
      %v2490 = vpop.f32.mrb[0].mxu0
      %v2491 = vpop.f32.mrb[0].mxu0
      %v2492 = vadd.f32 %v2324, %v2491
      %v2493 = vpop.f32.mrb[0].mxu0
      %2494 = vmatprep.mubr.bf16.mxu0 0
      %2495 = vmatmul.mubr.bf16.gmra.mrb[0].mxu0 %v2250
      %v2496 = vpop.f32.mrb[0].mxu0
      %v2497 = vadd.f32 %v2324, %v2496
      %v2498 = vpop.f32.mrb[0].mxu0
      %v2499 = vpop.f32.mrb[0].mxu0
      %v2500 = vadd.f32 %v2324, %v2499
      %v2501 = vpop.f32.mrb[0].mxu0
      %2502 = vmatprep.mubr.bf16.mxu0 0
      %2503 = vmatmul.mubr.bf16.gmra.mrb[0].mxu0 %v2251
      %v2504 = vpop.f32.mrb[0].mxu0
      %v2505 = vadd.f32 %v2324, %v2504
      %v2506 = vpop.f32.mrb[0].mxu0
      %v2507 = vpop.f32.mrb[0].mxu0
      %v2508 = vadd.f32 %v2324, %v2507
      %v2509 = vpop.f32.mrb[0].mxu0
      %2510 = vmatprep.mubr.bf16.mxu0 0
      %2511 = vmatmul.mubr.bf16.gmra.mrb[0].mxu0 %v2252
      %v2512 = vpop.f32.mrb[0].mxu0
      %v2513 = vadd.f32 %v2324, %v2512
      %v2514 = vpop.f32.mrb[0].mxu0
      %v2515 = vpop.f32.mrb[0].mxu0
      %v2516 = vadd.f32 %v2324, %v2515
      %v2517 = vpop.f32.mrb[0].mxu0
      %2518 = vmatprep.mubr.bf16.mxu0 0
      %2519 = vmatmul.mubr.bf16.gmra.mrb[0].mxu0 %v2253
      %v2520 = vpop.f32.mrb[0].mxu0
      %v2521 = vadd.f32 %v2324, %v2520
      %v2522 = vpop.f32.mrb[0].mxu0
      %v2523 = vpop.f32.mrb[0].mxu0
      %v2524 = vadd.f32 %v2324, %v2523
      %v2525 = vpop.f32.mrb[0].mxu0
      %2526 = vmatprep.mubr.bf16.mxu0 0
      %2527 = vmatmul.mubr.bf16.gmra.mrb[0].mxu0 %v2254
      %v2528 = vpop.f32.mrb[0].mxu0
      %v2529 = vadd.f32 %v2324, %v2528
      %v2530 = vpop.f32.mrb[0].mxu0
      %v2531 = vpop.f32.mrb[0].mxu0
      %v2532 = vadd.f32 %v2324, %v2531
      %v2533 = vpop.f32.mrb[0].mxu0
      %2534 = vmatprep.mubr.bf16.mxu0 0
      %2535 = vmatmul.mubr.bf16.gmra.mrb[0].mxu0 %v2255
      %v2536 = vpop.f32.mrb[0].mxu0
      %v2537 = vadd.f32 %v2324, %v2536
      %v2538 = vpop.f32.mrb[0].mxu0
      %v2539 = vpop.f32.mrb[0].mxu0
      %v2540 = vadd.f32 %v2324, %v2539
      %v2541 = vpop.f32.mrb[0].mxu0
      %2542 = vmatprep.mubr.bf16.mxu0 0
      %2543 = vmatmul.mubr.bf16.gmra.mrb[0].mxu0 %v2256
      %v2544 = vpop.f32.mrb[0].mxu0
      %v2545 = vadd.f32 %v2324, %v2544
      %v2546 = vpop.f32.mrb[0].mxu0
      %v2547 = vpop.f32.mrb[0].mxu0
      %v2548 = vadd.f32 %v2324, %v2547
      %v2549 = vpop.f32.mrb[0].mxu0
      %2550 = vmatprep.mubr.bf16.mxu0 0
      %2551 = vmatmul.mubr.bf16.gmra.mrb[0].mxu0 %v2257
      %v2552 = vpop.f32.mrb[0].mxu0
      %v2553 = vadd.f32 %v2324, %v2552
      %v2554 = vpop.f32.mrb[0].mxu0
      %v2555 = vpop.f32.mrb[0].mxu0
      %v2556 = vadd.f32 %v2324, %v2555
      %v2557 = vpop.f32.mrb[0].mxu0
      %2558 = vmatprep.mubr.bf16.mxu0 0
      %2559 = vmatmul.mubr.bf16.gmra.mrb[0].mxu0 %v2258
      %v2560 = vpop.f32.mrb[0].mxu0
      %v2561 = vadd.f32 %v2324, %v2560
      %v2562 = vpop.f32.mrb[0].mxu0
      %v2563 = vpop.f32.mrb[0].mxu0
      %v2564 = vadd.f32 %v2324, %v2563
      %v2565 = vpop.f32.mrb[0].mxu0
      %2566 = vmatprep.mubr.bf16.mxu0 0
      %2567 = vmatmul.mubr.bf16.gmra.mrb[0].mxu0 %v2259
      %v2568 = vpop.f32.mrb[0].mxu0
      %v2569 = vadd.f32 %v2324, %v2568
      %v2570 = vpop.f32.mrb[0].mxu0
      %v2571 = vpop.f32.mrb[0].mxu0
      %v2572 = vadd.f32 %v2324, %v2571
      %v2573 = vpop.f32.mrb[0].mxu0
      %2574 = vmatprep.mubr.bf16.mxu0 0
      %2575 = vmatmul.mubr.bf16.gmra.mrb[0].mxu0 %v2260
      %v2576 = vpop.f32.mrb[0].mxu0
      %v2577 = vadd.f32 %v2324, %v2576
      %v2578 = vpop.f32.mrb[0].mxu0
      %v2579 = vpop.f32.mrb[0].mxu0
      %v2580 = vadd.f32 %v2324, %v2579
      %v2581 = vpop.f32.mrb[0].mxu0
      %2582 = vmatprep.mubr.bf16.mxu0 0
      %2583 = vmatmul.mubr.bf16.gmra.mrb[0].mxu0 %v2261
      %v2584 = vpop.f32.mrb[0].mxu0
      %v2585 = vadd.f32 %v2324, %v2584
      %v2586 = vpop.f32.mrb[0].mxu0
      %v2587 = vpop.f32.mrb[0].mxu0
      %v2588 = vadd.f32 %v2324, %v2587
      %v2589 = vpop.f32.mrb[0].mxu0
      %2590 = vmatprep.mubr.bf16.mxu0 0
      %2591 = vmatmul.mubr.bf16.gmra.mrb[0].mxu0 %v2262
      %v2592 = vpop.f32.mrb[0].mxu0
      %v2593 = vadd.f32 %v2324, %v2592
      %v2594 = vpop.f32.mrb[0].mxu0
      %v2595 = vpop.f32.mrb[0].mxu0
      %v2596 = vadd.f32 %v2324, %v2595
      %v2597 = vpop.f32.mrb[0].mxu0
      %2598 = vmatprep.mubr.bf16.mxu0 0
      %2599 = vmatmul.mubr.bf16.gmra.mrb[0].mxu0 %v2263
      %v2600 = vpop.f32.mrb[0].mxu0
      %v2601 = vadd.f32 %v2324, %v2600
      %v2602 = vpop.f32.mrb[0].mxu0
      %v2603 = vpop.f32.mrb[0].mxu0
      %v2604 = vadd.f32 %v2324, %v2603
      %v2605 = vpop.f32.mrb[0].mxu0
      %2606 = vmatprep.mubr.bf16.mxu0 0
      %2607 = vmatmul.mubr.bf16.gmra.mrb[0].mxu0 %v2264
      %v2608 = vpop.f32.mrb[0].mxu0
      %v2609 = vadd.f32 %v2324, %v2608
      %v2610 = vpop.f32.mrb[0].mxu0
      %v2611 = vpop.f32.mrb[0].mxu0
      %v2612 = vadd.f32 %v2324, %v2611
      %v2613 = vpop.f32.mrb[0].mxu0
      %2614 = vmatprep.mubr.bf16.mxu0 0
      %2615 = vmatmul.mubr.bf16.gmra.mrb[0].mxu0 %v2265
      %v2616 = vpop.f32.mrb[0].mxu0
      %v2617 = vadd.f32 %v2324, %v2616
      %v2618 = vpop.f32.mrb[0].mxu0
      %v2619 = vpop.f32.mrb[0].mxu0
      %v2620 = vadd.f32 %v2324, %v2619
      %v2621 = vpop.f32.mrb[0].mxu0
      %2622 = vmatprep.mubr.bf16.mxu0 0
      %2623 = vmatmul.mubr.bf16.gmra.mrb[0].mxu0 %v2266
      %v2624 = vpop.f32.mrb[0].mxu0
      %v2625 = vadd.f32 %v2324, %v2624
      %v2626 = vpop.f32.mrb[0].mxu0
      %v2627 = vpop.f32.mrb[0].mxu0
      %v2628 = vadd.f32 %v2324, %v2627
      %v2629 = vpop.f32.mrb[0].mxu0
      %2630 = vmatprep.mubr.bf16.mxu0 0
      %2631 = vmatmul.mubr.bf16.gmra.mrb[0].mxu0 %v2267
      %v2632 = vpop.f32.mrb[0].mxu0
      %v2633 = vadd.f32 %v2324, %v2632
      %v2634 = vpop.f32.mrb[0].mxu0
      %v2635 = vpop.f32.mrb[0].mxu0
      %v2636 = vadd.f32 %v2324, %v2635
      %v2637 = vpop.f32.mrb[0].mxu0
      %2638 = vmatprep.mubr.bf16.mxu0 0
      %2639 = vmatmul.mubr.bf16.gmra.mrb[0].mxu0 %v2268
      %v2640 = vpop.f32.mrb[0].mxu0
      %v2641 = vadd.f32 %v2324, %v2640
      %v2642 = vpop.f32.mrb[0].mxu0
      %v2643 = vpop.f32.mrb[0].mxu0
      %v2644 = vadd.f32 %v2324, %v2643
      %v2645 = vpop.f32.mrb[0].mxu0
      %2646 = vmatprep.mubr.bf16.mxu0 0
      %2647 = vmatmul.mubr.bf16.gmra.mrb[0].mxu0 %v2269
      %v2648 = vpop.f32.mrb[0].mxu0
      %v2649 = vadd.f32 %v2324, %v2648
      %v2650 = vpop.f32.mrb[0].mxu0
      %v2651 = vpop.f32.mrb[0].mxu0
      %v2652 = vadd.f32 %v2324, %v2651
      %v2653 = vpop.f32.mrb[0].mxu0
      %2654 = vmatprep.mubr.bf16.mxu0 0
      %2655 = vmatmul.mubr.bf16.gmra.mrb[0].mxu0 %v2270
      %v2656 = vpop.f32.mrb[0].mxu0
      %v2657 = vadd.f32 %v2324, %v2656
      %v2658 = vpop.f32.mrb[0].mxu0
      %v2659 = vpop.f32.mrb[0].mxu0
      %v2660 = vadd.f32 %v2324, %v2659
      %v2661 = vpop.f32.mrb[0].mxu0
      %2662 = vmatprep.mubr.bf16.mxu0 0
      %2663 = vmatmul.mubr.bf16.gmra.mrb[0].mxu0 %v2271
      %v2664 = vpop.f32.mrb[0].mxu0
      %v2665 = vadd.f32 %v2324, %v2664
      %v2666 = vpop.f32.mrb[0].mxu0
      %v2667 = vpop.f32.mrb[0].mxu0
      %v2668 = vadd.f32 %v2324, %v2667
      %v2669 = vpop.f32.mrb[0].mxu0
      %2670 = vmatprep.mubr.bf16.mxu0 0
      %2671 = vmatmul.mubr.bf16.gmra.mrb[0].mxu0 %v2272
      %v2672 = vpop.f32.mrb[0].mxu0
      %v2673 = vadd.f32 %v2324, %v2672
      %v2674 = vpop.f32.mrb[0].mxu0
      %v2675 = vpop.f32.mrb[0].mxu0
      %v2676 = vadd.f32 %v2324, %v2675
      %v2677 = vpop.f32.mrb[0].mxu0
      %2678 = vmatprep.mubr.bf16.mxu0 0
      %2679 = vmatmul.mubr.bf16.gmra.mrb[0].mxu0 %v2273
      %v2680 = vpop.f32.mrb[0].mxu0
      %v2681 = vadd.f32 %v2324, %v2680
      %v2682 = vpop.f32.mrb[0].mxu0
      %v2683 = vpop.f32.mrb[0].mxu0
      %v2684 = vadd.f32 %v2324, %v2683
      %v2685 = vpop.f32.mrb[0].mxu0
      %2686 = vmatprep.mubr.bf16.mxu0 0
      %2687 = vmatmul.mubr.bf16.gmra.mrb[0].mxu0 %v2274
      %v2688 = vpop.f32.mrb[0].mxu0
      %v2689 = vadd.f32 %v2324, %v2688
      %v2690 = vpop.f32.mrb[0].mxu0
      %v2691 = vpop.f32.mrb[0].mxu0
      %v2692 = vadd.f32 %v2324, %v2691
      %v2693 = vpop.f32.mrb[0].mxu0
      %2694 = vmatprep.mubr.bf16.mxu0 0
      %2695 = vmatmul.mubr.bf16.gmra.mrb[0].mxu0 %v2275
      %v2696 = vpop.f32.mrb[0].mxu0
      %v2697 = vadd.f32 %v2324, %v2696
      %v2698 = vpop.f32.mrb[0].mxu0
      %v2699 = vpop.f32.mrb[0].mxu0
      %v2700 = vadd.f32 %v2324, %v2699
      %v2701 = vpop.f32.mrb[0].mxu0
      %2702 = vmatprep.mubr.bf16.mxu0 0
      %2703 = vmatmul.mubr.bf16.gmra.mrb[0].mxu0 %v2276
      %v2704 = vpop.f32.mrb[0].mxu0
      %v2705 = vadd.f32 %v2324, %v2704
      %v2706 = vpop.f32.mrb[0].mxu0
      %v2707 = vpop.f32.mrb[0].mxu0
      %v2708 = vadd.f32 %v2324, %v2707
      %v2709 = vpop.f32.mrb[0].mxu0
      %2710 = vmatprep.mubr.bf16.mxu0 0
      %2711 = vmatmul.mubr.bf16.gmra.mrb[0].mxu0 %v2277
      %v2712 = vpop.f32.mrb[0].mxu0
      %v2713 = vadd.f32 %v2324, %v2712
      %v2714 = vpop.f32.mrb[0].mxu0
      %v2715 = vpop.f32.mrb[0].mxu0
      %v2716 = vadd.f32 %v2324, %v2715
      %v2717 = vpop.f32.mrb[0].mxu0
      %2718 = vmatprep.mubr.bf16.mxu0 0
      %2719 = vmatmul.mubr.bf16.gmra.mrb[0].mxu0 %v2278
      %v2720 = vpop.f32.mrb[0].mxu0
      %v2721 = vadd.f32 %v2324, %v2720
      %v2722 = vpop.f32.mrb[0].mxu0
      %v2723 = vpop.f32.mrb[0].mxu0
      %v2724 = vadd.f32 %v2324, %v2723
      %v2725 = vpop.f32.mrb[0].mxu0
      %2726 = vmatprep.mubr.bf16.mxu0 0
      %2727 = vmatmul.mubr.bf16.gmra.mrb[0].mxu0 %v2279
      %v2728 = vpop.f32.mrb[0].mxu0
      %v2729 = vadd.f32 %v2324, %v2728
      %v2730 = vpop.f32.mrb[0].mxu0
      %v2731 = vpop.f32.mrb[0].mxu0
      %v2732 = vadd.f32 %v2324, %v2731
      %v2733 = vpop.f32.mrb[0].mxu0
      %2734 = vmatprep.mubr.bf16.mxu0 0
      %2735 = vmatmul.mubr.bf16.gmra.mrb[0].mxu0 %v2280
      %v2736 = vpop.f32.mrb[0].mxu0
      %v2737 = vadd.f32 %v2324, %v2736
      %v2738 = vpop.f32.mrb[0].mxu0
      %v2739 = vpop.f32.mrb[0].mxu0
      %v2740 = vadd.f32 %v2324, %v2739
      %v2741 = vpop.f32.mrb[0].mxu0
      %2742 = vmatprep.mubr.bf16.mxu0 0
      %2743 = vmatmul.mubr.bf16.gmra.mrb[0].mxu0 %v2281
      %v2744 = vpop.f32.mrb[0].mxu0
      %v2745 = vadd.f32 %v2324, %v2744
      %v2746 = vpop.f32.mrb[0].mxu0
      %v2747 = vpop.f32.mrb[0].mxu0
      %v2748 = vadd.f32 %v2324, %v2747
      %v2749 = vpop.f32.mrb[0].mxu0
      %2750 = vmatprep.mubr.bf16.mxu0 0
      %2751 = vmatmul.mubr.bf16.gmra.mrb[0].mxu0 %v2282
      %v2752 = vpop.f32.mrb[0].mxu0
      %v2753 = vadd.f32 %v2324, %v2752
      %v2754 = vpop.f32.mrb[0].mxu0
      %v2755 = vpop.f32.mrb[0].mxu0
      %v2756 = vadd.f32 %v2324, %v2755
      %v2757 = vpop.f32.mrb[0].mxu0
      %2758 = vmatprep.mubr.bf16.mxu0 0
      %2759 = vmatmul.mubr.bf16.gmra.mrb[0].mxu0 %v2283
      %v2760 = vpop.f32.mrb[0].mxu0
      %v2761 = vadd.f32 %v2324, %v2760
      %v2762 = vpop.f32.mrb[0].mxu0
      %v2763 = vpop.f32.mrb[0].mxu0
      %v2764 = vadd.f32 %v2324, %v2763
      %v2765 = vpop.f32.mrb[0].mxu0
      %2766 = vmatprep.mubr.bf16.mxu0 0
      %2767 = vmatmul.mubr.bf16.gmra.mrb[0].mxu0 %v2284
      %v2768 = vpop.f32.mrb[0].mxu0
      %v2769 = vadd.f32 %v2324, %v2768
      %v2770 = vpop.f32.mrb[0].mxu0
      %v2771 = vpop.f32.mrb[0].mxu0
      %v2772 = vadd.f32 %v2324, %v2771
      %v2773 = vpop.f32.mrb[0].mxu0
      %2774 = vmatprep.mubr.bf16.mxu0 0
      %2775 = vmatmul.mubr.bf16.gmra.mrb[0].mxu0 %v2285
      %v2776 = vpop.f32.mrb[0].mxu0
      %v2777 = vadd.f32 %v2324, %v2776
      %v2778 = vpop.f32.mrb[0].mxu0
      %v2779 = vpop.f32.mrb[0].mxu0
      %v2780 = vadd.f32 %v2324, %v2779
      %v2781 = vpop.f32.mrb[0].mxu0
      %2782 = vmatprep.mubr.bf16.mxu0 0
      %2783 = vmatmul.mubr.bf16.gmra.mrb[0].mxu0 %v2286
      %v2784 = vpop.f32.mrb[0].mxu0
      %v2785 = vadd.f32 %v2324, %v2784
      %v2786 = vpop.f32.mrb[0].mxu0
      %v2787 = vpop.f32.mrb[0].mxu0
      %v2788 = vadd.f32 %v2324, %v2787
      %v2789 = vpop.f32.mrb[0].mxu0
      %2790 = vmatprep.mubr.bf16.mxu0 0
      %2791 = vmatmul.mubr.bf16.gmra.mrb[0].mxu0 %v2287
      %v2792 = vpop.f32.mrb[0].mxu0
      %v2793 = vadd.f32 %v2324, %v2792
      %v2794 = vpop.f32.mrb[0].mxu0
      %v2795 = vpop.f32.mrb[0].mxu0
      %v2796 = vadd.f32 %v2324, %v2795
      %v2797 = vpop.f32.mrb[0].mxu0
      %2798 = vmatprep.mubr.bf16.mxu0 0
      %2799 = vmatmul.mubr.bf16.gmra.mrb[0].mxu0 %v2288
      %v2800 = vpop.f32.mrb[0].mxu0
      %v2801 = vadd.f32 %v2324, %v2800
      %v2802 = vpop.f32.mrb[0].mxu0
      %v2803 = vpop.f32.mrb[0].mxu0
      %v2804 = vadd.f32 %v2324, %v2803
      %v2805 = vpop.f32.mrb[0].mxu0
      %2806 = vmatprep.mubr.bf16.mxu0 0
      %2807 = vmatmul.mubr.bf16.gmra.mrb[0].mxu0 %v2289
      %v2808 = vpop.f32.mrb[0].mxu0
      %v2809 = vadd.f32 %v2324, %v2808
      %v2810 = vpop.f32.mrb[0].mxu0
      %v2811 = vpop.f32.mrb[0].mxu0
      %v2812 = vadd.f32 %v2324, %v2811
      %v2813 = vpop.f32.mrb[0].mxu0
      %2814 = vmatprep.mubr.bf16.mxu0 0
      %2815 = vmatmul.mubr.bf16.gmra.mrb[0].mxu0 %v2290
      %v2816 = vpop.f32.mrb[0].mxu0
      %v2817 = vadd.f32 %v2324, %v2816
      %v2818 = vpop.f32.mrb[0].mxu0
      %v2819 = vpop.f32.mrb[0].mxu0
      %v2820 = vadd.f32 %v2324, %v2819
      %v2821 = vpop.f32.mrb[0].mxu0
      %2822 = vmatprep.mubr.bf16.mxu0 0
      %2823 = vmatmul.mubr.bf16.gmra.mrb[0].mxu0 %v2291
      %v2824 = vpop.f32.mrb[0].mxu0
      %v2825 = vadd.f32 %v2324, %v2824
      %v2826 = vpop.f32.mrb[0].mxu0
      %v2827 = vpop.f32.mrb[0].mxu0
      %v2828 = vadd.f32 %v2324, %v2827
      %v2829 = vpop.f32.mrb[0].mxu0
      %2830 = vmatprep.mubr.bf16.mxu0 0
      %2831 = vmatmul.mubr.bf16.gmra.mrb[0].mxu0 %v2292
      %v2832 = vpop.f32.mrb[0].mxu0
      %v2833 = vadd.f32 %v2324, %v2832
      %v2834 = vpop.f32.mrb[0].mxu0
      %v2835 = vpop.f32.mrb[0].mxu0
      %v2836 = vadd.f32 %v2324, %v2835
      %v2837 = vpop.f32.mrb[0].mxu0
      %2838 = vmatprep.mubr.bf16.mxu0 0
      %2839 = vmatmul.mubr.bf16.gmra.mrb[0].mxu0 %v2293
      %v2840 = vpop.f32.mrb[0].mxu0
      %v2841 = vadd.f32 %v2324, %v2840
      %v2842 = vpop.f32.mrb[0].mxu0
      %v2843 = vpop.f32.mrb[0].mxu0
      %v2844 = vadd.f32 %v2324, %v2843
      %v2845 = vpop.f32.mrb[0].mxu0
      %2846 = vmatprep.mubr.bf16.mxu0 0
      %2847 = vmatmul.mubr.bf16.gmra.mrb[0].mxu0 %v2294
      %v2848 = vpop.f32.mrb[0].mxu0
      %v2849 = vadd.f32 %v2324, %v2848
      %v2850 = vpop.f32.mrb[0].mxu0
      %v2851 = vpop.f32.mrb[0].mxu0
      %v2852 = vadd.f32 %v2324, %v2851
      %v2853 = vpop.f32.mrb[0].mxu0
      %2854 = vmatprep.mubr.bf16.mxu0 0
      %2855 = vmatmul.mubr.bf16.gmra.mrb[0].mxu0 %v2295
      %v2856 = vpop.f32.mrb[0].mxu0
      %v2857 = vadd.f32 %v2324, %v2856
      %v2858 = vpop.f32.mrb[0].mxu0
      %v2859 = vpop.f32.mrb[0].mxu0
      %v2860 = vadd.f32 %v2324, %v2859
      %v2861 = vpop.f32.mrb[0].mxu0
      %2862 = vmatprep.mubr.bf16.mxu0 0
      %2863 = vmatmul.mubr.bf16.gmra.mrb[0].mxu0 %v2296
      %v2864 = vpop.f32.mrb[0].mxu0
      %v2865 = vadd.f32 %v2324, %v2864
      %v2866 = vpop.f32.mrb[0].mxu0
      %v2867 = vpop.f32.mrb[0].mxu0
      %v2868 = vadd.f32 %v2324, %v2867
      %v2869 = vpop.f32.mrb[0].mxu0
      %2870 = vmatprep.mubr.bf16.mxu0 0
      %2871 = vmatmul.mubr.bf16.gmra.mrb[0].mxu0 %v2297
      %v2872 = vpop.f32.mrb[0].mxu0
      %v2873 = vadd.f32 %v2324, %v2872
      %v2874 = vpop.f32.mrb[0].mxu0
      %v2875 = vpop.f32.mrb[0].mxu0
      %v2876 = vadd.f32 %v2324, %v2875
      %v2877 = vpop.f32.mrb[0].mxu0
      %2878 = vmatprep.mubr.bf16.mxu0 0
      %2879 = vmatmul.mubr.bf16.gmra.mrb[0].mxu0 %v2298
      %v2880 = vpop.f32.mrb[0].mxu0
      %v2881 = vadd.f32 %v2324, %v2880
      %v2882 = vpop.f32.mrb[0].mxu0
      %v2883 = vpop.f32.mrb[0].mxu0
      %v2884 = vadd.f32 %v2324, %v2883
      %v2885 = vpop.f32.mrb[0].mxu0
      %2886 = vmatprep.mubr.bf16.mxu0 0
      %2887 = vmatmul.mubr.bf16.gmra.mrb[0].mxu0 %v2299
      %v2888 = vpop.f32.mrb[0].mxu0
      %v2889 = vadd.f32 %v2324, %v2888
      %v2890 = vpop.f32.mrb[0].mxu0
      %v2891 = vpop.f32.mrb[0].mxu0
      %v2892 = vadd.f32 %v2324, %v2891
      %v2893 = vpop.f32.mrb[0].mxu0
      %2894 = vmatprep.mubr.bf16.mxu0 0
      %2895 = vmatmul.mubr.bf16.gmra.mrb[0].mxu0 %v2300
      %v2896 = vpop.f32.mrb[0].mxu0
      %v2897 = vadd.f32 %v2324, %v2896
      %v2898 = vpop.f32.mrb[0].mxu0
      %v2899 = vpop.f32.mrb[0].mxu0
      %v2900 = vadd.f32 %v2324, %v2899
      %v2901 = vpop.f32.mrb[0].mxu0
      %2902 = vmatprep.mubr.bf16.mxu0 0
      %2903 = vmatmul.mubr.bf16.gmra.mrb[0].mxu0 %v2301
      %v2904 = vpop.f32.mrb[0].mxu0
      %v2905 = vadd.f32 %v2324, %v2904
      %v2906 = vpop.f32.mrb[0].mxu0
      %v2907 = vpop.f32.mrb[0].mxu0
      %v2908 = vadd.f32 %v2324, %v2907
      %v2909 = vpop.f32.mrb[0].mxu0
      %2910 = vmatprep.mubr.bf16.mxu0 0
      %2911 = vmatmul.mubr.bf16.gmra.mrb[0].mxu0 %v2302
      %v2912 = vpop.f32.mrb[0].mxu0
      %v2913 = vadd.f32 %v2324, %v2912
      %v2914 = vpop.f32.mrb[0].mxu0
      %v2915 = vpop.f32.mrb[0].mxu0
      %v2916 = vadd.f32 %v2324, %v2915
      %v2917 = vpop.f32.mrb[0].mxu0
      %2918 = vdwg.mxu0
      %v2919 = vmax.f32 %v2409, 0.0
      %v2920 = vmax.f32 %v2412, 0.0
      %v2921 = vmax.f32 %v2417, 0.0
      %v2922 = vmax.f32 %v2420, 0.0
      %v2923 = vmax.f32 %v2425, 0.0
      %v2924 = vmax.f32 %v2428, 0.0
      %v2925 = vmax.f32 %v2433, 0.0
      %v2926 = vmax.f32 %v2436, 0.0
      %v2927 = vmax.f32 %v2441, 0.0
      %v2928 = vmax.f32 %v2444, 0.0
      %v2929 = vmax.f32 %v2449, 0.0
      %v2930 = vmax.f32 %v2452, 0.0
      %v2931 = vmax.f32 %v2457, 0.0
      %v2932 = vmax.f32 %v2460, 0.0
      %v2933 = vmax.f32 %v2465, 0.0
      %v2934 = vmax.f32 %v2468, 0.0
      %v2935 = vmax.f32 %v2473, 0.0
      %v2936 = vmax.f32 %v2476, 0.0
      %v2937 = vmax.f32 %v2481, 0.0
      %v2938 = vmax.f32 %v2484, 0.0
      %v2939 = vmax.f32 %v2489, 0.0
      %v2940 = vmax.f32 %v2492, 0.0
      %v2941 = vmax.f32 %v2497, 0.0
      %v2942 = vmax.f32 %v2500, 0.0
      %v2943 = vmax.f32 %v2505, 0.0
      %v2944 = vmax.f32 %v2508, 0.0
      %v2945 = vmax.f32 %v2513, 0.0
      %v2946 = vmax.f32 %v2516, 0.0
      %v2947 = vmax.f32 %v2521, 0.0
      %v2948 = vmax.f32 %v2524, 0.0
      %v2949 = vmax.f32 %v2529, 0.0
      %v2950 = vmax.f32 %v2532, 0.0
      %v2951 = vmax.f32 %v2537, 0.0
      %v2952 = vmax.f32 %v2540, 0.0
      %v2953 = vmax.f32 %v2545, 0.0
      %v2954 = vmax.f32 %v2548, 0.0
      %v2955 = vmax.f32 %v2553, 0.0
      %v2956 = vmax.f32 %v2556, 0.0
      %v2957 = vmax.f32 %v2561, 0.0
      %v2958 = vmax.f32 %v2564, 0.0
      %v2959 = vmax.f32 %v2569, 0.0
      %v2960 = vmax.f32 %v2572, 0.0
      %v2961 = vmax.f32 %v2577, 0.0
      %v2962 = vmax.f32 %v2580, 0.0
      %v2963 = vmax.f32 %v2585, 0.0
      %v2964 = vmax.f32 %v2588, 0.0
      %v2965 = vmax.f32 %v2593, 0.0
      %v2966 = vmax.f32 %v2596, 0.0
      %v2967 = vmax.f32 %v2601, 0.0
      %v2968 = vmax.f32 %v2604, 0.0
      %v2969 = vmax.f32 %v2609, 0.0
      %v2970 = vmax.f32 %v2612, 0.0
      %v2971 = vmax.f32 %v2617, 0.0
      %v2972 = vmax.f32 %v2620, 0.0
      %v2973 = vmax.f32 %v2625, 0.0
      %v2974 = vmax.f32 %v2628, 0.0
      %v2975 = vmax.f32 %v2633, 0.0
      %v2976 = vmax.f32 %v2636, 0.0
      %v2977 = vmax.f32 %v2641, 0.0
      %v2978 = vmax.f32 %v2644, 0.0
      %v2979 = vmax.f32 %v2649, 0.0
      %v2980 = vmax.f32 %v2652, 0.0
      %v2981 = vmax.f32 %v2657, 0.0
      %v2982 = vmax.f32 %v2660, 0.0
      %v2983 = vmax.f32 %v2665, 0.0
      %v2984 = vmax.f32 %v2668, 0.0
      %v2985 = vmax.f32 %v2673, 0.0
      %v2986 = vmax.f32 %v2676, 0.0
      %v2987 = vmax.f32 %v2681, 0.0
      %v2988 = vmax.f32 %v2684, 0.0
      %v2989 = vmax.f32 %v2689, 0.0
      %v2990 = vmax.f32 %v2692, 0.0
      %v2991 = vmax.f32 %v2697, 0.0
      %v2992 = vmax.f32 %v2700, 0.0
      %v2993 = vmax.f32 %v2705, 0.0
      %v2994 = vmax.f32 %v2708, 0.0
      %v2995 = vmax.f32 %v2713, 0.0
      %v2996 = vmax.f32 %v2716, 0.0
      %v2997 = vmax.f32 %v2721, 0.0
      %v2998 = vmax.f32 %v2724, 0.0
      %v2999 = vmax.f32 %v2729, 0.0
      %v3000 = vmax.f32 %v2732, 0.0
      %v3001 = vmax.f32 %v2737, 0.0
      %v3002 = vmax.f32 %v2740, 0.0
      %v3003 = vmax.f32 %v2745, 0.0
      %v3004 = vmax.f32 %v2748, 0.0
      %v3005 = vmax.f32 %v2753, 0.0
      %v3006 = vmax.f32 %v2756, 0.0
      %v3007 = vmax.f32 %v2761, 0.0
      %v3008 = vmax.f32 %v2764, 0.0
      %v3009 = vmax.f32 %v2769, 0.0
      %v3010 = vmax.f32 %v2772, 0.0
      %v3011 = vmax.f32 %v2777, 0.0
      %v3012 = vmax.f32 %v2780, 0.0
      %v3013 = vmax.f32 %v2785, 0.0
      %v3014 = vmax.f32 %v2788, 0.0
      %v3015 = vmax.f32 %v2793, 0.0
      %v3016 = vmax.f32 %v2796, 0.0
      %v3017 = vmax.f32 %v2801, 0.0
      %v3018 = vmax.f32 %v2804, 0.0
      %v3019 = vmax.f32 %v2809, 0.0
      %v3020 = vmax.f32 %v2812, 0.0
      %v3021 = vmax.f32 %v2817, 0.0
      %v3022 = vmax.f32 %v2820, 0.0
      %v3023 = vmax.f32 %v2825, 0.0
      %v3024 = vmax.f32 %v2828, 0.0
      %v3025 = vmax.f32 %v2833, 0.0
      %v3026 = vmax.f32 %v2836, 0.0
      %v3027 = vmax.f32 %v2841, 0.0
      %v3028 = vmax.f32 %v2844, 0.0
      %v3029 = vmax.f32 %v2849, 0.0
      %v3030 = vmax.f32 %v2852, 0.0
      %v3031 = vmax.f32 %v2857, 0.0
      %v3032 = vmax.f32 %v2860, 0.0
      %v3033 = vmax.f32 %v2865, 0.0
      %v3034 = vmax.f32 %v2868, 0.0
      %v3035 = vmax.f32 %v2873, 0.0
      %v3036 = vmax.f32 %v2876, 0.0
      %v3037 = vmax.f32 %v2881, 0.0
      %v3038 = vmax.f32 %v2884, 0.0
      %v3039 = vmax.f32 %v2889, 0.0
      %v3040 = vmax.f32 %v2892, 0.0
      %v3041 = vmax.f32 %v2897, 0.0
      %v3042 = vmax.f32 %v2900, 0.0
      %v3043 = vmax.f32 %v2905, 0.0
      %v3044 = vmax.f32 %v2908, 0.0
      %v3045 = vmax.f32 %v2913, 0.0
      %v3046 = vmax.f32 %v2916, 0.0
      %v3047 = vld [vmem:[%s7] sm:$0xff]
      %v3048 = vld [vmem:[%s7 + $0x8] sm:$0xff]
      %v3049 = vld [vmem:[%s7 + $0x10] sm:$0xff]
      %v3050 = vld [vmem:[%s7 + $0x18] sm:$0xff]
      %v3051 = vld [vmem:[%s7 + $0x20] sm:$0xff]
      %v3052 = vld [vmem:[%s7 + $0x28] sm:$0xff]
      %v3053 = vld [vmem:[%s7 + $0x30] sm:$0xff]
      %v3054 = vld [vmem:[%s7 + $0x38] sm:$0xff]
      %v3055 = vld [vmem:[%s7 + $0x40] sm:$0xff]
      %v3056 = vld [vmem:[%s7 + $0x48] sm:$0xff]
      %v3057 = vld [vmem:[%s7 + $0x50] sm:$0xff]
      %v3058 = vld [vmem:[%s7 + $0x58] sm:$0xff]
      %v3059 = vld [vmem:[%s7 + $0x60] sm:$0xff]
      %v3060 = vld [vmem:[%s7 + $0x68] sm:$0xff]
      %v3061 = vld [vmem:[%s7 + $0x70] sm:$0xff]
      %v3062 = vld [vmem:[%s7 + $0x78] sm:$0xff]
      %v3063 = vld [vmem:[#allocation2] sm:$0x1]
      %v3065 = vlaneseq
      %v3066 = vshrl.u32 %v3065, 7
      %v3067 = vsub.s32 0, %v3066
      %v3068 = vrot.slane %v3063, %v3067
      %3070 = vmatprep.subr.mxu0 0.0
      %3071 = vmatpush1.msra.mxu0 %v3047
      %3072 = vmatprep.subr.mxu0 0.0
      %3073 = vmatpush1.msra.mxu0 %v3048
      %3074 = vmatprep.subr.mxu0 0.0
      %3075 = vmatpush1.msra.mxu0 %v3049
      %3076 = vmatprep.subr.mxu0 0.0
      %3077 = vmatpush1.msra.mxu0 %v3050
      %3078 = vmatprep.subr.mxu0 0.0
      %3079 = vmatpush1.msra.mxu0 %v3051
      %3080 = vmatprep.subr.mxu0 0.0
      %3081 = vmatpush1.msra.mxu0 %v3052
      %3082 = vmatprep.subr.mxu0 0.0
      %3083 = vmatpush1.msra.mxu0 %v3053
      %3084 = vmatprep.subr.mxu0 0.0
      %3085 = vmatpush1.msra.mxu0 %v3054
      %3086 = vmatprep.subr.mxu0 0.0
      %3087 = vmatpush1.msra.mxu0 %v3055
      %3088 = vmatprep.subr.mxu0 0.0
      %3089 = vmatpush1.msra.mxu0 %v3056
      %3090 = vmatprep.subr.mxu0 0.0
      %3091 = vmatpush1.msra.mxu0 %v3057
      %3092 = vmatprep.subr.mxu0 0.0
      %3093 = vmatpush1.msra.mxu0 %v3058
      %3094 = vmatprep.subr.mxu0 0.0
      %3095 = vmatpush1.msra.mxu0 %v3059
      %3096 = vmatprep.subr.mxu0 0.0
      %3097 = vmatpush1.msra.mxu0 %v3060
      %3098 = vmatprep.subr.mxu0 0.0
      %3099 = vmatpush1.msra.mxu0 %v3061
      %3100 = vmatprep.subr.mxu0 0.0
      %3101 = vmatpush1.msra.mxu0 %v3062
      %3102 = vmatprep.subr.mxu0 0.0
      %3103 = vmatpush1.msra.mxu0 0.0
      %3104 = vmatprep.subr.mxu0 0.0
      %3105 = vmatpush1.msra.mxu0 0.0
      %3106 = vmatprep.subr.mxu0 0.0
      %3107 = vmatpush1.msra.mxu0 0.0
      %3108 = vmatprep.subr.mxu0 0.0
      %3109 = vmatpush1.msra.mxu0 0.0
      %3110 = vmatprep.subr.mxu0 0.0
      %3111 = vmatpush1.msra.mxu0 0.0
      %3112 = vmatprep.subr.mxu0 0.0
      %3113 = vmatpush1.msra.mxu0 0.0
      %3114 = vmatprep.subr.mxu0 0.0
      %3115 = vmatpush1.msra.mxu0 0.0
      %3116 = vmatprep.subr.mxu0 0.0
      %3117 = vmatpush1.msra.mxu0 0.0
      %3118 = vmatprep.subr.mxu0 0.0
      %3119 = vmatpush1.msra.mxu0 0.0
      %3120 = vmatprep.subr.mxu0 0.0
      %3121 = vmatpush1.msra.mxu0 0.0
      %3122 = vmatprep.subr.mxu0 0.0
      %3123 = vmatpush1.msra.mxu0 0.0
      %3124 = vmatprep.subr.mxu0 0.0
      %3125 = vmatpush1.msra.mxu0 0.0
      %3126 = vmatprep.subr.mxu0 0.0
      %3127 = vmatpush1.msra.mxu0 0.0
      %3128 = vmatprep.subr.mxu0 0.0
      %3129 = vmatpush1.msra.mxu0 0.0
      %3130 = vmatprep.subr.mxu0 0.0
      %3131 = vmatpush1.msra.mxu0 0.0
      %3132 = vmatprep.subr.mxu0 0.0
      %3133 = vmatpush1.msra.mxu0 0.0
      %3134 = vmatprep.mubr.f32.mxu0 0.0
      %3135 = vmatmul.mubr.f32.gmra.mrb[0].mxu0 %v2919
      %v3136 = vpop.f32.mrb[0].mxu0
      %v3137 = vadd.f32 %v3068, %v3136
      %v3138 = vpop.f32.mrb[0].mxu0
      %3139 = vmatprep.mubr.f32.mxu0 0.0
      %3140 = vmatmul.mubr.f32.gmra.mrb[0].mxu0 %v2920
      %v3141 = vpop.f32.mrb[0].mxu0
      %v3142 = vadd.f32 %v3068, %v3141
      %v3143 = vpop.f32.mrb[0].mxu0
      %3144 = vmatprep.mubr.f32.mxu0 0.0
      %3145 = vmatmul.mubr.f32.gmra.mrb[0].mxu0 %v2921
      %v3146 = vpop.f32.mrb[0].mxu0
      %v3147 = vadd.f32 %v3068, %v3146
      %v3148 = vpop.f32.mrb[0].mxu0
      %3149 = vmatprep.mubr.f32.mxu0 0.0
      %3150 = vmatmul.mubr.f32.gmra.mrb[0].mxu0 %v2922
      %v3151 = vpop.f32.mrb[0].mxu0
      %v3152 = vadd.f32 %v3068, %v3151
      %v3153 = vpop.f32.mrb[0].mxu0
      %3154 = vmatprep.mubr.f32.mxu0 0.0
      %3155 = vmatmul.mubr.f32.gmra.mrb[0].mxu0 %v2923
      %v3156 = vpop.f32.mrb[0].mxu0
      %v3157 = vadd.f32 %v3068, %v3156
      %v3158 = vpop.f32.mrb[0].mxu0
      %3159 = vmatprep.mubr.f32.mxu0 0.0
      %3160 = vmatmul.mubr.f32.gmra.mrb[0].mxu0 %v2924
      %v3161 = vpop.f32.mrb[0].mxu0
      %v3162 = vadd.f32 %v3068, %v3161
      %v3163 = vpop.f32.mrb[0].mxu0
      %3164 = vmatprep.mubr.f32.mxu0 0.0
      %3165 = vmatmul.mubr.f32.gmra.mrb[0].mxu0 %v2925
      %v3166 = vpop.f32.mrb[0].mxu0
      %v3167 = vadd.f32 %v3068, %v3166
      %v3168 = vpop.f32.mrb[0].mxu0
      %3169 = vmatprep.mubr.f32.mxu0 0.0
      %3170 = vmatmul.mubr.f32.gmra.mrb[0].mxu0 %v2926
      %v3171 = vpop.f32.mrb[0].mxu0
      %v3172 = vadd.f32 %v3068, %v3171
      %v3173 = vpop.f32.mrb[0].mxu0
      %3174 = vmatprep.mubr.f32.mxu0 0.0
      %3175 = vmatmul.mubr.f32.gmra.mrb[0].mxu0 %v2927
      %v3176 = vpop.f32.mrb[0].mxu0
      %v3177 = vadd.f32 %v3068, %v3176
      %v3178 = vpop.f32.mrb[0].mxu0
      %3179 = vmatprep.mubr.f32.mxu0 0.0
      %3180 = vmatmul.mubr.f32.gmra.mrb[0].mxu0 %v2928
      %v3181 = vpop.f32.mrb[0].mxu0
      %v3182 = vadd.f32 %v3068, %v3181
      %v3183 = vpop.f32.mrb[0].mxu0
      %3184 = vmatprep.mubr.f32.mxu0 0.0
      %3185 = vmatmul.mubr.f32.gmra.mrb[0].mxu0 %v2929
      %v3186 = vpop.f32.mrb[0].mxu0
      %v3187 = vadd.f32 %v3068, %v3186
      %v3188 = vpop.f32.mrb[0].mxu0
      %3189 = vmatprep.mubr.f32.mxu0 0.0
      %3190 = vmatmul.mubr.f32.gmra.mrb[0].mxu0 %v2930
      %v3191 = vpop.f32.mrb[0].mxu0
      %v3192 = vadd.f32 %v3068, %v3191
      %v3193 = vpop.f32.mrb[0].mxu0
      %3194 = vmatprep.mubr.f32.mxu0 0.0
      %3195 = vmatmul.mubr.f32.gmra.mrb[0].mxu0 %v2931
      %v3196 = vpop.f32.mrb[0].mxu0
      %v3197 = vadd.f32 %v3068, %v3196
      %v3198 = vpop.f32.mrb[0].mxu0
      %3199 = vmatprep.mubr.f32.mxu0 0.0
      %3200 = vmatmul.mubr.f32.gmra.mrb[0].mxu0 %v2932
      %v3201 = vpop.f32.mrb[0].mxu0
      %v3202 = vadd.f32 %v3068, %v3201
      %v3203 = vpop.f32.mrb[0].mxu0
      %3204 = vmatprep.mubr.f32.mxu0 0.0
      %3205 = vmatmul.mubr.f32.gmra.mrb[0].mxu0 %v2933
      %v3206 = vpop.f32.mrb[0].mxu0
      %v3207 = vadd.f32 %v3068, %v3206
      %v3208 = vpop.f32.mrb[0].mxu0
      %3209 = vmatprep.mubr.f32.mxu0 0.0
      %3210 = vmatmul.mubr.f32.gmra.mrb[0].mxu0 %v2934
      %v3211 = vpop.f32.mrb[0].mxu0
      %v3212 = vadd.f32 %v3068, %v3211
      %v3213 = vpop.f32.mrb[0].mxu0
      %3214 = vmatprep.mubr.f32.mxu0 0.0
      %3215 = vmatmul.mubr.f32.gmra.mrb[0].mxu0 %v2935
      %v3216 = vpop.f32.mrb[0].mxu0
      %v3217 = vadd.f32 %v3068, %v3216
      %v3218 = vpop.f32.mrb[0].mxu0
      %3219 = vmatprep.mubr.f32.mxu0 0.0
      %3220 = vmatmul.mubr.f32.gmra.mrb[0].mxu0 %v2936
      %v3221 = vpop.f32.mrb[0].mxu0
      %v3222 = vadd.f32 %v3068, %v3221
      %v3223 = vpop.f32.mrb[0].mxu0
      %3224 = vmatprep.mubr.f32.mxu0 0.0
      %3225 = vmatmul.mubr.f32.gmra.mrb[0].mxu0 %v2937
      %v3226 = vpop.f32.mrb[0].mxu0
      %v3227 = vadd.f32 %v3068, %v3226
      %v3228 = vpop.f32.mrb[0].mxu0
      %3229 = vmatprep.mubr.f32.mxu0 0.0
      %3230 = vmatmul.mubr.f32.gmra.mrb[0].mxu0 %v2938
      %v3231 = vpop.f32.mrb[0].mxu0
      %v3232 = vadd.f32 %v3068, %v3231
      %v3233 = vpop.f32.mrb[0].mxu0
      %3234 = vmatprep.mubr.f32.mxu0 0.0
      %3235 = vmatmul.mubr.f32.gmra.mrb[0].mxu0 %v2939
      %v3236 = vpop.f32.mrb[0].mxu0
      %v3237 = vadd.f32 %v3068, %v3236
      %v3238 = vpop.f32.mrb[0].mxu0
      %3239 = vmatprep.mubr.f32.mxu0 0.0
      %3240 = vmatmul.mubr.f32.gmra.mrb[0].mxu0 %v2940
      %v3241 = vpop.f32.mrb[0].mxu0
      %v3242 = vadd.f32 %v3068, %v3241
      %v3243 = vpop.f32.mrb[0].mxu0
      %3244 = vmatprep.mubr.f32.mxu0 0.0
      %3245 = vmatmul.mubr.f32.gmra.mrb[0].mxu0 %v2941
      %v3246 = vpop.f32.mrb[0].mxu0
      %v3247 = vadd.f32 %v3068, %v3246
      %v3248 = vpop.f32.mrb[0].mxu0
      %3249 = vmatprep.mubr.f32.mxu0 0.0
      %3250 = vmatmul.mubr.f32.gmra.mrb[0].mxu0 %v2942
      %v3251 = vpop.f32.mrb[0].mxu0
      %v3252 = vadd.f32 %v3068, %v3251
      %v3253 = vpop.f32.mrb[0].mxu0
      %3254 = vmatprep.mubr.f32.mxu0 0.0
      %3255 = vmatmul.mubr.f32.gmra.mrb[0].mxu0 %v2943
      %v3256 = vpop.f32.mrb[0].mxu0
      %v3257 = vadd.f32 %v3068, %v3256
      %v3258 = vpop.f32.mrb[0].mxu0
      %3259 = vmatprep.mubr.f32.mxu0 0.0
      %3260 = vmatmul.mubr.f32.gmra.mrb[0].mxu0 %v2944
      %v3261 = vpop.f32.mrb[0].mxu0
      %v3262 = vadd.f32 %v3068, %v3261
      %v3263 = vpop.f32.mrb[0].mxu0
      %3264 = vmatprep.mubr.f32.mxu0 0.0
      %3265 = vmatmul.mubr.f32.gmra.mrb[0].mxu0 %v2945
      %v3266 = vpop.f32.mrb[0].mxu0
      %v3267 = vadd.f32 %v3068, %v3266
      %v3268 = vpop.f32.mrb[0].mxu0
      %3269 = vmatprep.mubr.f32.mxu0 0.0
      %3270 = vmatmul.mubr.f32.gmra.mrb[0].mxu0 %v2946
      %v3271 = vpop.f32.mrb[0].mxu0
      %v3272 = vadd.f32 %v3068, %v3271
      %v3273 = vpop.f32.mrb[0].mxu0
      %3274 = vmatprep.mubr.f32.mxu0 0.0
      %3275 = vmatmul.mubr.f32.gmra.mrb[0].mxu0 %v2947
      %v3276 = vpop.f32.mrb[0].mxu0
      %v3277 = vadd.f32 %v3068, %v3276
      %v3278 = vpop.f32.mrb[0].mxu0
      %3279 = vmatprep.mubr.f32.mxu0 0.0
      %3280 = vmatmul.mubr.f32.gmra.mrb[0].mxu0 %v2948
      %v3281 = vpop.f32.mrb[0].mxu0
      %v3282 = vadd.f32 %v3068, %v3281
      %v3283 = vpop.f32.mrb[0].mxu0
      %3284 = vmatprep.mubr.f32.mxu0 0.0
      %3285 = vmatmul.mubr.f32.gmra.mrb[0].mxu0 %v2949
      %v3286 = vpop.f32.mrb[0].mxu0
      %v3287 = vadd.f32 %v3068, %v3286
      %v3288 = vpop.f32.mrb[0].mxu0
      %3289 = vmatprep.mubr.f32.mxu0 0.0
      %3290 = vmatmul.mubr.f32.gmra.mrb[0].mxu0 %v2950
      %v3291 = vpop.f32.mrb[0].mxu0
      %v3292 = vadd.f32 %v3068, %v3291
      %v3293 = vpop.f32.mrb[0].mxu0
      %3294 = vmatprep.mubr.f32.mxu0 0.0
      %3295 = vmatmul.mubr.f32.gmra.mrb[0].mxu0 %v2951
      %v3296 = vpop.f32.mrb[0].mxu0
      %v3297 = vadd.f32 %v3068, %v3296
      %v3298 = vpop.f32.mrb[0].mxu0
      %3299 = vmatprep.mubr.f32.mxu0 0.0
      %3300 = vmatmul.mubr.f32.gmra.mrb[0].mxu0 %v2952
      %v3301 = vpop.f32.mrb[0].mxu0
      %v3302 = vadd.f32 %v3068, %v3301
      %v3303 = vpop.f32.mrb[0].mxu0
      %3304 = vmatprep.mubr.f32.mxu0 0.0
      %3305 = vmatmul.mubr.f32.gmra.mrb[0].mxu0 %v2953
      %v3306 = vpop.f32.mrb[0].mxu0
      %v3307 = vadd.f32 %v3068, %v3306
      %v3308 = vpop.f32.mrb[0].mxu0
      %3309 = vmatprep.mubr.f32.mxu0 0.0
      %3310 = vmatmul.mubr.f32.gmra.mrb[0].mxu0 %v2954
      %v3311 = vpop.f32.mrb[0].mxu0
      %v3312 = vadd.f32 %v3068, %v3311
      %v3313 = vpop.f32.mrb[0].mxu0
      %3314 = vmatprep.mubr.f32.mxu0 0.0
      %3315 = vmatmul.mubr.f32.gmra.mrb[0].mxu0 %v2955
      %v3316 = vpop.f32.mrb[0].mxu0
      %v3317 = vadd.f32 %v3068, %v3316
      %v3318 = vpop.f32.mrb[0].mxu0
      %3319 = vmatprep.mubr.f32.mxu0 0.0
      %3320 = vmatmul.mubr.f32.gmra.mrb[0].mxu0 %v2956
      %v3321 = vpop.f32.mrb[0].mxu0
      %v3322 = vadd.f32 %v3068, %v3321
      %v3323 = vpop.f32.mrb[0].mxu0
      %3324 = vmatprep.mubr.f32.mxu0 0.0
      %3325 = vmatmul.mubr.f32.gmra.mrb[0].mxu0 %v2957
      %v3326 = vpop.f32.mrb[0].mxu0
      %v3327 = vadd.f32 %v3068, %v3326
      %v3328 = vpop.f32.mrb[0].mxu0
      %3329 = vmatprep.mubr.f32.mxu0 0.0
      %3330 = vmatmul.mubr.f32.gmra.mrb[0].mxu0 %v2958
      %v3331 = vpop.f32.mrb[0].mxu0
      %v3332 = vadd.f32 %v3068, %v3331
      %v3333 = vpop.f32.mrb[0].mxu0
      %3334 = vmatprep.mubr.f32.mxu0 0.0
      %3335 = vmatmul.mubr.f32.gmra.mrb[0].mxu0 %v2959
      %v3336 = vpop.f32.mrb[0].mxu0
      %v3337 = vadd.f32 %v3068, %v3336
      %v3338 = vpop.f32.mrb[0].mxu0
      %3339 = vmatprep.mubr.f32.mxu0 0.0
      %3340 = vmatmul.mubr.f32.gmra.mrb[0].mxu0 %v2960
      %v3341 = vpop.f32.mrb[0].mxu0
      %v3342 = vadd.f32 %v3068, %v3341
      %v3343 = vpop.f32.mrb[0].mxu0
      %3344 = vmatprep.mubr.f32.mxu0 0.0
      %3345 = vmatmul.mubr.f32.gmra.mrb[0].mxu0 %v2961
      %v3346 = vpop.f32.mrb[0].mxu0
      %v3347 = vadd.f32 %v3068, %v3346
      %v3348 = vpop.f32.mrb[0].mxu0
      %3349 = vmatprep.mubr.f32.mxu0 0.0
      %3350 = vmatmul.mubr.f32.gmra.mrb[0].mxu0 %v2962
      %v3351 = vpop.f32.mrb[0].mxu0
      %v3352 = vadd.f32 %v3068, %v3351
      %v3353 = vpop.f32.mrb[0].mxu0
      %3354 = vmatprep.mubr.f32.mxu0 0.0
      %3355 = vmatmul.mubr.f32.gmra.mrb[0].mxu0 %v2963
      %v3356 = vpop.f32.mrb[0].mxu0
      %v3357 = vadd.f32 %v3068, %v3356
      %v3358 = vpop.f32.mrb[0].mxu0
      %3359 = vmatprep.mubr.f32.mxu0 0.0
      %3360 = vmatmul.mubr.f32.gmra.mrb[0].mxu0 %v2964
      %v3361 = vpop.f32.mrb[0].mxu0
      %v3362 = vadd.f32 %v3068, %v3361
      %v3363 = vpop.f32.mrb[0].mxu0
      %3364 = vmatprep.mubr.f32.mxu0 0.0
      %3365 = vmatmul.mubr.f32.gmra.mrb[0].mxu0 %v2965
      %v3366 = vpop.f32.mrb[0].mxu0
      %v3367 = vadd.f32 %v3068, %v3366
      %v3368 = vpop.f32.mrb[0].mxu0
      %3369 = vmatprep.mubr.f32.mxu0 0.0
      %3370 = vmatmul.mubr.f32.gmra.mrb[0].mxu0 %v2966
      %v3371 = vpop.f32.mrb[0].mxu0
      %v3372 = vadd.f32 %v3068, %v3371
      %v3373 = vpop.f32.mrb[0].mxu0
      %3374 = vmatprep.mubr.f32.mxu0 0.0
      %3375 = vmatmul.mubr.f32.gmra.mrb[0].mxu0 %v2967
      %v3376 = vpop.f32.mrb[0].mxu0
      %v3377 = vadd.f32 %v3068, %v3376
      %v3378 = vpop.f32.mrb[0].mxu0
      %3379 = vmatprep.mubr.f32.mxu0 0.0
      %3380 = vmatmul.mubr.f32.gmra.mrb[0].mxu0 %v2968
      %v3381 = vpop.f32.mrb[0].mxu0
      %v3382 = vadd.f32 %v3068, %v3381
      %v3383 = vpop.f32.mrb[0].mxu0
      %3384 = vmatprep.mubr.f32.mxu0 0.0
      %3385 = vmatmul.mubr.f32.gmra.mrb[0].mxu0 %v2969
      %v3386 = vpop.f32.mrb[0].mxu0
      %v3387 = vadd.f32 %v3068, %v3386
      %v3388 = vpop.f32.mrb[0].mxu0
      %3389 = vmatprep.mubr.f32.mxu0 0.0
      %3390 = vmatmul.mubr.f32.gmra.mrb[0].mxu0 %v2970
      %v3391 = vpop.f32.mrb[0].mxu0
      %v3392 = vadd.f32 %v3068, %v3391
      %v3393 = vpop.f32.mrb[0].mxu0
      %3394 = vmatprep.mubr.f32.mxu0 0.0
      %3395 = vmatmul.mubr.f32.gmra.mrb[0].mxu0 %v2971
      %v3396 = vpop.f32.mrb[0].mxu0
      %v3397 = vadd.f32 %v3068, %v3396
      %v3398 = vpop.f32.mrb[0].mxu0
      %3399 = vmatprep.mubr.f32.mxu0 0.0
      %3400 = vmatmul.mubr.f32.gmra.mrb[0].mxu0 %v2972
      %v3401 = vpop.f32.mrb[0].mxu0
      %v3402 = vadd.f32 %v3068, %v3401
      %v3403 = vpop.f32.mrb[0].mxu0
      %3404 = vmatprep.mubr.f32.mxu0 0.0
      %3405 = vmatmul.mubr.f32.gmra.mrb[0].mxu0 %v2973
      %v3406 = vpop.f32.mrb[0].mxu0
      %v3407 = vadd.f32 %v3068, %v3406
      %v3408 = vpop.f32.mrb[0].mxu0
      %3409 = vmatprep.mubr.f32.mxu0 0.0
      %3410 = vmatmul.mubr.f32.gmra.mrb[0].mxu0 %v2974
      %v3411 = vpop.f32.mrb[0].mxu0
      %v3412 = vadd.f32 %v3068, %v3411
      %v3413 = vpop.f32.mrb[0].mxu0
      %3414 = vmatprep.mubr.f32.mxu0 0.0
      %3415 = vmatmul.mubr.f32.gmra.mrb[0].mxu0 %v2975
      %v3416 = vpop.f32.mrb[0].mxu0
      %v3417 = vadd.f32 %v3068, %v3416
      %v3418 = vpop.f32.mrb[0].mxu0
      %3419 = vmatprep.mubr.f32.mxu0 0.0
      %3420 = vmatmul.mubr.f32.gmra.mrb[0].mxu0 %v2976
      %v3421 = vpop.f32.mrb[0].mxu0
      %v3422 = vadd.f32 %v3068, %v3421
      %v3423 = vpop.f32.mrb[0].mxu0
      %3424 = vmatprep.mubr.f32.mxu0 0.0
      %3425 = vmatmul.mubr.f32.gmra.mrb[0].mxu0 %v2977
      %v3426 = vpop.f32.mrb[0].mxu0
      %v3427 = vadd.f32 %v3068, %v3426
      %v3428 = vpop.f32.mrb[0].mxu0
      %3429 = vmatprep.mubr.f32.mxu0 0.0
      %3430 = vmatmul.mubr.f32.gmra.mrb[0].mxu0 %v2978
      %v3431 = vpop.f32.mrb[0].mxu0
      %v3432 = vadd.f32 %v3068, %v3431
      %v3433 = vpop.f32.mrb[0].mxu0
      %3434 = vmatprep.mubr.f32.mxu0 0.0
      %3435 = vmatmul.mubr.f32.gmra.mrb[0].mxu0 %v2979
      %v3436 = vpop.f32.mrb[0].mxu0
      %v3437 = vadd.f32 %v3068, %v3436
      %v3438 = vpop.f32.mrb[0].mxu0
      %3439 = vmatprep.mubr.f32.mxu0 0.0
      %3440 = vmatmul.mubr.f32.gmra.mrb[0].mxu0 %v2980
      %v3441 = vpop.f32.mrb[0].mxu0
      %v3442 = vadd.f32 %v3068, %v3441
      %v3443 = vpop.f32.mrb[0].mxu0
      %3444 = vmatprep.mubr.f32.mxu0 0.0
      %3445 = vmatmul.mubr.f32.gmra.mrb[0].mxu0 %v2981
      %v3446 = vpop.f32.mrb[0].mxu0
      %v3447 = vadd.f32 %v3068, %v3446
      %v3448 = vpop.f32.mrb[0].mxu0
      %3449 = vmatprep.mubr.f32.mxu0 0.0
      %3450 = vmatmul.mubr.f32.gmra.mrb[0].mxu0 %v2982
      %v3451 = vpop.f32.mrb[0].mxu0
      %v3452 = vadd.f32 %v3068, %v3451
      %v3453 = vpop.f32.mrb[0].mxu0
      %3454 = vmatprep.mubr.f32.mxu0 0.0
      %3455 = vmatmul.mubr.f32.gmra.mrb[0].mxu0 %v2983
      %v3456 = vpop.f32.mrb[0].mxu0
      %v3457 = vadd.f32 %v3068, %v3456
      %v3458 = vpop.f32.mrb[0].mxu0
      %3459 = vmatprep.mubr.f32.mxu0 0.0
      %3460 = vmatmul.mubr.f32.gmra.mrb[0].mxu0 %v2984
      %v3461 = vpop.f32.mrb[0].mxu0
      %v3462 = vadd.f32 %v3068, %v3461
      %v3463 = vpop.f32.mrb[0].mxu0
      %3464 = vmatprep.mubr.f32.mxu0 0.0
      %3465 = vmatmul.mubr.f32.gmra.mrb[0].mxu0 %v2985
      %v3466 = vpop.f32.mrb[0].mxu0
      %v3467 = vadd.f32 %v3068, %v3466
      %v3468 = vpop.f32.mrb[0].mxu0
      %3469 = vmatprep.mubr.f32.mxu0 0.0
      %3470 = vmatmul.mubr.f32.gmra.mrb[0].mxu0 %v2986
      %v3471 = vpop.f32.mrb[0].mxu0
      %v3472 = vadd.f32 %v3068, %v3471
      %v3473 = vpop.f32.mrb[0].mxu0
      %3474 = vmatprep.mubr.f32.mxu0 0.0
      %3475 = vmatmul.mubr.f32.gmra.mrb[0].mxu0 %v2987
      %v3476 = vpop.f32.mrb[0].mxu0
      %v3477 = vadd.f32 %v3068, %v3476
      %v3478 = vpop.f32.mrb[0].mxu0
      %3479 = vmatprep.mubr.f32.mxu0 0.0
      %3480 = vmatmul.mubr.f32.gmra.mrb[0].mxu0 %v2988
      %v3481 = vpop.f32.mrb[0].mxu0
      %v3482 = vadd.f32 %v3068, %v3481
      %v3483 = vpop.f32.mrb[0].mxu0
      %3484 = vmatprep.mubr.f32.mxu0 0.0
      %3485 = vmatmul.mubr.f32.gmra.mrb[0].mxu0 %v2989
      %v3486 = vpop.f32.mrb[0].mxu0
      %v3487 = vadd.f32 %v3068, %v3486
      %v3488 = vpop.f32.mrb[0].mxu0
      %3489 = vmatprep.mubr.f32.mxu0 0.0
      %3490 = vmatmul.mubr.f32.gmra.mrb[0].mxu0 %v2990
      %v3491 = vpop.f32.mrb[0].mxu0
      %v3492 = vadd.f32 %v3068, %v3491
      %v3493 = vpop.f32.mrb[0].mxu0
      %3494 = vmatprep.mubr.f32.mxu0 0.0
      %3495 = vmatmul.mubr.f32.gmra.mrb[0].mxu0 %v2991
      %v3496 = vpop.f32.mrb[0].mxu0
      %v3497 = vadd.f32 %v3068, %v3496
      %v3498 = vpop.f32.mrb[0].mxu0
      %3499 = vmatprep.mubr.f32.mxu0 0.0
      %3500 = vmatmul.mubr.f32.gmra.mrb[0].mxu0 %v2992
      %v3501 = vpop.f32.mrb[0].mxu0
      %v3502 = vadd.f32 %v3068, %v3501
      %v3503 = vpop.f32.mrb[0].mxu0
      %3504 = vmatprep.mubr.f32.mxu0 0.0
      %3505 = vmatmul.mubr.f32.gmra.mrb[0].mxu0 %v2993
      %v3506 = vpop.f32.mrb[0].mxu0
      %v3507 = vadd.f32 %v3068, %v3506
      %v3508 = vpop.f32.mrb[0].mxu0
      %3509 = vmatprep.mubr.f32.mxu0 0.0
      %3510 = vmatmul.mubr.f32.gmra.mrb[0].mxu0 %v2994
      %v3511 = vpop.f32.mrb[0].mxu0
      %v3512 = vadd.f32 %v3068, %v3511
      %v3513 = vpop.f32.mrb[0].mxu0
      %3514 = vmatprep.mubr.f32.mxu0 0.0
      %3515 = vmatmul.mubr.f32.gmra.mrb[0].mxu0 %v2995
      %v3516 = vpop.f32.mrb[0].mxu0
      %v3517 = vadd.f32 %v3068, %v3516
      %v3518 = vpop.f32.mrb[0].mxu0
      %3519 = vmatprep.mubr.f32.mxu0 0.0
      %3520 = vmatmul.mubr.f32.gmra.mrb[0].mxu0 %v2996
      %v3521 = vpop.f32.mrb[0].mxu0
      %v3522 = vadd.f32 %v3068, %v3521
      %v3523 = vpop.f32.mrb[0].mxu0
      %3524 = vmatprep.mubr.f32.mxu0 0.0
      %3525 = vmatmul.mubr.f32.gmra.mrb[0].mxu0 %v2997
      %v3526 = vpop.f32.mrb[0].mxu0
      %v3527 = vadd.f32 %v3068, %v3526
      %v3528 = vpop.f32.mrb[0].mxu0
      %3529 = vmatprep.mubr.f32.mxu0 0.0
      %3530 = vmatmul.mubr.f32.gmra.mrb[0].mxu0 %v2998
      %v3531 = vpop.f32.mrb[0].mxu0
      %v3532 = vadd.f32 %v3068, %v3531
      %v3533 = vpop.f32.mrb[0].mxu0
      %3534 = vmatprep.mubr.f32.mxu0 0.0
      %3535 = vmatmul.mubr.f32.gmra.mrb[0].mxu0 %v2999
      %v3536 = vpop.f32.mrb[0].mxu0
      %v3537 = vadd.f32 %v3068, %v3536
      %v3538 = vpop.f32.mrb[0].mxu0
      %3539 = vmatprep.mubr.f32.mxu0 0.0
      %3540 = vmatmul.mubr.f32.gmra.mrb[0].mxu0 %v3000
      %v3541 = vpop.f32.mrb[0].mxu0
      %v3542 = vadd.f32 %v3068, %v3541
      %v3543 = vpop.f32.mrb[0].mxu0
      %3544 = vmatprep.mubr.f32.mxu0 0.0
      %3545 = vmatmul.mubr.f32.gmra.mrb[0].mxu0 %v3001
      %v3546 = vpop.f32.mrb[0].mxu0
      %v3547 = vadd.f32 %v3068, %v3546
      %v3548 = vpop.f32.mrb[0].mxu0
      %3549 = vmatprep.mubr.f32.mxu0 0.0
      %3550 = vmatmul.mubr.f32.gmra.mrb[0].mxu0 %v3002
      %v3551 = vpop.f32.mrb[0].mxu0
      %v3552 = vadd.f32 %v3068, %v3551
      %v3553 = vpop.f32.mrb[0].mxu0
      %3554 = vmatprep.mubr.f32.mxu0 0.0
      %3555 = vmatmul.mubr.f32.gmra.mrb[0].mxu0 %v3003
      %v3556 = vpop.f32.mrb[0].mxu0
      %v3557 = vadd.f32 %v3068, %v3556
      %v3558 = vpop.f32.mrb[0].mxu0
      %3559 = vmatprep.mubr.f32.mxu0 0.0
      %3560 = vmatmul.mubr.f32.gmra.mrb[0].mxu0 %v3004
      %v3561 = vpop.f32.mrb[0].mxu0
      %v3562 = vadd.f32 %v3068, %v3561
      %v3563 = vpop.f32.mrb[0].mxu0
      %3564 = vmatprep.mubr.f32.mxu0 0.0
      %3565 = vmatmul.mubr.f32.gmra.mrb[0].mxu0 %v3005
      %v3566 = vpop.f32.mrb[0].mxu0
      %v3567 = vadd.f32 %v3068, %v3566
      %v3568 = vpop.f32.mrb[0].mxu0
      %3569 = vmatprep.mubr.f32.mxu0 0.0
      %3570 = vmatmul.mubr.f32.gmra.mrb[0].mxu0 %v3006
      %v3571 = vpop.f32.mrb[0].mxu0
      %v3572 = vadd.f32 %v3068, %v3571
      %v3573 = vpop.f32.mrb[0].mxu0
      %3574 = vmatprep.mubr.f32.mxu0 0.0
      %3575 = vmatmul.mubr.f32.gmra.mrb[0].mxu0 %v3007
      %v3576 = vpop.f32.mrb[0].mxu0
      %v3577 = vadd.f32 %v3068, %v3576
      %v3578 = vpop.f32.mrb[0].mxu0
      %3579 = vmatprep.mubr.f32.mxu0 0.0
      %3580 = vmatmul.mubr.f32.gmra.mrb[0].mxu0 %v3008
      %v3581 = vpop.f32.mrb[0].mxu0
      %v3582 = vadd.f32 %v3068, %v3581
      %v3583 = vpop.f32.mrb[0].mxu0
      %3584 = vmatprep.mubr.f32.mxu0 0.0
      %3585 = vmatmul.mubr.f32.gmra.mrb[0].mxu0 %v3009
      %v3586 = vpop.f32.mrb[0].mxu0
      %v3587 = vadd.f32 %v3068, %v3586
      %v3588 = vpop.f32.mrb[0].mxu0
      %3589 = vmatprep.mubr.f32.mxu0 0.0
      %3590 = vmatmul.mubr.f32.gmra.mrb[0].mxu0 %v3010
      %v3591 = vpop.f32.mrb[0].mxu0
      %v3592 = vadd.f32 %v3068, %v3591
      %v3593 = vpop.f32.mrb[0].mxu0
      %3594 = vmatprep.mubr.f32.mxu0 0.0
      %3595 = vmatmul.mubr.f32.gmra.mrb[0].mxu0 %v3011
      %v3596 = vpop.f32.mrb[0].mxu0
      %v3597 = vadd.f32 %v3068, %v3596
      %v3598 = vpop.f32.mrb[0].mxu0
      %3599 = vmatprep.mubr.f32.mxu0 0.0
      %3600 = vmatmul.mubr.f32.gmra.mrb[0].mxu0 %v3012
      %v3601 = vpop.f32.mrb[0].mxu0
      %v3602 = vadd.f32 %v3068, %v3601
      %v3603 = vpop.f32.mrb[0].mxu0
      %3604 = vmatprep.mubr.f32.mxu0 0.0
      %3605 = vmatmul.mubr.f32.gmra.mrb[0].mxu0 %v3013
      %v3606 = vpop.f32.mrb[0].mxu0
      %v3607 = vadd.f32 %v3068, %v3606
      %v3608 = vpop.f32.mrb[0].mxu0
      %3609 = vmatprep.mubr.f32.mxu0 0.0
      %3610 = vmatmul.mubr.f32.gmra.mrb[0].mxu0 %v3014
      %v3611 = vpop.f32.mrb[0].mxu0
      %v3612 = vadd.f32 %v3068, %v3611
      %v3613 = vpop.f32.mrb[0].mxu0
      %3614 = vmatprep.mubr.f32.mxu0 0.0
      %3615 = vmatmul.mubr.f32.gmra.mrb[0].mxu0 %v3015
      %v3616 = vpop.f32.mrb[0].mxu0
      %v3617 = vadd.f32 %v3068, %v3616
      %v3618 = vpop.f32.mrb[0].mxu0
      %3619 = vmatprep.mubr.f32.mxu0 0.0
      %3620 = vmatmul.mubr.f32.gmra.mrb[0].mxu0 %v3016
      %v3621 = vpop.f32.mrb[0].mxu0
      %v3622 = vadd.f32 %v3068, %v3621
      %v3623 = vpop.f32.mrb[0].mxu0
      %3624 = vmatprep.mubr.f32.mxu0 0.0
      %3625 = vmatmul.mubr.f32.gmra.mrb[0].mxu0 %v3017
      %v3626 = vpop.f32.mrb[0].mxu0
      %v3627 = vadd.f32 %v3068, %v3626
      %v3628 = vpop.f32.mrb[0].mxu0
      %3629 = vmatprep.mubr.f32.mxu0 0.0
      %3630 = vmatmul.mubr.f32.gmra.mrb[0].mxu0 %v3018
      %v3631 = vpop.f32.mrb[0].mxu0
      %v3632 = vadd.f32 %v3068, %v3631
      %v3633 = vpop.f32.mrb[0].mxu0
      %3634 = vmatprep.mubr.f32.mxu0 0.0
      %3635 = vmatmul.mubr.f32.gmra.mrb[0].mxu0 %v3019
      %v3636 = vpop.f32.mrb[0].mxu0
      %v3637 = vadd.f32 %v3068, %v3636
      %v3638 = vpop.f32.mrb[0].mxu0
      %3639 = vmatprep.mubr.f32.mxu0 0.0
      %3640 = vmatmul.mubr.f32.gmra.mrb[0].mxu0 %v3020
      %v3641 = vpop.f32.mrb[0].mxu0
      %v3642 = vadd.f32 %v3068, %v3641
      %v3643 = vpop.f32.mrb[0].mxu0
      %3644 = vmatprep.mubr.f32.mxu0 0.0
      %3645 = vmatmul.mubr.f32.gmra.mrb[0].mxu0 %v3021
      %v3646 = vpop.f32.mrb[0].mxu0
      %v3647 = vadd.f32 %v3068, %v3646
      %v3648 = vpop.f32.mrb[0].mxu0
      %3649 = vmatprep.mubr.f32.mxu0 0.0
      %3650 = vmatmul.mubr.f32.gmra.mrb[0].mxu0 %v3022
      %v3651 = vpop.f32.mrb[0].mxu0
      %v3652 = vadd.f32 %v3068, %v3651
      %v3653 = vpop.f32.mrb[0].mxu0
      %3654 = vmatprep.mubr.f32.mxu0 0.0
      %3655 = vmatmul.mubr.f32.gmra.mrb[0].mxu0 %v3023
      %v3656 = vpop.f32.mrb[0].mxu0
      %v3657 = vadd.f32 %v3068, %v3656
      %v3658 = vpop.f32.mrb[0].mxu0
      %3659 = vmatprep.mubr.f32.mxu0 0.0
      %3660 = vmatmul.mubr.f32.gmra.mrb[0].mxu0 %v3024
      %v3661 = vpop.f32.mrb[0].mxu0
      %v3662 = vadd.f32 %v3068, %v3661
      %v3663 = vpop.f32.mrb[0].mxu0
      %3664 = vmatprep.mubr.f32.mxu0 0.0
      %3665 = vmatmul.mubr.f32.gmra.mrb[0].mxu0 %v3025
      %v3666 = vpop.f32.mrb[0].mxu0
      %v3667 = vadd.f32 %v3068, %v3666
      %v3668 = vpop.f32.mrb[0].mxu0
      %3669 = vmatprep.mubr.f32.mxu0 0.0
      %3670 = vmatmul.mubr.f32.gmra.mrb[0].mxu0 %v3026
      %v3671 = vpop.f32.mrb[0].mxu0
      %v3672 = vadd.f32 %v3068, %v3671
      %v3673 = vpop.f32.mrb[0].mxu0
      %3674 = vmatprep.mubr.f32.mxu0 0.0
      %3675 = vmatmul.mubr.f32.gmra.mrb[0].mxu0 %v3027
      %v3676 = vpop.f32.mrb[0].mxu0
      %v3677 = vadd.f32 %v3068, %v3676
      %v3678 = vpop.f32.mrb[0].mxu0
      %3679 = vmatprep.mubr.f32.mxu0 0.0
      %3680 = vmatmul.mubr.f32.gmra.mrb[0].mxu0 %v3028
      %v3681 = vpop.f32.mrb[0].mxu0
      %v3682 = vadd.f32 %v3068, %v3681
      %v3683 = vpop.f32.mrb[0].mxu0
      %3684 = vmatprep.mubr.f32.mxu0 0.0
      %3685 = vmatmul.mubr.f32.gmra.mrb[0].mxu0 %v3029
      %v3686 = vpop.f32.mrb[0].mxu0
      %v3687 = vadd.f32 %v3068, %v3686
      %v3688 = vpop.f32.mrb[0].mxu0
      %3689 = vmatprep.mubr.f32.mxu0 0.0
      %3690 = vmatmul.mubr.f32.gmra.mrb[0].mxu0 %v3030
      %v3691 = vpop.f32.mrb[0].mxu0
      %v3692 = vadd.f32 %v3068, %v3691
      %v3693 = vpop.f32.mrb[0].mxu0
      %3694 = vmatprep.mubr.f32.mxu0 0.0
      %3695 = vmatmul.mubr.f32.gmra.mrb[0].mxu0 %v3031
      %v3696 = vpop.f32.mrb[0].mxu0
      %v3697 = vadd.f32 %v3068, %v3696
      %v3698 = vpop.f32.mrb[0].mxu0
      %3699 = vmatprep.mubr.f32.mxu0 0.0
      %3700 = vmatmul.mubr.f32.gmra.mrb[0].mxu0 %v3032
      %v3701 = vpop.f32.mrb[0].mxu0
      %v3702 = vadd.f32 %v3068, %v3701
      %v3703 = vpop.f32.mrb[0].mxu0
      %3704 = vmatprep.mubr.f32.mxu0 0.0
      %3705 = vmatmul.mubr.f32.gmra.mrb[0].mxu0 %v3033
      %v3706 = vpop.f32.mrb[0].mxu0
      %v3707 = vadd.f32 %v3068, %v3706
      %v3708 = vpop.f32.mrb[0].mxu0
      %3709 = vmatprep.mubr.f32.mxu0 0.0
      %3710 = vmatmul.mubr.f32.gmra.mrb[0].mxu0 %v3034
      %v3711 = vpop.f32.mrb[0].mxu0
      %v3712 = vadd.f32 %v3068, %v3711
      %v3713 = vpop.f32.mrb[0].mxu0
      %3714 = vmatprep.mubr.f32.mxu0 0.0
      %3715 = vmatmul.mubr.f32.gmra.mrb[0].mxu0 %v3035
      %v3716 = vpop.f32.mrb[0].mxu0
      %v3717 = vadd.f32 %v3068, %v3716
      %v3718 = vpop.f32.mrb[0].mxu0
      %3719 = vmatprep.mubr.f32.mxu0 0.0
      %3720 = vmatmul.mubr.f32.gmra.mrb[0].mxu0 %v3036
      %v3721 = vpop.f32.mrb[0].mxu0
      %v3722 = vadd.f32 %v3068, %v3721
      %v3723 = vpop.f32.mrb[0].mxu0
      %3724 = vmatprep.mubr.f32.mxu0 0.0
      %3725 = vmatmul.mubr.f32.gmra.mrb[0].mxu0 %v3037
      %v3726 = vpop.f32.mrb[0].mxu0
      %v3727 = vadd.f32 %v3068, %v3726
      %v3728 = vpop.f32.mrb[0].mxu0
      %3729 = vmatprep.mubr.f32.mxu0 0.0
      %3730 = vmatmul.mubr.f32.gmra.mrb[0].mxu0 %v3038
      %v3731 = vpop.f32.mrb[0].mxu0
      %v3732 = vadd.f32 %v3068, %v3731
      %v3733 = vpop.f32.mrb[0].mxu0
      %3734 = vmatprep.mubr.f32.mxu0 0.0
      %3735 = vmatmul.mubr.f32.gmra.mrb[0].mxu0 %v3039
      %v3736 = vpop.f32.mrb[0].mxu0
      %v3737 = vadd.f32 %v3068, %v3736
      %v3738 = vpop.f32.mrb[0].mxu0
      %3739 = vmatprep.mubr.f32.mxu0 0.0
      %3740 = vmatmul.mubr.f32.gmra.mrb[0].mxu0 %v3040
      %v3741 = vpop.f32.mrb[0].mxu0
      %v3742 = vadd.f32 %v3068, %v3741
      %v3743 = vpop.f32.mrb[0].mxu0
      %3744 = vmatprep.mubr.f32.mxu0 0.0
      %3745 = vmatmul.mubr.f32.gmra.mrb[0].mxu0 %v3041
      %v3746 = vpop.f32.mrb[0].mxu0
      %v3747 = vadd.f32 %v3068, %v3746
      %v3748 = vpop.f32.mrb[0].mxu0
      %3749 = vmatprep.mubr.f32.mxu0 0.0
      %3750 = vmatmul.mubr.f32.gmra.mrb[0].mxu0 %v3042
      %v3751 = vpop.f32.mrb[0].mxu0
      %v3752 = vadd.f32 %v3068, %v3751
      %v3753 = vpop.f32.mrb[0].mxu0
      %3754 = vmatprep.mubr.f32.mxu0 0.0
      %3755 = vmatmul.mubr.f32.gmra.mrb[0].mxu0 %v3043
      %v3756 = vpop.f32.mrb[0].mxu0
      %v3757 = vadd.f32 %v3068, %v3756
      %v3758 = vpop.f32.mrb[0].mxu0
      %3759 = vmatprep.mubr.f32.mxu0 0.0
      %3760 = vmatmul.mubr.f32.gmra.mrb[0].mxu0 %v3044
      %v3761 = vpop.f32.mrb[0].mxu0
      %v3762 = vadd.f32 %v3068, %v3761
      %v3763 = vpop.f32.mrb[0].mxu0
      %3764 = vmatprep.mubr.f32.mxu0 0.0
      %3765 = vmatmul.mubr.f32.gmra.mrb[0].mxu0 %v3045
      %v3766 = vpop.f32.mrb[0].mxu0
      %v3767 = vadd.f32 %v3068, %v3766
      %v3768 = vpop.f32.mrb[0].mxu0
      %3769 = vmatprep.mubr.f32.mxu0 0.0
      %3770 = vmatmul.mubr.f32.gmra.mrb[0].mxu0 %v3046
      %v3771 = vpop.f32.mrb[0].mxu0
      %v3772 = vadd.f32 %v3068, %v3771
      %v3773 = vpop.f32.mrb[0].mxu0
      %3774 = vdwg.mxu0
      %vm3775 = vcmask 7168
      %3776 = vst.msk [vmem:[%s336] sm:$0xff] %vm3775, %v3137
      %3777 = vst.msk [vmem:[%s336 + $0x8] sm:$0xff] %vm3775, %v3142
      %3778 = vst.msk [vmem:[%s336 + $0x10] sm:$0xff] %vm3775, %v3147
      %3779 = vst.msk [vmem:[%s336 + $0x18] sm:$0xff] %vm3775, %v3152
      %3780 = vst.msk [vmem:[%s336 + $0x20] sm:$0xff] %vm3775, %v3157
      %3781 = vst.msk [vmem:[%s336 + $0x28] sm:$0xff] %vm3775, %v3162
      %3782 = vst.msk [vmem:[%s336 + $0x30] sm:$0xff] %vm3775, %v3167
      %3783 = vst.msk [vmem:[%s336 + $0x38] sm:$0xff] %vm3775, %v3172
      %3784 = vst.msk [vmem:[%s336 + $0x40] sm:$0xff] %vm3775, %v3177
      %3785 = vst.msk [vmem:[%s336 + $0x48] sm:$0xff] %vm3775, %v3182
      %3786 = vst.msk [vmem:[%s336 + $0x50] sm:$0xff] %vm3775, %v3187
      %3787 = vst.msk [vmem:[%s336 + $0x58] sm:$0xff] %vm3775, %v3192
      %3788 = vst.msk [vmem:[%s336 + $0x60] sm:$0xff] %vm3775, %v3197
      %3789 = vst.msk [vmem:[%s336 + $0x68] sm:$0xff] %vm3775, %v3202
      %3790 = vst.msk [vmem:[%s336 + $0x70] sm:$0xff] %vm3775, %v3207
      %3791 = vst.msk [vmem:[%s336 + $0x78] sm:$0xff] %vm3775, %v3212
      %3792 = vst.msk [vmem:[%s336 + $0x80] sm:$0xff] %vm3775, %v3217
      %3793 = vst.msk [vmem:[%s336 + $0x88] sm:$0xff] %vm3775, %v3222
      %3794 = vst.msk [vmem:[%s336 + $0x90] sm:$0xff] %vm3775, %v3227
      %3795 = vst.msk [vmem:[%s336 + $0x98] sm:$0xff] %vm3775, %v3232
      %3796 = vst.msk [vmem:[%s336 + $0xa0] sm:$0xff] %vm3775, %v3237
      %3797 = vst.msk [vmem:[%s336 + $0xa8] sm:$0xff] %vm3775, %v3242
      %3798 = vst.msk [vmem:[%s336 + $0xb0] sm:$0xff] %vm3775, %v3247
      %3799 = vst.msk [vmem:[%s336 + $0xb8] sm:$0xff] %vm3775, %v3252
      %3800 = vst.msk [vmem:[%s336 + $0xc0] sm:$0xff] %vm3775, %v3257
      %3801 = vst.msk [vmem:[%s336 + $0xc8] sm:$0xff] %vm3775, %v3262
      %3802 = vst.msk [vmem:[%s336 + $0xd0] sm:$0xff] %vm3775, %v3267
      %3803 = vst.msk [vmem:[%s336 + $0xd8] sm:$0xff] %vm3775, %v3272
      %3804 = vst.msk [vmem:[%s336 + $0xe0] sm:$0xff] %vm3775, %v3277
      %3805 = vst.msk [vmem:[%s336 + $0xe8] sm:$0xff] %vm3775, %v3282
      %3806 = vst.msk [vmem:[%s336 + $0xf0] sm:$0xff] %vm3775, %v3287
      %3807 = vst.msk [vmem:[%s336 + $0xf8] sm:$0xff] %vm3775, %v3292
      %3808 = vst.msk [vmem:[%s336 + $0x100] sm:$0xff] %vm3775, %v3297
      %3809 = vst.msk [vmem:[%s336 + $0x108] sm:$0xff] %vm3775, %v3302
      %3810 = vst.msk [vmem:[%s336 + $0x110] sm:$0xff] %vm3775, %v3307
      %3811 = vst.msk [vmem:[%s336 + $0x118] sm:$0xff] %vm3775, %v3312
      %3812 = vst.msk [vmem:[%s336 + $0x120] sm:$0xff] %vm3775, %v3317
      %3813 = vst.msk [vmem:[%s336 + $0x128] sm:$0xff] %vm3775, %v3322
      %3814 = vst.msk [vmem:[%s336 + $0x130] sm:$0xff] %vm3775, %v3327
      %3815 = vst.msk [vmem:[%s336 + $0x138] sm:$0xff] %vm3775, %v3332
      %3816 = vst.msk [vmem:[%s336 + $0x140] sm:$0xff] %vm3775, %v3337
      %3817 = vst.msk [vmem:[%s336 + $0x148] sm:$0xff] %vm3775, %v3342
      %3818 = vst.msk [vmem:[%s336 + $0x150] sm:$0xff] %vm3775, %v3347
      %3819 = vst.msk [vmem:[%s336 + $0x158] sm:$0xff] %vm3775, %v3352
      %3820 = vst.msk [vmem:[%s336 + $0x160] sm:$0xff] %vm3775, %v3357
      %3821 = vst.msk [vmem:[%s336 + $0x168] sm:$0xff] %vm3775, %v3362
      %3822 = vst.msk [vmem:[%s336 + $0x170] sm:$0xff] %vm3775, %v3367
      %3823 = vst.msk [vmem:[%s336 + $0x178] sm:$0xff] %vm3775, %v3372
      %3824 = vst.msk [vmem:[%s336 + $0x180] sm:$0xff] %vm3775, %v3377
      %3825 = vst.msk [vmem:[%s336 + $0x188] sm:$0xff] %vm3775, %v3382
      %3826 = vst.msk [vmem:[%s336 + $0x190] sm:$0xff] %vm3775, %v3387
      %3827 = vst.msk [vmem:[%s336 + $0x198] sm:$0xff] %vm3775, %v3392
      %3828 = vst.msk [vmem:[%s336 + $0x1a0] sm:$0xff] %vm3775, %v3397
      %3829 = vst.msk [vmem:[%s336 + $0x1a8] sm:$0xff] %vm3775, %v3402
      %3830 = vst.msk [vmem:[%s336 + $0x1b0] sm:$0xff] %vm3775, %v3407
      %3831 = vst.msk [vmem:[%s336 + $0x1b8] sm:$0xff] %vm3775, %v3412
      %3832 = vst.msk [vmem:[%s336 + $0x1c0] sm:$0xff] %vm3775, %v3417
      %3833 = vst.msk [vmem:[%s336 + $0x1c8] sm:$0xff] %vm3775, %v3422
      %3834 = vst.msk [vmem:[%s336 + $0x1d0] sm:$0xff] %vm3775, %v3427
      %3835 = vst.msk [vmem:[%s336 + $0x1d8] sm:$0xff] %vm3775, %v3432
      %3836 = vst.msk [vmem:[%s336 + $0x1e0] sm:$0xff] %vm3775, %v3437
      %3837 = vst.msk [vmem:[%s336 + $0x1e8] sm:$0xff] %vm3775, %v3442
      %3838 = vst.msk [vmem:[%s336 + $0x1f0] sm:$0xff] %vm3775, %v3447
      %3839 = vst.msk [vmem:[%s336 + $0x1f8] sm:$0xff] %vm3775, %v3452
      %3840 = vst.msk [vmem:[%s336 + $0x200] sm:$0xff] %vm3775, %v3457
      %3841 = vst.msk [vmem:[%s336 + $0x208] sm:$0xff] %vm3775, %v3462
      %3842 = vst.msk [vmem:[%s336 + $0x210] sm:$0xff] %vm3775, %v3467
      %3843 = vst.msk [vmem:[%s336 + $0x218] sm:$0xff] %vm3775, %v3472
      %3844 = vst.msk [vmem:[%s336 + $0x220] sm:$0xff] %vm3775, %v3477
      %3845 = vst.msk [vmem:[%s336 + $0x228] sm:$0xff] %vm3775, %v3482
      %3846 = vst.msk [vmem:[%s336 + $0x230] sm:$0xff] %vm3775, %v3487
      %3847 = vst.msk [vmem:[%s336 + $0x238] sm:$0xff] %vm3775, %v3492
      %3848 = vst.msk [vmem:[%s336 + $0x240] sm:$0xff] %vm3775, %v3497
      %3849 = vst.msk [vmem:[%s336 + $0x248] sm:$0xff] %vm3775, %v3502
      %3850 = vst.msk [vmem:[%s336 + $0x250] sm:$0xff] %vm3775, %v3507
      %3851 = vst.msk [vmem:[%s336 + $0x258] sm:$0xff] %vm3775, %v3512
      %3852 = vst.msk [vmem:[%s336 + $0x260] sm:$0xff] %vm3775, %v3517
      %3853 = vst.msk [vmem:[%s336 + $0x268] sm:$0xff] %vm3775, %v3522
      %3854 = vst.msk [vmem:[%s336 + $0x270] sm:$0xff] %vm3775, %v3527
      %3855 = vst.msk [vmem:[%s336 + $0x278] sm:$0xff] %vm3775, %v3532
      %3856 = vst.msk [vmem:[%s336 + $0x280] sm:$0xff] %vm3775, %v3537
      %3857 = vst.msk [vmem:[%s336 + $0x288] sm:$0xff] %vm3775, %v3542
      %3858 = vst.msk [vmem:[%s336 + $0x290] sm:$0xff] %vm3775, %v3547
      %3859 = vst.msk [vmem:[%s336 + $0x298] sm:$0xff] %vm3775, %v3552
      %3860 = vst.msk [vmem:[%s336 + $0x2a0] sm:$0xff] %vm3775, %v3557
      %3861 = vst.msk [vmem:[%s336 + $0x2a8] sm:$0xff] %vm3775, %v3562
      %3862 = vst.msk [vmem:[%s336 + $0x2b0] sm:$0xff] %vm3775, %v3567
      %3863 = vst.msk [vmem:[%s336 + $0x2b8] sm:$0xff] %vm3775, %v3572
      %3864 = vst.msk [vmem:[%s336 + $0x2c0] sm:$0xff] %vm3775, %v3577
      %3865 = vst.msk [vmem:[%s336 + $0x2c8] sm:$0xff] %vm3775, %v3582
      %3866 = vst.msk [vmem:[%s336 + $0x2d0] sm:$0xff] %vm3775, %v3587
      %3867 = vst.msk [vmem:[%s336 + $0x2d8] sm:$0xff] %vm3775, %v3592
      %3868 = vst.msk [vmem:[%s336 + $0x2e0] sm:$0xff] %vm3775, %v3597
      %3869 = vst.msk [vmem:[%s336 + $0x2e8] sm:$0xff] %vm3775, %v3602
      %3870 = vst.msk [vmem:[%s336 + $0x2f0] sm:$0xff] %vm3775, %v3607
      %3871 = vst.msk [vmem:[%s336 + $0x2f8] sm:$0xff] %vm3775, %v3612
      %3872 = vst.msk [vmem:[%s336 + $0x300] sm:$0xff] %vm3775, %v3617
      %3873 = vst.msk [vmem:[%s336 + $0x308] sm:$0xff] %vm3775, %v3622
      %3874 = vst.msk [vmem:[%s336 + $0x310] sm:$0xff] %vm3775, %v3627
      %3875 = vst.msk [vmem:[%s336 + $0x318] sm:$0xff] %vm3775, %v3632
      %3876 = vst.msk [vmem:[%s336 + $0x320] sm:$0xff] %vm3775, %v3637
      %3877 = vst.msk [vmem:[%s336 + $0x328] sm:$0xff] %vm3775, %v3642
      %3878 = vst.msk [vmem:[%s336 + $0x330] sm:$0xff] %vm3775, %v3647
      %3879 = vst.msk [vmem:[%s336 + $0x338] sm:$0xff] %vm3775, %v3652
      %3880 = vst.msk [vmem:[%s336 + $0x340] sm:$0xff] %vm3775, %v3657
      %3881 = vst.msk [vmem:[%s336 + $0x348] sm:$0xff] %vm3775, %v3662
      %3882 = vst.msk [vmem:[%s336 + $0x350] sm:$0xff] %vm3775, %v3667
      %3883 = vst.msk [vmem:[%s336 + $0x358] sm:$0xff] %vm3775, %v3672
      %3884 = vst.msk [vmem:[%s336 + $0x360] sm:$0xff] %vm3775, %v3677
      %3885 = vst.msk [vmem:[%s336 + $0x368] sm:$0xff] %vm3775, %v3682
      %3886 = vst.msk [vmem:[%s336 + $0x370] sm:$0xff] %vm3775, %v3687
      %3887 = vst.msk [vmem:[%s336 + $0x378] sm:$0xff] %vm3775, %v3692
      %3888 = vst.msk [vmem:[%s336 + $0x380] sm:$0xff] %vm3775, %v3697
      %3889 = vst.msk [vmem:[%s336 + $0x388] sm:$0xff] %vm3775, %v3702
      %3890 = vst.msk [vmem:[%s336 + $0x390] sm:$0xff] %vm3775, %v3707
      %3891 = vst.msk [vmem:[%s336 + $0x398] sm:$0xff] %vm3775, %v3712
      %3892 = vst.msk [vmem:[%s336 + $0x3a0] sm:$0xff] %vm3775, %v3717
      %3893 = vst.msk [vmem:[%s336 + $0x3a8] sm:$0xff] %vm3775, %v3722
      %3894 = vst.msk [vmem:[%s336 + $0x3b0] sm:$0xff] %vm3775, %v3727
      %3895 = vst.msk [vmem:[%s336 + $0x3b8] sm:$0xff] %vm3775, %v3732
      %3896 = vst.msk [vmem:[%s336 + $0x3c0] sm:$0xff] %vm3775, %v3737
      %3897 = vst.msk [vmem:[%s336 + $0x3c8] sm:$0xff] %vm3775, %v3742
      %3898 = vst.msk [vmem:[%s336 + $0x3d0] sm:$0xff] %vm3775, %v3747
      %3899 = vst.msk [vmem:[%s336 + $0x3d8] sm:$0xff] %vm3775, %v3752
      %3900 = vst.msk [vmem:[%s336 + $0x3e0] sm:$0xff] %vm3775, %v3757
      %3901 = vst.msk [vmem:[%s336 + $0x3e8] sm:$0xff] %vm3775, %v3762
      %3902 = vst.msk [vmem:[%s336 + $0x3f0] sm:$0xff] %vm3775, %v3767
      %3903 = vst.msk [vmem:[%s336 + $0x3f8] sm:$0xff] %vm3775, %v3772
      %s3904 = smul.u32 128, %s22
      %p3905 = scmp.lt.s32.totalorder %s3904, 255
      %s3906 = scalar_select %p3905, %s3904, 255
      %s3907 = smul.addr %s3906, 8
      %s3908 = scalar_lea.vmem %s9, %s3907
      // Predicated region
      $region57: #{tpu_custom_call.1} parent=55 // pred_check
        %p3909 = pneg %p234
      $region58: #{tpu_custom_call.1} parent=55 // pred_check_branch
        %3911 = sbr.rel (%p3909) target = $region60
      $region59: #{tpu_custom_call.1} parent=55 // pred_region
        %s3912 = smul.u32 128, %s22
      $region60: #{tpu_custom_call.1} parent=55 // pred_fallthru
        _
    $region56: #{tpu_custom_call.1} parent=5 // pred_fallthru
      _
    %p3913 = scmp.le.s32.totalorder 2, %s17
    // Predicated region
    $region61: #{tpu_custom_call.1} parent=5 // pred_check
      %p3914 = pneg %p3913
    $region62: #{tpu_custom_call.1} parent=5 // pred_check_branch
      %3916 = sbr.rel (%p3914) target = $region64
    $region63: #{tpu_custom_call.1} parent=5 // pred_region
      %s3917 = ssub.s32 %s17, 2
      // Predicated region
      $region65: #{tpu_custom_call.1} parent=63 // pred_check
        %p3918 = pneg %p240
      $region66: #{tpu_custom_call.1} parent=63 // pred_check_branch
        %3920 = sbr.rel (%p3918) target = $region68
      $region67: #{tpu_custom_call.1} parent=63 // pred_region
        %s3921 = smul.u32 128, %s23
        %p3922 = scmp.lt.s32.totalorder %s3921, 255
        %s3923 = scalar_select %p3922, %s3921, 255
        %s3924 = smul.addr %s3923, 8
        %s3925 = scalar_lea.vmem %s9, %s3924
      $region68: #{tpu_custom_call.1} parent=63 // pred_fallthru
        _
    $region64: #{tpu_custom_call.1} parent=5 // pred_fallthru
      _
  $region6: #{tpu_custom_call.1} parent=0 // loop_footer
    %s21 = sadd.s32 1, %s17
  $region7: #{tpu_custom_call.1} parent=0 // loop_footer_branch
    %16 = sbr.rel target = $region3
  $region8: #{tpu_custom_call.1} parent=0 // loop_exit
    _

</llo_original>
